<compile_context>
chip_gen: v7x
topology: tpu7x:2x2x1
jax: 0.10.0
libtpu: 0.0.40
codegen_flags: <defaults>
</compile_context>

<pallas_src>
import functools

import jax
import jax.numpy as jnp
from jax.experimental import pallas as pl
from jax.experimental.pallas import tpu as pltpu

NEG_SLOPE = 0.01    # nn.LeakyReLU default negative_slope
HIDDEN = 16         # encoder/decoder hidden width
LATENT = 8          # latent dim
LANE = 128
# Collapse the grid to one step per TensorCore up to this many rows per core
# (per-grid-step overhead dominates at these tiny feature widths).
COLLAPSE_ROWS_PER_CORE = 2048


def _round_up(n, m):
    return ((n + m - 1) // m) * m


def _leaky_relu(v):
    return jnp.where(v > 0, v, NEG_SLOPE * v)


def _num_tensorcores():
    # v7x exposes 2 TensorCores per chip; v5e/v6e have 1.
    try:
        kind = jax.devices()[0].device_kind.lower()
    except Exception:
        return 1
    return 2 if "v7" in kind else 1


# ------------------------------------------------------------------
# Kernel
# ------------------------------------------------------------------
def _vae_kernel(x_ref, eps_ref, w_ref, b_ref, packed_ref, *, d_in, packed_pad):
    f32 = jnp.float32
    H, L = HIDDEN, LATENT

    # Column offsets inside the packed weight slab (see _pack_params).
    c1 = H                      # [W_e2 | W_mlv_b]            K=16, N=32
    c2 = c1 + 2 * H             # W_mlv_a                     K=16, N=16
    c3 = c2 + H                 # [W_d1 | W_d2_b | W_out_b]   K=8,  N=32+d_in
    c4 = c3 + 2 * H + d_in      # W_d2_a                      K=16, N=16
    c5 = c4 + H                 # W_out_a                     K=16, N=d_in

    b = b_ref[...]
    b_e1, b_e2 = b[:, 0:16], b[:, 16:32]
    b_mlv = b[:, 32:48]
    b_d1, b_d2 = b[:, 48:64], b[:, 64:80]
    b_out = b[:, 80:80 + d_in]

    x = x_ref[...]

    # ---------------- encode ----------------
    res1 = _leaky_relu(
        jnp.dot(x, w_ref[:d_in, 0:H], preferred_element_type=f32) + b_e1)
    # nn.Dropout() -> identity (eval mode).
    # Fused off-chain dot: res1 @ [W_e2 | W_mlv_b] -> (TB, 32).
    t = jnp.dot(res1, w_ref[:H, c1:c2], preferred_element_type=f32)
    res2 = _leaky_relu(t[:, :H] + b_e2)

    # Fused mu/log_var head; accumulation chain (v7x MRB-friendly).
    # Lanes [0:8] = mu, [8:16] = log_var.
    mlv = jnp.dot(res2, w_ref[:H, c2:c3], preferred_element_type=f32)
    mlv += t[:, H:]
    mlv += b_mlv
    mu = mlv[:, :L]
    log_var = mlv[:, L:]

    # -------- reparameterize: z = mu + exp(0.5*log_var) * eps --------
    z = mu + jnp.exp(0.5 * log_var) * eps_ref[...]

    # ---------------- decode ----------------
    # Single z-side dot: z @ [W_d1 | W_d2[16:] | W_out[16:]] -> (TB, 32+d_in).
    zmix = jnp.dot(z, w_ref[:L, c3:c4], preferred_element_type=f32)
    r1 = _leaky_relu(zmix[:, :H] + b_d1)
    z_d2 = zmix[:, H:2 * H]
    z_out = zmix[:, 2 * H:]

    # nn.Dropout() -> identity (eval mode).
    r2 = _leaky_relu(
        jnp.dot(r1, w_ref[:H, c4:c5], preferred_element_type=f32) + z_d2 + b_d2)

    logits = (jnp.dot(r2, w_ref[:H, c5:c5 + d_in], preferred_element_type=f32)
              + z_out + b_out)
    # sigmoid with the divide on the (otherwise idle) EUP slot.
    output = pl.reciprocal(1.0 + jnp.exp(-logits), approx=True)

    # One lane-dense (packed_pad-wide) unmasked store:
    #   [output | mu | log_var | z | zero-pad]
    tb = output.shape[0]
    pieces = [output, mlv, z]
    pad_w = packed_pad - (d_in + 3 * L)
    if pad_w:
        pieces.append(jnp.zeros((tb, pad_w), f32))
    packed_ref[...] = jnp.concatenate(pieces, axis=-1)


# ------------------------------------------------------------------
# Parameter init (deterministic, PyTorch-Linear-style uniform bounds)
# ------------------------------------------------------------------
def init_params(key, input_window):
    d_in = input_window * 2

    def linear(k, fan_in, fan_out):
        kw, kb = jax.random.split(k)
        bound = 1.0 / float(fan_in) ** 0.5
        w = jax.random.uniform(kw, (fan_in, fan_out), jnp.float32, -bound, bound)
        b = jax.random.uniform(kb, (1, fan_out), jnp.float32, -bound, bound)
        return w, b

    ks = jax.random.split(key, 7)
    return {
        "efc1": linear(ks[0], d_in, HIDDEN),
        "efc2": linear(ks[1], HIDDEN, HIDDEN),
        "mu":   linear(ks[2], HIDDEN + HIDDEN, LATENT),
        "lv":   linear(ks[3], HIDDEN + HIDDEN, LATENT),
        "dfc1": linear(ks[4], LATENT, HIDDEN),
        "dfc2": linear(ks[5], HIDDEN + LATENT, HIDDEN),
        "out":  linear(ks[6], HIDDEN + LATENT, d_in),
    }


# ------------------------------------------------------------------
# Weight / bias packing (wrapper-side, one-time)
# ------------------------------------------------------------------
def _pack_params(params, d_in):
    (w_e1, b_e1) = params["efc1"]
    (w_e2, b_e2) = params["efc2"]
    (w_mu, b_mu) = params["mu"]
    (w_lv, b_lv) = params["lv"]
    (w_d1, b_d1) = params["dfc1"]
    (w_d2, b_d2) = params["dfc2"]
    (w_o,  b_o)  = params["out"]

    H, L = HIDDEN, LATENT
    c1 = H
    c2 = c1 + 2 * H
    c3 = c2 + H
    c4 = c3 + 2 * H + d_in
    c5 = c4 + H
    total = c5 + d_in                                  # 112 + 2*d_in

    # Fused mu/log_var head: columns [0:8]=mu, [8:16]=log_var.
    w_mlv = jnp.concatenate([w_mu, w_lv], axis=1)      # (32, 16)
    w_mlv_a, w_mlv_b = w_mlv[:H], w_mlv[H:]            # applied to res2, res1

    k_max = max(d_in, H)
    W = jnp.zeros((k_max, total), jnp.float32)
    W = W.at[:d_in, 0:H].set(w_e1)
    W = W.at[:H, c1:c1 + H].set(w_e2)
    W = W.at[:H, c1 + H:c2].set(w_mlv_b)
    W = W.at[:H, c2:c3].set(w_mlv_a)
    W = W.at[:L, c3:c3 + H].set(w_d1)
    W = W.at[:L, c3 + H:c3 + 2 * H].set(w_d2[H:])      # W_d2 z-part
    W = W.at[:L, c3 + 2 * H:c4].set(w_o[H:])           # W_out z-part
    W = W.at[:H, c4:c5].set(w_d2[:H])
    W = W.at[:H, c5:c5 + d_in].set(w_o[:H])

    bias = jnp.concatenate([b_e1, b_e2, b_mu, b_lv, b_d1, b_d2, b_o], axis=1)
    return W, bias                                     # (k_max, total), (1, 80+d_in)


# ------------------------------------------------------------------
# Wrapper
# ------------------------------------------------------------------
def simplest_vae_forward(x, eps, params, *, block_b=256):
    B, d_in = x.shape
    assert eps.shape == (B, LATENT)

    # Generation-aware batch tile: one block per TensorCore for small/medium B
    # (grid collapses to 1 on single-TC v5e/v6e, to 2 on dual-TC v7x); tile of
    # `block_b` rows for large B.  TB is always a multiple of 8 sublanes.
    num_tc = _num_tensorcores()
    per_core = pl.cdiv(B, num_tc)
    if per_core <= COLLAPSE_ROWS_PER_CORE:
        TB = _round_up(per_core, 8)
    else:
        TB = _round_up(block_b, 8)
    grid_n = pl.cdiv(B, TB)          # no jnp.pad: Pallas bounds the tail block

    W, bias = _pack_params(params, d_in)

    packed_w = d_in + 3 * LATENT                  # [out | mu | log_var | z]
    packed_pad = _round_up(packed_w, LANE)        # lane-dense output slab

    kernel = functools.partial(_vae_kernel, d_in=d_in, packed_pad=packed_pad)

    flops = 2 * B * (d_in * HIDDEN + HIDDEN * 2 * HIDDEN + HIDDEN * HIDDEN
                     + LATENT * (2 * HIDDEN + d_in) + HIDDEN * HIDDEN
                     + HIDDEN * d_in)
    transcendentals = B * (LATENT + 2 * d_in)
    bytes_accessed = 4 * (B * (d_in + LATENT + packed_pad)
                          + int(W.size) + int(bias.size))

    packed = pl.pallas_call(
        kernel,
        grid=(grid_n,),
        in_specs=[
            pl.BlockSpec((TB, d_in), lambda i: (i, 0)),
            pl.BlockSpec((TB, LATENT), lambda i: (i, 0)),
            pl.BlockSpec(W.shape, lambda i: (0, 0)),
            pl.BlockSpec(bias.shape, lambda i: (0, 0)),
        ],
        out_specs=pl.BlockSpec((TB, packed_pad), lambda i: (i, 0)),
        out_shape=jax.ShapeDtypeStruct((B, packed_pad), jnp.float32),
        compiler_params=pltpu.CompilerParams(
            dimension_semantics=("parallel",),
        ),
        cost_estimate=pl.CostEstimate(
            flops=flops,
            transcendentals=transcendentals,
            bytes_accessed=bytes_accessed,
        ),
    )(x, eps, W, bias)

    out     = packed[:, :d_in]
    mu      = packed[:, d_in:d_in + LATENT]
    log_var = packed[:, d_in + LATENT:d_in + 2 * LATENT]
    z       = packed[:, d_in + 2 * LATENT:d_in + 3 * LATENT]
    return out, mu, log_var, z


# ------------------------------------------------------------------
# Pure-JAX reference (same math, f32) for verification
# ------------------------------------------------------------------
def reference_forward(x, eps, params):
    lrelu = lambda v: jnp.where(v > 0, v, NEG_SLOPE * v)
    w_e1, b_e1 = params["efc1"]
    w_e2, b_e2 = params["efc2"]
    w_mu, b_mu = params["mu"]
    w_lv, b_lv = params["lv"]
    w_d1, b_d1 = params["dfc1"]
    w_d2, b_d2 = params["dfc2"]
    w_out, b_out = params["out"]

    res1 = lrelu(x @ w_e1 + b_e1)
    res2 = lrelu(res1 @ w_e2 + b_e2)
    cat_e = jnp.concatenate([res2, res1], axis=-1)
    mu = cat_e @ w_mu + b_mu
    log_var = cat_e @ w_lv + b_lv
    z = mu + jnp.exp(0.5 * log_var) * eps
    r1 = lrelu(z @ w_d1 + b_d1)
    r2 = lrelu(jnp.concatenate([r1, z], axis=-1) @ w_d2 + b_d2)
    out = jax.nn.sigmoid(jnp.concatenate([r2, z], axis=-1) @ w_out + b_out)
    return out, mu, log_var, z


if __name__ == "__main__":
    INPUT_WINDOW = 8            # args.input_window
    D_IN = INPUT_WINDOW * 2     # = 16
    B = 500                     # small/medium batch -> collapsed grid path

    key = jax.random.PRNGKey(0)
    k_params, k_x, k_eps = jax.random.split(key, 3)

    params = init_params(k_params, INPUT_WINDOW)
    x = jax.random.uniform(k_x, (B, D_IN), jnp.float32)       # trajectory coords
    eps = jax.random.normal(k_eps, (B, LATENT), jnp.float32)  # torch.randn equivalent

    out, mu, log_var, z = jax.block_until_ready(
        simplest_vae_forward(x, eps, params)
    )
    ref_out, ref_mu, ref_lv, ref_z = reference_forward(x, eps, params)
    # mu / log_var / z are exact-ish f32; output goes through the approx-EUP
    # reciprocal in the sigmoid, so use a slightly looser tolerance there.
    assert jnp.allclose(mu, ref_mu, atol=1e-5, rtol=1e-5)
    assert jnp.allclose(log_var, ref_lv, atol=1e-5, rtol=1e-5)
    assert jnp.allclose(z, ref_z, atol=1e-5, rtol=1e-5)
    assert jnp.allclose(out, ref_out, atol=5e-3)

    # Larger batch -> tiled grid with a partial tail block (no host-side pad).
    B2 = 6000
    k_x2, k_e2 = jax.random.split(jax.random.PRNGKey(1))
    x2 = jax.random.uniform(k_x2, (B2, D_IN), jnp.float32)
    eps2 = jax.random.normal(k_e2, (B2, LATENT), jnp.float32)
    out2, mu2, lv2, z2 = jax.block_until_ready(
        simplest_vae_forward(x2, eps2, params)
    )
    r_out2, r_mu2, r_lv2, r_z2 = reference_forward(x2, eps2, params)
    assert jnp.allclose(mu2, r_mu2, atol=1e-5, rtol=1e-5)
    assert jnp.allclose(lv2, r_lv2, atol=1e-5, rtol=1e-5)
    assert jnp.allclose(z2, r_z2, atol=1e-5, rtol=1e-5)
    assert jnp.allclose(out2, r_out2, atol=5e-3)

    print("KERNEL_OK")
</pallas_src>

<mosaic_0001>
module attributes {stable_mosaic.version = 11 : i64} {
  func.func @_vae_kernel(%arg0: i32, %arg1: memref<504x16xf32, #tpu.memory_space<vmem>>, %arg2: memref<504x8xf32, #tpu.memory_space<vmem>>, %arg3: memref<16x144xf32, #tpu.memory_space<vmem>>, %arg4: memref<1x96xf32, #tpu.memory_space<vmem>>, %arg5: memref<504x128xf32, #tpu.memory_space<vmem>>) attributes {dimension_semantics = [#tpu.dimension_semantics<parallel>], iteration_bounds = array<i64: 1>, scalar_prefetch = 0 : i64, scratch_operands = 0 : i64, tpu.core_type = #tpu.core_type<tc>, window_params = [{transform_indices = @transform_0, window_bounds = array<i64: 504, 16>}, {transform_indices = @transform_1, window_bounds = array<i64: 504, 8>}, {pipeline_mode = #tpu.pipeline_mode<synchronous>, transform_indices = @transform_2, window_bounds = array<i64: 16, 144>}, {pipeline_mode = #tpu.pipeline_mode<synchronous>, transform_indices = @transform_3, window_bounds = array<i64: 1, 96>}, {transform_indices = @transform_4, window_bounds = array<i64: 504, 128>}]} {
    %c0 = arith.constant 0 : index
    %c0_0 = arith.constant 0 : index
    %0 = vector.load %arg4[%c0, %c0_0] : memref<1x96xf32, #tpu.memory_space<vmem>>, vector<1x96xf32>
    %1 = vector.extract_strided_slice %0 {offsets = [0, 0], sizes = [1, 16], strides = [1, 1]} : vector<1x96xf32> to vector<1x16xf32>
    %2 = vector.extract_strided_slice %0 {offsets = [0, 16], sizes = [1, 16], strides = [1, 1]} : vector<1x96xf32> to vector<1x16xf32>
    %3 = vector.extract_strided_slice %0 {offsets = [0, 32], sizes = [1, 16], strides = [1, 1]} : vector<1x96xf32> to vector<1x16xf32>
    %4 = vector.extract_strided_slice %0 {offsets = [0, 48], sizes = [1, 16], strides = [1, 1]} : vector<1x96xf32> to vector<1x16xf32>
    %5 = vector.extract_strided_slice %0 {offsets = [0, 64], sizes = [1, 16], strides = [1, 1]} : vector<1x96xf32> to vector<1x16xf32>
    %6 = vector.extract_strided_slice %0 {offsets = [0, 80], sizes = [1, 16], strides = [1, 1]} : vector<1x96xf32> to vector<1x16xf32>
    %c0_1 = arith.constant 0 : index
    %c0_2 = arith.constant 0 : index
    %7 = vector.load %arg1[%c0_1, %c0_2] : memref<504x16xf32, #tpu.memory_space<vmem>>, vector<504x16xf32>
    %c0_3 = arith.constant 0 : index
    %c0_4 = arith.constant 0 : index
    %8 = vector.load %arg3[%c0_3, %c0_4] : memref<16x144xf32, #tpu.memory_space<vmem>>, vector<16x16xf32>
    %cst = arith.constant dense<0.000000e+00> : vector<504x16xf32>
    %9 = tpu.matmul %7, %8, %cst {dimension_numbers = #tpu.dot_dimension_numbers<[1], [0], [0], [1], [0, 0, 1, 1], [], []>} : vector<504x16xf32>, vector<16x16xf32>, vector<504x16xf32> -> vector<504x16xf32>
    %10 = vector.broadcast %1 : vector<1x16xf32> to vector<504x16xf32>
    %11 = arith.addf %9, %10 : vector<504x16xf32>
    %cst_5 = arith.constant 0.000000e+00 : f32
    %12 = vector.broadcast %cst_5 : f32 to vector<504x16xf32>
    %13 = arith.cmpf ogt, %11, %12 : vector<504x16xf32>
    %cst_6 = arith.constant 0.00999999977 : f32
    %14 = vector.broadcast %cst_6 : f32 to vector<504x16xf32>
    %15 = arith.mulf %14, %11 : vector<504x16xf32>
    %16 = arith.select %13, %11, %15 : vector<504x16xi1>, vector<504x16xf32>
    %c0_7 = arith.constant 0 : index
    %c16 = arith.constant 16 : index
    %17 = vector.load %arg3[%c0_7, %c16] : memref<16x144xf32, #tpu.memory_space<vmem>>, vector<16x32xf32>
    %cst_8 = arith.constant dense<0.000000e+00> : vector<504x32xf32>
    %18 = tpu.matmul %16, %17, %cst_8 {dimension_numbers = #tpu.dot_dimension_numbers<[1], [0], [0], [1], [0, 0, 1, 1], [], []>} : vector<504x16xf32>, vector<16x32xf32>, vector<504x32xf32> -> vector<504x32xf32>
    %19 = vector.extract_strided_slice %18 {offsets = [0, 0], sizes = [504, 16], strides = [1, 1]} : vector<504x32xf32> to vector<504x16xf32>
    %20 = vector.broadcast %2 : vector<1x16xf32> to vector<504x16xf32>
    %21 = arith.addf %19, %20 : vector<504x16xf32>
    %cst_9 = arith.constant 0.000000e+00 : f32
    %22 = vector.broadcast %cst_9 : f32 to vector<504x16xf32>
    %23 = arith.cmpf ogt, %21, %22 : vector<504x16xf32>
    %cst_10 = arith.constant 0.00999999977 : f32
    %24 = vector.broadcast %cst_10 : f32 to vector<504x16xf32>
    %25 = arith.mulf %24, %21 : vector<504x16xf32>
    %26 = arith.select %23, %21, %25 : vector<504x16xi1>, vector<504x16xf32>
    %c0_11 = arith.constant 0 : index
    %c48 = arith.constant 48 : index
    %27 = vector.load %arg3[%c0_11, %c48] : memref<16x144xf32, #tpu.memory_space<vmem>>, vector<16x16xf32>
    %cst_12 = arith.constant dense<0.000000e+00> : vector<504x16xf32>
    %28 = tpu.matmul %26, %27, %cst_12 {dimension_numbers = #tpu.dot_dimension_numbers<[1], [0], [0], [1], [0, 0, 1, 1], [], []>} : vector<504x16xf32>, vector<16x16xf32>, vector<504x16xf32> -> vector<504x16xf32>
    %29 = vector.extract_strided_slice %18 {offsets = [0, 16], sizes = [504, 16], strides = [1, 1]} : vector<504x32xf32> to vector<504x16xf32>
    %30 = arith.addf %28, %29 : vector<504x16xf32>
    %31 = vector.broadcast %3 : vector<1x16xf32> to vector<504x16xf32>
    %32 = arith.addf %30, %31 : vector<504x16xf32>
    %33 = vector.extract_strided_slice %32 {offsets = [0, 0], sizes = [504, 8], strides = [1, 1]} : vector<504x16xf32> to vector<504x8xf32>
    %34 = vector.extract_strided_slice %32 {offsets = [0, 8], sizes = [504, 8], strides = [1, 1]} : vector<504x16xf32> to vector<504x8xf32>
    %cst_13 = arith.constant 5.000000e-01 : f32
    %35 = vector.broadcast %cst_13 : f32 to vector<504x8xf32>
    %36 = arith.mulf %35, %34 : vector<504x8xf32>
    %37 = math.exp %36 : vector<504x8xf32>
    %c0_14 = arith.constant 0 : index
    %c0_15 = arith.constant 0 : index
    %38 = vector.load %arg2[%c0_14, %c0_15] : memref<504x8xf32, #tpu.memory_space<vmem>>, vector<504x8xf32>
    %39 = arith.mulf %37, %38 : vector<504x8xf32>
    %40 = arith.addf %33, %39 : vector<504x8xf32>
    %c0_16 = arith.constant 0 : index
    %c64 = arith.constant 64 : index
    %41 = vector.load %arg3[%c0_16, %c64] : memref<16x144xf32, #tpu.memory_space<vmem>>, vector<8x48xf32>
    %cst_17 = arith.constant dense<0.000000e+00> : vector<504x48xf32>
    %42 = tpu.matmul %40, %41, %cst_17 {dimension_numbers = #tpu.dot_dimension_numbers<[1], [0], [0], [1], [0, 0, 1, 1], [], []>} : vector<504x8xf32>, vector<8x48xf32>, vector<504x48xf32> -> vector<504x48xf32>
    %43 = vector.extract_strided_slice %42 {offsets = [0, 0], sizes = [504, 16], strides = [1, 1]} : vector<504x48xf32> to vector<504x16xf32>
    %44 = vector.broadcast %4 : vector<1x16xf32> to vector<504x16xf32>
    %45 = arith.addf %43, %44 : vector<504x16xf32>
    %cst_18 = arith.constant 0.000000e+00 : f32
    %46 = vector.broadcast %cst_18 : f32 to vector<504x16xf32>
    %47 = arith.cmpf ogt, %45, %46 : vector<504x16xf32>
    %cst_19 = arith.constant 0.00999999977 : f32
    %48 = vector.broadcast %cst_19 : f32 to vector<504x16xf32>
    %49 = arith.mulf %48, %45 : vector<504x16xf32>
    %50 = arith.select %47, %45, %49 : vector<504x16xi1>, vector<504x16xf32>
    %51 = vector.extract_strided_slice %42 {offsets = [0, 16], sizes = [504, 16], strides = [1, 1]} : vector<504x48xf32> to vector<504x16xf32>
    %52 = vector.extract_strided_slice %42 {offsets = [0, 32], sizes = [504, 16], strides = [1, 1]} : vector<504x48xf32> to vector<504x16xf32>
    %c0_20 = arith.constant 0 : index
    %c112 = arith.constant 112 : index
    %53 = vector.load %arg3[%c0_20, %c112] : memref<16x144xf32, #tpu.memory_space<vmem>>, vector<16x16xf32>
    %cst_21 = arith.constant dense<0.000000e+00> : vector<504x16xf32>
    %54 = tpu.matmul %50, %53, %cst_21 {dimension_numbers = #tpu.dot_dimension_numbers<[1], [0], [0], [1], [0, 0, 1, 1], [], []>} : vector<504x16xf32>, vector<16x16xf32>, vector<504x16xf32> -> vector<504x16xf32>
    %55 = arith.addf %54, %51 : vector<504x16xf32>
    %56 = vector.broadcast %5 : vector<1x16xf32> to vector<504x16xf32>
    %57 = arith.addf %55, %56 : vector<504x16xf32>
    %cst_22 = arith.constant 0.000000e+00 : f32
    %58 = vector.broadcast %cst_22 : f32 to vector<504x16xf32>
    %59 = arith.cmpf ogt, %57, %58 : vector<504x16xf32>
    %cst_23 = arith.constant 0.00999999977 : f32
    %60 = vector.broadcast %cst_23 : f32 to vector<504x16xf32>
    %61 = arith.mulf %60, %57 : vector<504x16xf32>
    %62 = arith.select %59, %57, %61 : vector<504x16xi1>, vector<504x16xf32>
    %c0_24 = arith.constant 0 : index
    %c128 = arith.constant 128 : index
    %63 = vector.load %arg3[%c0_24, %c128] : memref<16x144xf32, #tpu.memory_space<vmem>>, vector<16x16xf32>
    %cst_25 = arith.constant dense<0.000000e+00> : vector<504x16xf32>
    %64 = tpu.matmul %62, %63, %cst_25 {dimension_numbers = #tpu.dot_dimension_numbers<[1], [0], [0], [1], [0, 0, 1, 1], [], []>} : vector<504x16xf32>, vector<16x16xf32>, vector<504x16xf32> -> vector<504x16xf32>
    %65 = arith.addf %64, %52 : vector<504x16xf32>
    %66 = vector.broadcast %6 : vector<1x16xf32> to vector<504x16xf32>
    %67 = arith.addf %65, %66 : vector<504x16xf32>
    %cst_26 = arith.constant 0.000000e+00 : f32
    %68 = vector.broadcast %cst_26 : f32 to vector<504x16xf32>
    %69 = arith.subf %68, %67 : vector<504x16xf32>
    %70 = math.exp %69 : vector<504x16xf32>
    %cst_27 = arith.constant 1.000000e+00 : f32
    %71 = vector.broadcast %cst_27 : f32 to vector<504x16xf32>
    %72 = arith.addf %71, %70 : vector<504x16xf32>
    %73 = tpu.reciprocal %72 {approx = true} : vector<504x16xf32> -> vector<504x16xf32>
    %cst_28 = arith.constant 0.000000e+00 : f32
    %74 = vector.broadcast %cst_28 : f32 to vector<504x88xf32>
    %75 = tpu.concatenate %73, %32, %40, %74 in 1 : vector<504x16xf32>, vector<504x16xf32>, vector<504x8xf32>, vector<504x88xf32> -> vector<504x128xf32>
    %c0_29 = arith.constant 0 : index
    %c0_30 = arith.constant 0 : index
    %76 = vector.load %arg5[%c0_29, %c0_30] : memref<504x128xf32, #tpu.memory_space<vmem>>, vector<504x128xf32>
    tpu.vector_store %arg5[%c0_29, %c0_30], %75 {strides = array<i32>} : memref<504x128xf32, #tpu.memory_space<vmem>>, vector<504x128xf32>,
    return
  }
  func.func @transform_0(%arg0: i32) -> (i32, i32) {
    %c0_i32 = arith.constant 0 : i32
    %c0_i32_0 = arith.constant 0 : i32
    return %arg0, %c0_i32 : i32, i32
  }
  func.func @transform_1(%arg0: i32) -> (i32, i32) {
    %c0_i32 = arith.constant 0 : i32
    %c0_i32_0 = arith.constant 0 : i32
    return %arg0, %c0_i32 : i32, i32
  }
  func.func @transform_2(%arg0: i32) -> (i32, i32) {
    %c0_i32 = arith.constant 0 : i32
    %c0_i32_0 = arith.constant 0 : i32
    %c0_i32_1 = arith.constant 0 : i32
    return %c0_i32, %c0_i32_0 : i32, i32
  }
  func.func @transform_3(%arg0: i32) -> (i32, i32) {
    %c0_i32 = arith.constant 0 : i32
    %c0_i32_0 = arith.constant 0 : i32
    %c0_i32_1 = arith.constant 0 : i32
    return %c0_i32, %c0_i32_0 : i32, i32
  }
  func.func @transform_4(%arg0: i32) -> (i32, i32) {
    %c0_i32 = arith.constant 0 : i32
    %c0_i32_0 = arith.constant 0 : i32
    return %arg0, %c0_i32 : i32, i32
  }
}

</mosaic_0001>

<llo_original>
// kernel: tpu_custom_call.1
$region0: #{tpu_custom_call.1}
  #allocation0 [shape = 'u32[]', space=smem, size = 0x4, offset = 0x4, fixed_abs, tag = 'smem constant byte address 0x4 - core index']
  #allocation1 [shape = 'u32[144,128]{1,0:T(1,128)}', space=vmem, size = 0x12000, scoped, tag = 'internal scratch']
  %s0 = inlined_call_operand.vmem [shape: f32[500,16], index: 0, kind: input, shape index: {}]
  %s1 = inlined_call_operand.vmem [shape: f32[500,8], index: 1, kind: input, shape index: {}]
  %s2 = inlined_call_operand.vmem [shape: f32[16,144], index: 2, kind: input, shape index: {}]
  %s3 = inlined_call_operand.vmem [shape: f32[1,96], index: 3, kind: input, shape index: {}]
  %s4 = inlined_call_operand.hbm [shape: f32[500,128], index: 4, kind: output, shape index: {}]
  %s5 = sld [smem:[#allocation0]]
  $region26: #{tpu_custom_call.1} parent=0
    _
  %s7 = ssub.s32 1, %s5
  %s8 = scalar_select 0, %s7, %s5
  $region1: #{tpu_custom_call.1} parent=0
    #allocation2 [shape = 'u8[258048]{0}', space=vmem, size = 0x3f000, scoped, tag = 'output window, operand 0, single buffered']
    #allocation3 [shape = 's32[1]{0}', space=sflag, size = 0x4, scoped, tag = 'scoped memory for tpu_custom_call.1']
    %9 = vsyncpa [#allocation3], 0
    // Predicated region
    $region2: #{tpu_custom_call.1} parent=1 // pred_check
      _
    $region3: #{tpu_custom_call.1} parent=1 // pred_check_branch
      %11 = sbr.rel (0) target = $region5
    $region4: #{tpu_custom_call.1} parent=1 // pred_region
      _
    $region5: #{tpu_custom_call.1} parent=1 // pred_fallthru
      _
    // Predicated region
    $region6: #{tpu_custom_call.1} parent=1 // pred_check
      _
    $region7: #{tpu_custom_call.1} parent=1 // pred_check_branch
      %13 = sbr.rel (0) target = $region9
    $region8: #{tpu_custom_call.1} parent=1 // pred_region
      _
    $region9: #{tpu_custom_call.1} parent=1 // pred_fallthru
      _
    // Predicated region
    $region10: #{tpu_custom_call.1} parent=1 // pred_check
      _
    $region11: #{tpu_custom_call.1} parent=1 // pred_check_branch
      %15 = sbr.rel (0) target = $region13
    $region12: #{tpu_custom_call.1} parent=1 // pred_region
      _
    $region13: #{tpu_custom_call.1} parent=1 // pred_fallthru
      _
    // Predicated region
    $region14: #{tpu_custom_call.1} parent=1 // pred_check
      _
    $region15: #{tpu_custom_call.1} parent=1 // pred_check_branch
      %17 = sbr.rel (0) target = $region17
    $region16: #{tpu_custom_call.1} parent=1 // pred_region
      _
    $region17: #{tpu_custom_call.1} parent=1 // pred_fallthru
      _
    %v18 = vld [vmem:[%s3] sm:$0x1]
    %v19 = vld [vmem:[%s0] sm:$0xff]
    %v20 = vld [vmem:[%s0 + $0x8] sm:$0xff]
    %v21 = vld [vmem:[%s0 + $0x10] sm:$0xff]
    %v22 = vld [vmem:[%s0 + $0x18] sm:$0xff]
    %v23 = vld [vmem:[%s0 + $0x20] sm:$0xff]
    %v24 = vld [vmem:[%s0 + $0x28] sm:$0xff]
    %v25 = vld [vmem:[%s0 + $0x30] sm:$0xff]
    %v26 = vld [vmem:[%s0 + $0x38] sm:$0xff]
    %v27 = vld [vmem:[%s0 + $0x40] sm:$0xff]
    %v28 = vld [vmem:[%s0 + $0x48] sm:$0xff]
    %v29 = vld [vmem:[%s0 + $0x50] sm:$0xff]
    %v30 = vld [vmem:[%s0 + $0x58] sm:$0xff]
    %v31 = vld [vmem:[%s0 + $0x60] sm:$0xff]
    %v32 = vld [vmem:[%s0 + $0x68] sm:$0xff]
    %v33 = vld [vmem:[%s0 + $0x70] sm:$0xff]
    %v34 = vld [vmem:[%s0 + $0x78] sm:$0xff]
    %v35 = vld [vmem:[%s0 + $0x80] sm:$0xff]
    %v36 = vld [vmem:[%s0 + $0x88] sm:$0xff]
    %v37 = vld [vmem:[%s0 + $0x90] sm:$0xff]
    %v38 = vld [vmem:[%s0 + $0x98] sm:$0xff]
    %v39 = vld [vmem:[%s0 + $0xa0] sm:$0xff]
    %v40 = vld [vmem:[%s0 + $0xa8] sm:$0xff]
    %v41 = vld [vmem:[%s0 + $0xb0] sm:$0xff]
    %v42 = vld [vmem:[%s0 + $0xb8] sm:$0xff]
    %v43 = vld [vmem:[%s0 + $0xc0] sm:$0xff]
    %v44 = vld [vmem:[%s0 + $0xc8] sm:$0xff]
    %v45 = vld [vmem:[%s0 + $0xd0] sm:$0xff]
    %v46 = vld [vmem:[%s0 + $0xd8] sm:$0xff]
    %v47 = vld [vmem:[%s0 + $0xe0] sm:$0xff]
    %v48 = vld [vmem:[%s0 + $0xe8] sm:$0xff]
    %v49 = vld [vmem:[%s0 + $0xf0] sm:$0xff]
    %v50 = vld [vmem:[%s0 + $0xf8] sm:$0xff]
    %v51 = vld [vmem:[%s0 + $0x100] sm:$0xff]
    %v52 = vld [vmem:[%s0 + $0x108] sm:$0xff]
    %v53 = vld [vmem:[%s0 + $0x110] sm:$0xff]
    %v54 = vld [vmem:[%s0 + $0x118] sm:$0xff]
    %v55 = vld [vmem:[%s0 + $0x120] sm:$0xff]
    %v56 = vld [vmem:[%s0 + $0x128] sm:$0xff]
    %v57 = vld [vmem:[%s0 + $0x130] sm:$0xff]
    %v58 = vld [vmem:[%s0 + $0x138] sm:$0xff]
    %v59 = vld [vmem:[%s0 + $0x140] sm:$0xff]
    %v60 = vld [vmem:[%s0 + $0x148] sm:$0xff]
    %v61 = vld [vmem:[%s0 + $0x150] sm:$0xff]
    %v62 = vld [vmem:[%s0 + $0x158] sm:$0xff]
    %v63 = vld [vmem:[%s0 + $0x160] sm:$0xff]
    %v64 = vld [vmem:[%s0 + $0x168] sm:$0xff]
    %v65 = vld [vmem:[%s0 + $0x170] sm:$0xff]
    %v66 = vld [vmem:[%s0 + $0x178] sm:$0xff]
    %v67 = vld [vmem:[%s0 + $0x180] sm:$0xff]
    %v68 = vld [vmem:[%s0 + $0x188] sm:$0xff]
    %v69 = vld [vmem:[%s0 + $0x190] sm:$0xff]
    %v70 = vld [vmem:[%s0 + $0x198] sm:$0xff]
    %v71 = vld [vmem:[%s0 + $0x1a0] sm:$0xff]
    %v72 = vld [vmem:[%s0 + $0x1a8] sm:$0xff]
    %v73 = vld [vmem:[%s0 + $0x1b0] sm:$0xff]
    %v74 = vld [vmem:[%s0 + $0x1b8] sm:$0xff]
    %v75 = vld [vmem:[%s0 + $0x1c0] sm:$0xff]
    %v76 = vld [vmem:[%s0 + $0x1c8] sm:$0xff]
    %v77 = vld [vmem:[%s0 + $0x1d0] sm:$0xff]
    %v78 = vld [vmem:[%s0 + $0x1d8] sm:$0xff]
    %v79 = vld [vmem:[%s0 + $0x1e0] sm:$0xff]
    %v80 = vld [vmem:[%s0 + $0x1e8] sm:$0xff]
    %v81 = vld [vmem:[%s0 + $0x1f0] sm:$0xff]
    %v82 = vld [vmem:[%s2] sm:$0xff]
    %v83 = vld [vmem:[%s2 + $0x10] sm:$0xff]
    %v85 = vlaneseq
    %v86 = vshrl.u32 %v85, 7
    %v87 = vsub.s32 0, %v86
    %v88 = vrot.slane %v18, %v87
    %vm90 = vcmask 130048
    %v92 = vsel %vm90, %v19, 0
    %v95 = vsel %vm90, %v20, 0
    %v98 = vsel %vm90, %v21, 0
    %v101 = vsel %vm90, %v22, 0
    %v104 = vsel %vm90, %v23, 0
    %v107 = vsel %vm90, %v24, 0
    %v110 = vsel %vm90, %v25, 0
    %v113 = vsel %vm90, %v26, 0
    %v116 = vsel %vm90, %v27, 0
    %v119 = vsel %vm90, %v28, 0
    %v122 = vsel %vm90, %v29, 0
    %v125 = vsel %vm90, %v30, 0
    %v128 = vsel %vm90, %v31, 0
    %v131 = vsel %vm90, %v32, 0
    %v134 = vsel %vm90, %v33, 0
    %v137 = vsel %vm90, %v34, 0
    %v140 = vsel %vm90, %v35, 0
    %v143 = vsel %vm90, %v36, 0
    %v146 = vsel %vm90, %v37, 0
    %v149 = vsel %vm90, %v38, 0
    %v152 = vsel %vm90, %v39, 0
    %v155 = vsel %vm90, %v40, 0
    %v158 = vsel %vm90, %v41, 0
    %v161 = vsel %vm90, %v42, 0
    %v164 = vsel %vm90, %v43, 0
    %v167 = vsel %vm90, %v44, 0
    %v170 = vsel %vm90, %v45, 0
    %v173 = vsel %vm90, %v46, 0
    %v176 = vsel %vm90, %v47, 0
    %v179 = vsel %vm90, %v48, 0
    %v182 = vsel %vm90, %v49, 0
    %v185 = vsel %vm90, %v50, 0
    %v188 = vsel %vm90, %v51, 0
    %v191 = vsel %vm90, %v52, 0
    %v194 = vsel %vm90, %v53, 0
    %v197 = vsel %vm90, %v54, 0
    %v200 = vsel %vm90, %v55, 0
    %v203 = vsel %vm90, %v56, 0
    %v206 = vsel %vm90, %v57, 0
    %v209 = vsel %vm90, %v58, 0
    %v212 = vsel %vm90, %v59, 0
    %v215 = vsel %vm90, %v60, 0
    %v218 = vsel %vm90, %v61, 0
    %v221 = vsel %vm90, %v62, 0
    %v224 = vsel %vm90, %v63, 0
    %v227 = vsel %vm90, %v64, 0
    %v230 = vsel %vm90, %v65, 0
    %v233 = vsel %vm90, %v66, 0
    %v236 = vsel %vm90, %v67, 0
    %v239 = vsel %vm90, %v68, 0
    %v242 = vsel %vm90, %v69, 0
    %v245 = vsel %vm90, %v70, 0
    %v248 = vsel %vm90, %v71, 0
    %v251 = vsel %vm90, %v72, 0
    %v254 = vsel %vm90, %v73, 0
    %v257 = vsel %vm90, %v74, 0
    %v260 = vsel %vm90, %v75, 0
    %v263 = vsel %vm90, %v76, 0
    %v266 = vsel %vm90, %v77, 0
    %v269 = vsel %vm90, %v78, 0
    %v272 = vsel %vm90, %v79, 0
    %v275 = vsel %vm90, %v80, 0
    %v278 = vsel %vm90, %v81, 0
    %280 = vmatprep.subr.mxu0 0.0
    %281 = vmatpush1.msra.mxu0 %v82
    %282 = vmatprep.subr.mxu0 0.0
    %283 = vmatpush1.msra.mxu0 %v83
    %284 = vmatprep.subr.mxu0 0.0
    %285 = vmatpush1.msra.mxu0 0.0
    %286 = vmatprep.subr.mxu0 0.0
    %287 = vmatpush1.msra.mxu0 0.0
    %288 = vmatprep.subr.mxu0 0.0
    %289 = vmatpush1.msra.mxu0 0.0
    %290 = vmatprep.subr.mxu0 0.0
    %291 = vmatpush1.msra.mxu0 0.0
    %292 = vmatprep.subr.mxu0 0.0
    %293 = vmatpush1.msra.mxu0 0.0
    %294 = vmatprep.subr.mxu0 0.0
    %295 = vmatpush1.msra.mxu0 0.0
    %296 = vmatprep.subr.mxu0 0.0
    %297 = vmatpush1.msra.mxu0 0.0
    %298 = vmatprep.subr.mxu0 0.0
    %299 = vmatpush1.msra.mxu0 0.0
    %300 = vmatprep.subr.mxu0 0.0
    %301 = vmatpush1.msra.mxu0 0.0
    %302 = vmatprep.subr.mxu0 0.0
    %303 = vmatpush1.msra.mxu0 0.0
    %304 = vmatprep.subr.mxu0 0.0
    %305 = vmatpush1.msra.mxu0 0.0
    %306 = vmatprep.subr.mxu0 0.0
    %307 = vmatpush1.msra.mxu0 0.0
    %308 = vmatprep.subr.mxu0 0.0
    %309 = vmatpush1.msra.mxu0 0.0
    %310 = vmatprep.subr.mxu0 0.0
    %311 = vmatpush1.msra.mxu0 0.0
    %312 = vmatprep.subr.mxu0 0.0
    %313 = vmatpush1.msra.mxu0 0.0
    %314 = vmatprep.subr.mxu0 0.0
    %315 = vmatpush1.msra.mxu0 0.0
    %316 = vmatprep.subr.mxu0 0.0
    %317 = vmatpush1.msra.mxu0 0.0
    %318 = vmatprep.subr.mxu0 0.0
    %319 = vmatpush1.msra.mxu0 0.0
    %320 = vmatprep.subr.mxu0 0.0
    %321 = vmatpush1.msra.mxu0 0.0
    %322 = vmatprep.subr.mxu0 0.0
    %323 = vmatpush1.msra.mxu0 0.0
    %324 = vmatprep.subr.mxu0 0.0
    %325 = vmatpush1.msra.mxu0 0.0
    %326 = vmatprep.subr.mxu0 0.0
    %327 = vmatpush1.msra.mxu0 0.0
    %328 = vmatprep.subr.mxu0 0.0
    %329 = vmatpush1.msra.mxu0 0.0
    %330 = vmatprep.subr.mxu0 0.0
    %331 = vmatpush1.msra.mxu0 0.0
    %332 = vmatprep.subr.mxu0 0.0
    %333 = vmatpush1.msra.mxu0 0.0
    %334 = vmatprep.subr.mxu0 0.0
    %335 = vmatpush1.msra.mxu0 0.0
    %336 = vmatprep.subr.mxu0 0.0
    %337 = vmatpush1.msra.mxu0 0.0
    %338 = vmatprep.subr.mxu0 0.0
    %339 = vmatpush1.msra.mxu0 0.0
    %340 = vmatprep.subr.mxu0 0.0
    %341 = vmatpush1.msra.mxu0 0.0
    %342 = vmatprep.subr.mxu0 0.0
    %343 = vmatpush1.msra.mxu0 0.0
    %344 = vmatprep.mubr.f32.mxu0 0.0
    %345 = vmatmul.mubr.f32.gmra.mrb[0].mxu0 %v92
    %v346 = vpop.f32.mrb[0].mxu0
    %v347 = vadd.f32 %v88, %v346
    %v348 = vpop.f32.mrb[0].mxu0
    %349 = vmatprep.mubr.f32.mxu0 0.0
    %350 = vmatmul.mubr.f32.gmra.mrb[0].mxu0 %v95
    %v351 = vpop.f32.mrb[0].mxu0
    %v352 = vadd.f32 %v88, %v351
    %v353 = vpop.f32.mrb[0].mxu0
    %354 = vmatprep.mubr.f32.mxu0 0.0
    %355 = vmatmul.mubr.f32.gmra.mrb[0].mxu0 %v98
    %v356 = vpop.f32.mrb[0].mxu0
    %v357 = vadd.f32 %v88, %v356
    %v358 = vpop.f32.mrb[0].mxu0
    %359 = vmatprep.mubr.f32.mxu0 0.0
    %360 = vmatmul.mubr.f32.gmra.mrb[0].mxu0 %v101
    %v361 = vpop.f32.mrb[0].mxu0
    %v362 = vadd.f32 %v88, %v361
    %v363 = vpop.f32.mrb[0].mxu0
    %364 = vmatprep.mubr.f32.mxu0 0.0
    %365 = vmatmul.mubr.f32.gmra.mrb[0].mxu0 %v104
    %v366 = vpop.f32.mrb[0].mxu0
    %v367 = vadd.f32 %v88, %v366
    %v368 = vpop.f32.mrb[0].mxu0
    %369 = vmatprep.mubr.f32.mxu0 0.0
    %370 = vmatmul.mubr.f32.gmra.mrb[0].mxu0 %v107
    %v371 = vpop.f32.mrb[0].mxu0
    %v372 = vadd.f32 %v88, %v371
    %v373 = vpop.f32.mrb[0].mxu0
    %374 = vmatprep.mubr.f32.mxu0 0.0
    %375 = vmatmul.mubr.f32.gmra.mrb[0].mxu0 %v110
    %v376 = vpop.f32.mrb[0].mxu0
    %v377 = vadd.f32 %v88, %v376
    %v378 = vpop.f32.mrb[0].mxu0
    %379 = vmatprep.mubr.f32.mxu0 0.0
    %380 = vmatmul.mubr.f32.gmra.mrb[0].mxu0 %v113
    %v381 = vpop.f32.mrb[0].mxu0
    %v382 = vadd.f32 %v88, %v381
    %v383 = vpop.f32.mrb[0].mxu0
    %384 = vmatprep.mubr.f32.mxu0 0.0
    %385 = vmatmul.mubr.f32.gmra.mrb[0].mxu0 %v116
    %v386 = vpop.f32.mrb[0].mxu0
    %v387 = vadd.f32 %v88, %v386
    %v388 = vpop.f32.mrb[0].mxu0
    %389 = vmatprep.mubr.f32.mxu0 0.0
    %390 = vmatmul.mubr.f32.gmra.mrb[0].mxu0 %v119
    %v391 = vpop.f32.mrb[0].mxu0
    %v392 = vadd.f32 %v88, %v391
    %v393 = vpop.f32.mrb[0].mxu0
    %394 = vmatprep.mubr.f32.mxu0 0.0
    %395 = vmatmul.mubr.f32.gmra.mrb[0].mxu0 %v122
    %v396 = vpop.f32.mrb[0].mxu0
    %v397 = vadd.f32 %v88, %v396
    %v398 = vpop.f32.mrb[0].mxu0
    %399 = vmatprep.mubr.f32.mxu0 0.0
    %400 = vmatmul.mubr.f32.gmra.mrb[0].mxu0 %v125
    %v401 = vpop.f32.mrb[0].mxu0
    %v402 = vadd.f32 %v88, %v401
    %v403 = vpop.f32.mrb[0].mxu0
    %404 = vmatprep.mubr.f32.mxu0 0.0
    %405 = vmatmul.mubr.f32.gmra.mrb[0].mxu0 %v128
    %v406 = vpop.f32.mrb[0].mxu0
    %v407 = vadd.f32 %v88, %v406
    %v408 = vpop.f32.mrb[0].mxu0
    %409 = vmatprep.mubr.f32.mxu0 0.0
    %410 = vmatmul.mubr.f32.gmra.mrb[0].mxu0 %v131
    %v411 = vpop.f32.mrb[0].mxu0
    %v412 = vadd.f32 %v88, %v411
    %v413 = vpop.f32.mrb[0].mxu0
    %414 = vmatprep.mubr.f32.mxu0 0.0
    %415 = vmatmul.mubr.f32.gmra.mrb[0].mxu0 %v134
    %v416 = vpop.f32.mrb[0].mxu0
    %v417 = vadd.f32 %v88, %v416
    %v418 = vpop.f32.mrb[0].mxu0
    %419 = vmatprep.mubr.f32.mxu0 0.0
    %420 = vmatmul.mubr.f32.gmra.mrb[0].mxu0 %v137
    %v421 = vpop.f32.mrb[0].mxu0
    %v422 = vadd.f32 %v88, %v421
    %v423 = vpop.f32.mrb[0].mxu0
    %424 = vmatprep.mubr.f32.mxu0 0.0
    %425 = vmatmul.mubr.f32.gmra.mrb[0].mxu0 %v140
    %v426 = vpop.f32.mrb[0].mxu0
    %v427 = vadd.f32 %v88, %v426
    %v428 = vpop.f32.mrb[0].mxu0
    %429 = vmatprep.mubr.f32.mxu0 0.0
    %430 = vmatmul.mubr.f32.gmra.mrb[0].mxu0 %v143
    %v431 = vpop.f32.mrb[0].mxu0
    %v432 = vadd.f32 %v88, %v431
    %v433 = vpop.f32.mrb[0].mxu0
    %434 = vmatprep.mubr.f32.mxu0 0.0
    %435 = vmatmul.mubr.f32.gmra.mrb[0].mxu0 %v146
    %v436 = vpop.f32.mrb[0].mxu0
    %v437 = vadd.f32 %v88, %v436
    %v438 = vpop.f32.mrb[0].mxu0
    %439 = vmatprep.mubr.f32.mxu0 0.0
    %440 = vmatmul.mubr.f32.gmra.mrb[0].mxu0 %v149
    %v441 = vpop.f32.mrb[0].mxu0
    %v442 = vadd.f32 %v88, %v441
    %v443 = vpop.f32.mrb[0].mxu0
    %444 = vmatprep.mubr.f32.mxu0 0.0
    %445 = vmatmul.mubr.f32.gmra.mrb[0].mxu0 %v152
    %v446 = vpop.f32.mrb[0].mxu0
    %v447 = vadd.f32 %v88, %v446
    %v448 = vpop.f32.mrb[0].mxu0
    %449 = vmatprep.mubr.f32.mxu0 0.0
    %450 = vmatmul.mubr.f32.gmra.mrb[0].mxu0 %v155
    %v451 = vpop.f32.mrb[0].mxu0
    %v452 = vadd.f32 %v88, %v451
    %v453 = vpop.f32.mrb[0].mxu0
    %454 = vmatprep.mubr.f32.mxu0 0.0
    %455 = vmatmul.mubr.f32.gmra.mrb[0].mxu0 %v158
    %v456 = vpop.f32.mrb[0].mxu0
    %v457 = vadd.f32 %v88, %v456
    %v458 = vpop.f32.mrb[0].mxu0
    %459 = vmatprep.mubr.f32.mxu0 0.0
    %460 = vmatmul.mubr.f32.gmra.mrb[0].mxu0 %v161
    %v461 = vpop.f32.mrb[0].mxu0
    %v462 = vadd.f32 %v88, %v461
    %v463 = vpop.f32.mrb[0].mxu0
    %464 = vmatprep.mubr.f32.mxu0 0.0
    %465 = vmatmul.mubr.f32.gmra.mrb[0].mxu0 %v164
    %v466 = vpop.f32.mrb[0].mxu0
    %v467 = vadd.f32 %v88, %v466
    %v468 = vpop.f32.mrb[0].mxu0
    %469 = vmatprep.mubr.f32.mxu0 0.0
    %470 = vmatmul.mubr.f32.gmra.mrb[0].mxu0 %v167
    %v471 = vpop.f32.mrb[0].mxu0
    %v472 = vadd.f32 %v88, %v471
    %v473 = vpop.f32.mrb[0].mxu0
    %474 = vmatprep.mubr.f32.mxu0 0.0
    %475 = vmatmul.mubr.f32.gmra.mrb[0].mxu0 %v170
    %v476 = vpop.f32.mrb[0].mxu0
    %v477 = vadd.f32 %v88, %v476
    %v478 = vpop.f32.mrb[0].mxu0
    %479 = vmatprep.mubr.f32.mxu0 0.0
    %480 = vmatmul.mubr.f32.gmra.mrb[0].mxu0 %v173
    %v481 = vpop.f32.mrb[0].mxu0
    %v482 = vadd.f32 %v88, %v481
    %v483 = vpop.f32.mrb[0].mxu0
    %484 = vmatprep.mubr.f32.mxu0 0.0
    %485 = vmatmul.mubr.f32.gmra.mrb[0].mxu0 %v176
    %v486 = vpop.f32.mrb[0].mxu0
    %v487 = vadd.f32 %v88, %v486
    %v488 = vpop.f32.mrb[0].mxu0
    %489 = vmatprep.mubr.f32.mxu0 0.0
    %490 = vmatmul.mubr.f32.gmra.mrb[0].mxu0 %v179
    %v491 = vpop.f32.mrb[0].mxu0
    %v492 = vadd.f32 %v88, %v491
    %v493 = vpop.f32.mrb[0].mxu0
    %494 = vmatprep.mubr.f32.mxu0 0.0
    %495 = vmatmul.mubr.f32.gmra.mrb[0].mxu0 %v182
    %v496 = vpop.f32.mrb[0].mxu0
    %v497 = vadd.f32 %v88, %v496
    %v498 = vpop.f32.mrb[0].mxu0
    %499 = vmatprep.mubr.f32.mxu0 0.0
    %500 = vmatmul.mubr.f32.gmra.mrb[0].mxu0 %v185
    %v501 = vpop.f32.mrb[0].mxu0
    %v502 = vadd.f32 %v88, %v501
    %v503 = vpop.f32.mrb[0].mxu0
    %504 = vmatprep.mubr.f32.mxu0 0.0
    %505 = vmatmul.mubr.f32.gmra.mrb[0].mxu0 %v188
    %v506 = vpop.f32.mrb[0].mxu0
    %v507 = vadd.f32 %v88, %v506
    %v508 = vpop.f32.mrb[0].mxu0
    %509 = vmatprep.mubr.f32.mxu0 0.0
    %510 = vmatmul.mubr.f32.gmra.mrb[0].mxu0 %v191
    %v511 = vpop.f32.mrb[0].mxu0
    %v512 = vadd.f32 %v88, %v511
    %v513 = vpop.f32.mrb[0].mxu0
    %514 = vmatprep.mubr.f32.mxu0 0.0
    %515 = vmatmul.mubr.f32.gmra.mrb[0].mxu0 %v194
    %v516 = vpop.f32.mrb[0].mxu0
    %v517 = vadd.f32 %v88, %v516
    %v518 = vpop.f32.mrb[0].mxu0
    %519 = vmatprep.mubr.f32.mxu0 0.0
    %520 = vmatmul.mubr.f32.gmra.mrb[0].mxu0 %v197
    %v521 = vpop.f32.mrb[0].mxu0
    %v522 = vadd.f32 %v88, %v521
    %v523 = vpop.f32.mrb[0].mxu0
    %524 = vmatprep.mubr.f32.mxu0 0.0
    %525 = vmatmul.mubr.f32.gmra.mrb[0].mxu0 %v200
    %v526 = vpop.f32.mrb[0].mxu0
    %v527 = vadd.f32 %v88, %v526
    %v528 = vpop.f32.mrb[0].mxu0
    %529 = vmatprep.mubr.f32.mxu0 0.0
    %530 = vmatmul.mubr.f32.gmra.mrb[0].mxu0 %v203
    %v531 = vpop.f32.mrb[0].mxu0
    %v532 = vadd.f32 %v88, %v531
    %v533 = vpop.f32.mrb[0].mxu0
    %534 = vmatprep.mubr.f32.mxu0 0.0
    %535 = vmatmul.mubr.f32.gmra.mrb[0].mxu0 %v206
    %v536 = vpop.f32.mrb[0].mxu0
    %v537 = vadd.f32 %v88, %v536
    %v538 = vpop.f32.mrb[0].mxu0
    %539 = vmatprep.mubr.f32.mxu0 0.0
    %540 = vmatmul.mubr.f32.gmra.mrb[0].mxu0 %v209
    %v541 = vpop.f32.mrb[0].mxu0
    %v542 = vadd.f32 %v88, %v541
    %v543 = vpop.f32.mrb[0].mxu0
    %544 = vmatprep.mubr.f32.mxu0 0.0
    %545 = vmatmul.mubr.f32.gmra.mrb[0].mxu0 %v212
    %v546 = vpop.f32.mrb[0].mxu0
    %v547 = vadd.f32 %v88, %v546
    %v548 = vpop.f32.mrb[0].mxu0
    %549 = vmatprep.mubr.f32.mxu0 0.0
    %550 = vmatmul.mubr.f32.gmra.mrb[0].mxu0 %v215
    %v551 = vpop.f32.mrb[0].mxu0
    %v552 = vadd.f32 %v88, %v551
    %v553 = vpop.f32.mrb[0].mxu0
    %554 = vmatprep.mubr.f32.mxu0 0.0
    %555 = vmatmul.mubr.f32.gmra.mrb[0].mxu0 %v218
    %v556 = vpop.f32.mrb[0].mxu0
    %v557 = vadd.f32 %v88, %v556
    %v558 = vpop.f32.mrb[0].mxu0
    %559 = vmatprep.mubr.f32.mxu0 0.0
    %560 = vmatmul.mubr.f32.gmra.mrb[0].mxu0 %v221
    %v561 = vpop.f32.mrb[0].mxu0
    %v562 = vadd.f32 %v88, %v561
    %v563 = vpop.f32.mrb[0].mxu0
    %564 = vmatprep.mubr.f32.mxu0 0.0
    %565 = vmatmul.mubr.f32.gmra.mrb[0].mxu0 %v224
    %v566 = vpop.f32.mrb[0].mxu0
    %v567 = vadd.f32 %v88, %v566
    %v568 = vpop.f32.mrb[0].mxu0
    %569 = vmatprep.mubr.f32.mxu0 0.0
    %570 = vmatmul.mubr.f32.gmra.mrb[0].mxu0 %v227
    %v571 = vpop.f32.mrb[0].mxu0
    %v572 = vadd.f32 %v88, %v571
    %v573 = vpop.f32.mrb[0].mxu0
    %574 = vmatprep.mubr.f32.mxu0 0.0
    %575 = vmatmul.mubr.f32.gmra.mrb[0].mxu0 %v230
    %v576 = vpop.f32.mrb[0].mxu0
    %v577 = vadd.f32 %v88, %v576
    %v578 = vpop.f32.mrb[0].mxu0
    %579 = vmatprep.mubr.f32.mxu0 0.0
    %580 = vmatmul.mubr.f32.gmra.mrb[0].mxu0 %v233
    %v581 = vpop.f32.mrb[0].mxu0
    %v582 = vadd.f32 %v88, %v581
    %v583 = vpop.f32.mrb[0].mxu0
    %584 = vmatprep.mubr.f32.mxu0 0.0
    %585 = vmatmul.mubr.f32.gmra.mrb[0].mxu0 %v236
    %v586 = vpop.f32.mrb[0].mxu0
    %v587 = vadd.f32 %v88, %v586
    %v588 = vpop.f32.mrb[0].mxu0
    %589 = vmatprep.mubr.f32.mxu0 0.0
    %590 = vmatmul.mubr.f32.gmra.mrb[0].mxu0 %v239
    %v591 = vpop.f32.mrb[0].mxu0
    %v592 = vadd.f32 %v88, %v591
    %v593 = vpop.f32.mrb[0].mxu0
    %594 = vmatprep.mubr.f32.mxu0 0.0
    %595 = vmatmul.mubr.f32.gmra.mrb[0].mxu0 %v242
    %v596 = vpop.f32.mrb[0].mxu0
    %v597 = vadd.f32 %v88, %v596
    %v598 = vpop.f32.mrb[0].mxu0
    %599 = vmatprep.mubr.f32.mxu0 0.0
    %600 = vmatmul.mubr.f32.gmra.mrb[0].mxu0 %v245
    %v601 = vpop.f32.mrb[0].mxu0
    %v602 = vadd.f32 %v88, %v601
    %v603 = vpop.f32.mrb[0].mxu0
    %604 = vmatprep.mubr.f32.mxu0 0.0
    %605 = vmatmul.mubr.f32.gmra.mrb[0].mxu0 %v248
    %v606 = vpop.f32.mrb[0].mxu0
    %v607 = vadd.f32 %v88, %v606
    %v608 = vpop.f32.mrb[0].mxu0
    %609 = vmatprep.mubr.f32.mxu0 0.0
    %610 = vmatmul.mubr.f32.gmra.mrb[0].mxu0 %v251
    %v611 = vpop.f32.mrb[0].mxu0
    %v612 = vadd.f32 %v88, %v611
    %v613 = vpop.f32.mrb[0].mxu0
    %614 = vmatprep.mubr.f32.mxu0 0.0
    %615 = vmatmul.mubr.f32.gmra.mrb[0].mxu0 %v254
    %v616 = vpop.f32.mrb[0].mxu0
    %v617 = vadd.f32 %v88, %v616
    %v618 = vpop.f32.mrb[0].mxu0
    %619 = vmatprep.mubr.f32.mxu0 0.0
    %620 = vmatmul.mubr.f32.gmra.mrb[0].mxu0 %v257
    %v621 = vpop.f32.mrb[0].mxu0
    %v622 = vadd.f32 %v88, %v621
    %v623 = vpop.f32.mrb[0].mxu0
    %624 = vmatprep.mubr.f32.mxu0 0.0
    %625 = vmatmul.mubr.f32.gmra.mrb[0].mxu0 %v260
    %v626 = vpop.f32.mrb[0].mxu0
    %v627 = vadd.f32 %v88, %v626
    %v628 = vpop.f32.mrb[0].mxu0
    %629 = vmatprep.mubr.f32.mxu0 0.0
    %630 = vmatmul.mubr.f32.gmra.mrb[0].mxu0 %v263
    %v631 = vpop.f32.mrb[0].mxu0
    %v632 = vadd.f32 %v88, %v631
    %v633 = vpop.f32.mrb[0].mxu0
    %634 = vmatprep.mubr.f32.mxu0 0.0
    %635 = vmatmul.mubr.f32.gmra.mrb[0].mxu0 %v266
    %v636 = vpop.f32.mrb[0].mxu0
    %v637 = vadd.f32 %v88, %v636
    %v638 = vpop.f32.mrb[0].mxu0
    %639 = vmatprep.mubr.f32.mxu0 0.0
    %640 = vmatmul.mubr.f32.gmra.mrb[0].mxu0 %v269
    %v641 = vpop.f32.mrb[0].mxu0
    %v642 = vadd.f32 %v88, %v641
    %v643 = vpop.f32.mrb[0].mxu0
    %644 = vmatprep.mubr.f32.mxu0 0.0
    %645 = vmatmul.mubr.f32.gmra.mrb[0].mxu0 %v272
    %v646 = vpop.f32.mrb[0].mxu0
    %v647 = vadd.f32 %v88, %v646
    %v648 = vpop.f32.mrb[0].mxu0
    %649 = vmatprep.mubr.f32.mxu0 0.0
    %650 = vmatmul.mubr.f32.gmra.mrb[0].mxu0 %v275
    %v651 = vpop.f32.mrb[0].mxu0
    %v652 = vadd.f32 %v88, %v651
    %v653 = vpop.f32.mrb[0].mxu0
    %654 = vmatprep.mubr.f32.mxu0 0.0
    %655 = vmatmul.mubr.f32.gmra.mrb[0].mxu0 %v278
    %v656 = vpop.f32.mrb[0].mxu0
    %v657 = vadd.f32 %v88, %v656
    %v658 = vpop.f32.mrb[0].mxu0
    %659 = vdwg.mxu0
    %vm660 = vcmp.gt.f32.partialorder %v347, 0.0
    %vm661 = vcmp.gt.f32.partialorder %v352, 0.0
    %vm662 = vcmp.gt.f32.partialorder %v357, 0.0
    %vm663 = vcmp.gt.f32.partialorder %v362, 0.0
    %vm664 = vcmp.gt.f32.partialorder %v367, 0.0
    %vm665 = vcmp.gt.f32.partialorder %v372, 0.0
    %vm666 = vcmp.gt.f32.partialorder %v377, 0.0
    %vm667 = vcmp.gt.f32.partialorder %v382, 0.0
    %vm668 = vcmp.gt.f32.partialorder %v387, 0.0
    %vm669 = vcmp.gt.f32.partialorder %v392, 0.0
    %vm670 = vcmp.gt.f32.partialorder %v397, 0.0
    %vm671 = vcmp.gt.f32.partialorder %v402, 0.0
    %vm672 = vcmp.gt.f32.partialorder %v407, 0.0
    %vm673 = vcmp.gt.f32.partialorder %v412, 0.0
    %vm674 = vcmp.gt.f32.partialorder %v417, 0.0
    %vm675 = vcmp.gt.f32.partialorder %v422, 0.0
    %vm676 = vcmp.gt.f32.partialorder %v427, 0.0
    %vm677 = vcmp.gt.f32.partialorder %v432, 0.0
    %vm678 = vcmp.gt.f32.partialorder %v437, 0.0
    %vm679 = vcmp.gt.f32.partialorder %v442, 0.0
    %vm680 = vcmp.gt.f32.partialorder %v447, 0.0
    %vm681 = vcmp.gt.f32.partialorder %v452, 0.0
    %vm682 = vcmp.gt.f32.partialorder %v457, 0.0
    %vm683 = vcmp.gt.f32.partialorder %v462, 0.0
    %vm684 = vcmp.gt.f32.partialorder %v467, 0.0
    %vm685 = vcmp.gt.f32.partialorder %v472, 0.0
    %vm686 = vcmp.gt.f32.partialorder %v477, 0.0
    %vm687 = vcmp.gt.f32.partialorder %v482, 0.0
    %vm688 = vcmp.gt.f32.partialorder %v487, 0.0
    %vm689 = vcmp.gt.f32.partialorder %v492, 0.0
    %vm690 = vcmp.gt.f32.partialorder %v497, 0.0
    %vm691 = vcmp.gt.f32.partialorder %v502, 0.0
    %vm692 = vcmp.gt.f32.partialorder %v507, 0.0
    %vm693 = vcmp.gt.f32.partialorder %v512, 0.0
    %vm694 = vcmp.gt.f32.partialorder %v517, 0.0
    %vm695 = vcmp.gt.f32.partialorder %v522, 0.0
    %vm696 = vcmp.gt.f32.partialorder %v527, 0.0
    %vm697 = vcmp.gt.f32.partialorder %v532, 0.0
    %vm698 = vcmp.gt.f32.partialorder %v537, 0.0
    %vm699 = vcmp.gt.f32.partialorder %v542, 0.0
    %vm700 = vcmp.gt.f32.partialorder %v547, 0.0
    %vm701 = vcmp.gt.f32.partialorder %v552, 0.0
    %vm702 = vcmp.gt.f32.partialorder %v557, 0.0
    %vm703 = vcmp.gt.f32.partialorder %v562, 0.0
    %vm704 = vcmp.gt.f32.partialorder %v567, 0.0
    %vm705 = vcmp.gt.f32.partialorder %v572, 0.0
    %vm706 = vcmp.gt.f32.partialorder %v577, 0.0
    %vm707 = vcmp.gt.f32.partialorder %v582, 0.0
    %vm708 = vcmp.gt.f32.partialorder %v587, 0.0
    %vm709 = vcmp.gt.f32.partialorder %v592, 0.0
    %vm710 = vcmp.gt.f32.partialorder %v597, 0.0
    %vm711 = vcmp.gt.f32.partialorder %v602, 0.0
    %vm712 = vcmp.gt.f32.partialorder %v607, 0.0
    %vm713 = vcmp.gt.f32.partialorder %v612, 0.0
    %vm714 = vcmp.gt.f32.partialorder %v617, 0.0
    %vm715 = vcmp.gt.f32.partialorder %v622, 0.0
    %vm716 = vcmp.gt.f32.partialorder %v627, 0.0
    %vm717 = vcmp.gt.f32.partialorder %v632, 0.0
    %vm718 = vcmp.gt.f32.partialorder %v637, 0.0
    %vm719 = vcmp.gt.f32.partialorder %v642, 0.0
    %vm720 = vcmp.gt.f32.partialorder %v647, 0.0
    %vm721 = vcmp.gt.f32.partialorder %v652, 0.0
    %vm722 = vcmp.gt.f32.partialorder %v657, 0.0
    %v723 = vmul.f32 %v347, 0.01
    %v724 = vmul.f32 %v352, 0.01
    %v725 = vmul.f32 %v357, 0.01
    %v726 = vmul.f32 %v362, 0.01
    %v727 = vmul.f32 %v367, 0.01
    %v728 = vmul.f32 %v372, 0.01
    %v729 = vmul.f32 %v377, 0.01
    %v730 = vmul.f32 %v382, 0.01
    %v731 = vmul.f32 %v387, 0.01
    %v732 = vmul.f32 %v392, 0.01
    %v733 = vmul.f32 %v397, 0.01
    %v734 = vmul.f32 %v402, 0.01
    %v735 = vmul.f32 %v407, 0.01
    %v736 = vmul.f32 %v412, 0.01
    %v737 = vmul.f32 %v417, 0.01
    %v738 = vmul.f32 %v422, 0.01
    %v739 = vmul.f32 %v427, 0.01
    %v740 = vmul.f32 %v432, 0.01
    %v741 = vmul.f32 %v437, 0.01
    %v742 = vmul.f32 %v442, 0.01
    %v743 = vmul.f32 %v447, 0.01
    %v744 = vmul.f32 %v452, 0.01
    %v745 = vmul.f32 %v457, 0.01
    %v746 = vmul.f32 %v462, 0.01
    %v747 = vmul.f32 %v467, 0.01
    %v748 = vmul.f32 %v472, 0.01
    %v749 = vmul.f32 %v477, 0.01
    %v750 = vmul.f32 %v482, 0.01
    %v751 = vmul.f32 %v487, 0.01
    %v752 = vmul.f32 %v492, 0.01
    %v753 = vmul.f32 %v497, 0.01
    %v754 = vmul.f32 %v502, 0.01
    %v755 = vmul.f32 %v507, 0.01
    %v756 = vmul.f32 %v512, 0.01
    %v757 = vmul.f32 %v517, 0.01
    %v758 = vmul.f32 %v522, 0.01
    %v759 = vmul.f32 %v527, 0.01
    %v760 = vmul.f32 %v532, 0.01
    %v761 = vmul.f32 %v537, 0.01
    %v762 = vmul.f32 %v542, 0.01
    %v763 = vmul.f32 %v547, 0.01
    %v764 = vmul.f32 %v552, 0.01
    %v765 = vmul.f32 %v557, 0.01
    %v766 = vmul.f32 %v562, 0.01
    %v767 = vmul.f32 %v567, 0.01
    %v768 = vmul.f32 %v572, 0.01
    %v769 = vmul.f32 %v577, 0.01
    %v770 = vmul.f32 %v582, 0.01
    %v771 = vmul.f32 %v587, 0.01
    %v772 = vmul.f32 %v592, 0.01
    %v773 = vmul.f32 %v597, 0.01
    %v774 = vmul.f32 %v602, 0.01
    %v775 = vmul.f32 %v607, 0.01
    %v776 = vmul.f32 %v612, 0.01
    %v777 = vmul.f32 %v617, 0.01
    %v778 = vmul.f32 %v622, 0.01
    %v779 = vmul.f32 %v627, 0.01
    %v780 = vmul.f32 %v632, 0.01
    %v781 = vmul.f32 %v637, 0.01
    %v782 = vmul.f32 %v642, 0.01
    %v783 = vmul.f32 %v647, 0.01
    %v784 = vmul.f32 %v652, 0.01
    %v785 = vmul.f32 %v657, 0.01
    %v786 = vsel %vm660, %v347, %v723
    %v787 = vsel %vm661, %v352, %v724
    %v788 = vsel %vm662, %v357, %v725
    %v789 = vsel %vm663, %v362, %v726
    %v790 = vsel %vm664, %v367, %v727
    %v791 = vsel %vm665, %v372, %v728
    %v792 = vsel %vm666, %v377, %v729
    %v793 = vsel %vm667, %v382, %v730
    %v794 = vsel %vm668, %v387, %v731
    %v795 = vsel %vm669, %v392, %v732
    %v796 = vsel %vm670, %v397, %v733
    %v797 = vsel %vm671, %v402, %v734
    %v798 = vsel %vm672, %v407, %v735
    %v799 = vsel %vm673, %v412, %v736
    %v800 = vsel %vm674, %v417, %v737
    %v801 = vsel %vm675, %v422, %v738
    %v802 = vsel %vm676, %v427, %v739
    %v803 = vsel %vm677, %v432, %v740
    %v804 = vsel %vm678, %v437, %v741
    %v805 = vsel %vm679, %v442, %v742
    %v806 = vsel %vm680, %v447, %v743
    %v807 = vsel %vm681, %v452, %v744
    %v808 = vsel %vm682, %v457, %v745
    %v809 = vsel %vm683, %v462, %v746
    %v810 = vsel %vm684, %v467, %v747
    %v811 = vsel %vm685, %v472, %v748
    %v812 = vsel %vm686, %v477, %v749
    %v813 = vsel %vm687, %v482, %v750
    %v814 = vsel %vm688, %v487, %v751
    %v815 = vsel %vm689, %v492, %v752
    %v816 = vsel %vm690, %v497, %v753
    %v817 = vsel %vm691, %v502, %v754
    %v818 = vsel %vm692, %v507, %v755
    %v819 = vsel %vm693, %v512, %v756
    %v820 = vsel %vm694, %v517, %v757
    %v821 = vsel %vm695, %v522, %v758
    %v822 = vsel %vm696, %v527, %v759
    %v823 = vsel %vm697, %v532, %v760
    %v824 = vsel %vm698, %v537, %v761
    %v825 = vsel %vm699, %v542, %v762
    %v826 = vsel %vm700, %v547, %v763
    %v827 = vsel %vm701, %v552, %v764
    %v828 = vsel %vm702, %v557, %v765
    %v829 = vsel %vm703, %v562, %v766
    %v830 = vsel %vm704, %v567, %v767
    %v831 = vsel %vm705, %v572, %v768
    %v832 = vsel %vm706, %v577, %v769
    %v833 = vsel %vm707, %v582, %v770
    %v834 = vsel %vm708, %v587, %v771
    %v835 = vsel %vm709, %v592, %v772
    %v836 = vsel %vm710, %v597, %v773
    %v837 = vsel %vm711, %v602, %v774
    %v838 = vsel %vm712, %v607, %v775
    %v839 = vsel %vm713, %v612, %v776
    %v840 = vsel %vm714, %v617, %v777
    %v841 = vsel %vm715, %v622, %v778
    %v842 = vsel %vm716, %v627, %v779
    %v843 = vsel %vm717, %v632, %v780
    %v844 = vsel %vm718, %v637, %v781
    %v845 = vsel %vm719, %v642, %v782
    %v846 = vsel %vm720, %v647, %v783
    %v847 = vsel %vm721, %v652, %v784
    %v848 = vsel %vm722, %v657, %v785
    %851 = vrot.lane.b32.xlu0 %v82, 112
    %v852 = vpop.permute.xlu0 %851
    %853 = vrot.lane.b32.xlu0 %v83, 112
    %v854 = vpop.permute.xlu0 %853
    %v858 = vsel %vm90, %v786, 0
    %v861 = vsel %vm90, %v787, 0
    %v864 = vsel %vm90, %v788, 0
    %v867 = vsel %vm90, %v789, 0
    %v870 = vsel %vm90, %v790, 0
    %v873 = vsel %vm90, %v791, 0
    %v876 = vsel %vm90, %v792, 0
    %v879 = vsel %vm90, %v793, 0
    %v882 = vsel %vm90, %v794, 0
    %v885 = vsel %vm90, %v795, 0
    %v888 = vsel %vm90, %v796, 0
    %v891 = vsel %vm90, %v797, 0
    %v894 = vsel %vm90, %v798, 0
    %v897 = vsel %vm90, %v799, 0
    %v900 = vsel %vm90, %v800, 0
    %v903 = vsel %vm90, %v801, 0
    %v906 = vsel %vm90, %v802, 0
    %v909 = vsel %vm90, %v803, 0
    %v912 = vsel %vm90, %v804, 0
    %v915 = vsel %vm90, %v805, 0
    %v918 = vsel %vm90, %v806, 0
    %v921 = vsel %vm90, %v807, 0
    %v924 = vsel %vm90, %v808, 0
    %v927 = vsel %vm90, %v809, 0
    %v930 = vsel %vm90, %v810, 0
    %v933 = vsel %vm90, %v811, 0
    %v936 = vsel %vm90, %v812, 0
    %v939 = vsel %vm90, %v813, 0
    %v942 = vsel %vm90, %v814, 0
    %v945 = vsel %vm90, %v815, 0
    %v948 = vsel %vm90, %v816, 0
    %v951 = vsel %vm90, %v817, 0
    %v954 = vsel %vm90, %v818, 0
    %v957 = vsel %vm90, %v819, 0
    %v960 = vsel %vm90, %v820, 0
    %v963 = vsel %vm90, %v821, 0
    %v966 = vsel %vm90, %v822, 0
    %v969 = vsel %vm90, %v823, 0
    %v972 = vsel %vm90, %v824, 0
    %v975 = vsel %vm90, %v825, 0
    %v978 = vsel %vm90, %v826, 0
    %v981 = vsel %vm90, %v827, 0
    %v984 = vsel %vm90, %v828, 0
    %v987 = vsel %vm90, %v829, 0
    %v990 = vsel %vm90, %v830, 0
    %v993 = vsel %vm90, %v831, 0
    %v996 = vsel %vm90, %v832, 0
    %v999 = vsel %vm90, %v833, 0
    %v1002 = vsel %vm90, %v834, 0
    %v1005 = vsel %vm90, %v835, 0
    %v1008 = vsel %vm90, %v836, 0
    %v1011 = vsel %vm90, %v837, 0
    %v1014 = vsel %vm90, %v838, 0
    %v1017 = vsel %vm90, %v839, 0
    %v1020 = vsel %vm90, %v840, 0
    %v1023 = vsel %vm90, %v841, 0
    %v1026 = vsel %vm90, %v842, 0
    %v1029 = vsel %vm90, %v843, 0
    %v1032 = vsel %vm90, %v844, 0
    %v1035 = vsel %vm90, %v845, 0
    %v1038 = vsel %vm90, %v846, 0
    %v1041 = vsel %vm90, %v847, 0
    %v1044 = vsel %vm90, %v848, 0
    %1046 = vmatprep.subr.mxu0 0.0
    %1047 = vmatpush1.msra.mxu0 %v852
    %1048 = vmatprep.subr.mxu0 0.0
    %1049 = vmatpush1.msra.mxu0 %v854
    %1050 = vmatprep.subr.mxu0 0.0
    %1051 = vmatpush1.msra.mxu0 0.0
    %1052 = vmatprep.subr.mxu0 0.0
    %1053 = vmatpush1.msra.mxu0 0.0
    %1054 = vmatprep.subr.mxu0 0.0
    %1055 = vmatpush1.msra.mxu0 0.0
    %1056 = vmatprep.subr.mxu0 0.0
    %1057 = vmatpush1.msra.mxu0 0.0
    %1058 = vmatprep.subr.mxu0 0.0
    %1059 = vmatpush1.msra.mxu0 0.0
    %1060 = vmatprep.subr.mxu0 0.0
    %1061 = vmatpush1.msra.mxu0 0.0
    %1062 = vmatprep.subr.mxu0 0.0
    %1063 = vmatpush1.msra.mxu0 0.0
    %1064 = vmatprep.subr.mxu0 0.0
    %1065 = vmatpush1.msra.mxu0 0.0
    %1066 = vmatprep.subr.mxu0 0.0
    %1067 = vmatpush1.msra.mxu0 0.0
    %1068 = vmatprep.subr.mxu0 0.0
    %1069 = vmatpush1.msra.mxu0 0.0
    %1070 = vmatprep.subr.mxu0 0.0
    %1071 = vmatpush1.msra.mxu0 0.0
    %1072 = vmatprep.subr.mxu0 0.0
    %1073 = vmatpush1.msra.mxu0 0.0
    %1074 = vmatprep.subr.mxu0 0.0
    %1075 = vmatpush1.msra.mxu0 0.0
    %1076 = vmatprep.subr.mxu0 0.0
    %1077 = vmatpush1.msra.mxu0 0.0
    %1078 = vmatprep.subr.mxu0 0.0
    %1079 = vmatpush1.msra.mxu0 0.0
    %1080 = vmatprep.subr.mxu0 0.0
    %1081 = vmatpush1.msra.mxu0 0.0
    %1082 = vmatprep.subr.mxu0 0.0
    %1083 = vmatpush1.msra.mxu0 0.0
    %1084 = vmatprep.subr.mxu0 0.0
    %1085 = vmatpush1.msra.mxu0 0.0
    %1086 = vmatprep.subr.mxu0 0.0
    %1087 = vmatpush1.msra.mxu0 0.0
    %1088 = vmatprep.subr.mxu0 0.0
    %1089 = vmatpush1.msra.mxu0 0.0
    %1090 = vmatprep.subr.mxu0 0.0
    %1091 = vmatpush1.msra.mxu0 0.0
    %1092 = vmatprep.subr.mxu0 0.0
    %1093 = vmatpush1.msra.mxu0 0.0
    %1094 = vmatprep.subr.mxu0 0.0
    %1095 = vmatpush1.msra.mxu0 0.0
    %1096 = vmatprep.subr.mxu0 0.0
    %1097 = vmatpush1.msra.mxu0 0.0
    %1098 = vmatprep.subr.mxu0 0.0
    %1099 = vmatpush1.msra.mxu0 0.0
    %1100 = vmatprep.subr.mxu0 0.0
    %1101 = vmatpush1.msra.mxu0 0.0
    %1102 = vmatprep.subr.mxu0 0.0
    %1103 = vmatpush1.msra.mxu0 0.0
    %1104 = vmatprep.subr.mxu0 0.0
    %1105 = vmatpush1.msra.mxu0 0.0
    %1106 = vmatprep.subr.mxu0 0.0
    %1107 = vmatpush1.msra.mxu0 0.0
    %1108 = vmatprep.subr.mxu0 0.0
    %1109 = vmatpush1.msra.mxu0 0.0
    %1110 = vmatprep.mubr.f32.mxu0 0.0
    %1111 = vmatmul.mubr.f32.gmra.mrb[0].mxu0 %v858
    %v1112 = vpop.f32.mrb[0].mxu0
    %v1113 = vadd.f32 0.0, %v1112
    %v1114 = vpop.f32.mrb[0].mxu0
    %1115 = vmatprep.mubr.f32.mxu0 0.0
    %1116 = vmatmul.mubr.f32.gmra.mrb[0].mxu0 %v861
    %v1117 = vpop.f32.mrb[0].mxu0
    %v1118 = vadd.f32 0.0, %v1117
    %v1119 = vpop.f32.mrb[0].mxu0
    %1120 = vmatprep.mubr.f32.mxu0 0.0
    %1121 = vmatmul.mubr.f32.gmra.mrb[0].mxu0 %v864
    %v1122 = vpop.f32.mrb[0].mxu0
    %v1123 = vadd.f32 0.0, %v1122
    %v1124 = vpop.f32.mrb[0].mxu0
    %1125 = vmatprep.mubr.f32.mxu0 0.0
    %1126 = vmatmul.mubr.f32.gmra.mrb[0].mxu0 %v867
    %v1127 = vpop.f32.mrb[0].mxu0
    %v1128 = vadd.f32 0.0, %v1127
    %v1129 = vpop.f32.mrb[0].mxu0
    %1130 = vmatprep.mubr.f32.mxu0 0.0
    %1131 = vmatmul.mubr.f32.gmra.mrb[0].mxu0 %v870
    %v1132 = vpop.f32.mrb[0].mxu0
    %v1133 = vadd.f32 0.0, %v1132
    %v1134 = vpop.f32.mrb[0].mxu0
    %1135 = vmatprep.mubr.f32.mxu0 0.0
    %1136 = vmatmul.mubr.f32.gmra.mrb[0].mxu0 %v873
    %v1137 = vpop.f32.mrb[0].mxu0
    %v1138 = vadd.f32 0.0, %v1137
    %v1139 = vpop.f32.mrb[0].mxu0
    %1140 = vmatprep.mubr.f32.mxu0 0.0
    %1141 = vmatmul.mubr.f32.gmra.mrb[0].mxu0 %v876
    %v1142 = vpop.f32.mrb[0].mxu0
    %v1143 = vadd.f32 0.0, %v1142
    %v1144 = vpop.f32.mrb[0].mxu0
    %1145 = vmatprep.mubr.f32.mxu0 0.0
    %1146 = vmatmul.mubr.f32.gmra.mrb[0].mxu0 %v879
    %v1147 = vpop.f32.mrb[0].mxu0
    %v1148 = vadd.f32 0.0, %v1147
    %v1149 = vpop.f32.mrb[0].mxu0
    %1150 = vmatprep.mubr.f32.mxu0 0.0
    %1151 = vmatmul.mubr.f32.gmra.mrb[0].mxu0 %v882
    %v1152 = vpop.f32.mrb[0].mxu0
    %v1153 = vadd.f32 0.0, %v1152
    %v1154 = vpop.f32.mrb[0].mxu0
    %1155 = vmatprep.mubr.f32.mxu0 0.0
    %1156 = vmatmul.mubr.f32.gmra.mrb[0].mxu0 %v885
    %v1157 = vpop.f32.mrb[0].mxu0
    %v1158 = vadd.f32 0.0, %v1157
    %v1159 = vpop.f32.mrb[0].mxu0
    %1160 = vmatprep.mubr.f32.mxu0 0.0
    %1161 = vmatmul.mubr.f32.gmra.mrb[0].mxu0 %v888
    %v1162 = vpop.f32.mrb[0].mxu0
    %v1163 = vadd.f32 0.0, %v1162
    %v1164 = vpop.f32.mrb[0].mxu0
    %1165 = vmatprep.mubr.f32.mxu0 0.0
    %1166 = vmatmul.mubr.f32.gmra.mrb[0].mxu0 %v891
    %v1167 = vpop.f32.mrb[0].mxu0
    %v1168 = vadd.f32 0.0, %v1167
    %v1169 = vpop.f32.mrb[0].mxu0
    %1170 = vmatprep.mubr.f32.mxu0 0.0
    %1171 = vmatmul.mubr.f32.gmra.mrb[0].mxu0 %v894
    %v1172 = vpop.f32.mrb[0].mxu0
    %v1173 = vadd.f32 0.0, %v1172
    %v1174 = vpop.f32.mrb[0].mxu0
    %1175 = vmatprep.mubr.f32.mxu0 0.0
    %1176 = vmatmul.mubr.f32.gmra.mrb[0].mxu0 %v897
    %v1177 = vpop.f32.mrb[0].mxu0
    %v1178 = vadd.f32 0.0, %v1177
    %v1179 = vpop.f32.mrb[0].mxu0
    %1180 = vmatprep.mubr.f32.mxu0 0.0
    %1181 = vmatmul.mubr.f32.gmra.mrb[0].mxu0 %v900
    %v1182 = vpop.f32.mrb[0].mxu0
    %v1183 = vadd.f32 0.0, %v1182
    %v1184 = vpop.f32.mrb[0].mxu0
    %1185 = vmatprep.mubr.f32.mxu0 0.0
    %1186 = vmatmul.mubr.f32.gmra.mrb[0].mxu0 %v903
    %v1187 = vpop.f32.mrb[0].mxu0
    %v1188 = vadd.f32 0.0, %v1187
    %v1189 = vpop.f32.mrb[0].mxu0
    %1190 = vmatprep.mubr.f32.mxu0 0.0
    %1191 = vmatmul.mubr.f32.gmra.mrb[0].mxu0 %v906
    %v1192 = vpop.f32.mrb[0].mxu0
    %v1193 = vadd.f32 0.0, %v1192
    %v1194 = vpop.f32.mrb[0].mxu0
    %1195 = vmatprep.mubr.f32.mxu0 0.0
    %1196 = vmatmul.mubr.f32.gmra.mrb[0].mxu0 %v909
    %v1197 = vpop.f32.mrb[0].mxu0
    %v1198 = vadd.f32 0.0, %v1197
    %v1199 = vpop.f32.mrb[0].mxu0
    %1200 = vmatprep.mubr.f32.mxu0 0.0
    %1201 = vmatmul.mubr.f32.gmra.mrb[0].mxu0 %v912
    %v1202 = vpop.f32.mrb[0].mxu0
    %v1203 = vadd.f32 0.0, %v1202
    %v1204 = vpop.f32.mrb[0].mxu0
    %1205 = vmatprep.mubr.f32.mxu0 0.0
    %1206 = vmatmul.mubr.f32.gmra.mrb[0].mxu0 %v915
    %v1207 = vpop.f32.mrb[0].mxu0
    %v1208 = vadd.f32 0.0, %v1207
    %v1209 = vpop.f32.mrb[0].mxu0
    %1210 = vmatprep.mubr.f32.mxu0 0.0
    %1211 = vmatmul.mubr.f32.gmra.mrb[0].mxu0 %v918
    %v1212 = vpop.f32.mrb[0].mxu0
    %v1213 = vadd.f32 0.0, %v1212
    %v1214 = vpop.f32.mrb[0].mxu0
    %1215 = vmatprep.mubr.f32.mxu0 0.0
    %1216 = vmatmul.mubr.f32.gmra.mrb[0].mxu0 %v921
    %v1217 = vpop.f32.mrb[0].mxu0
    %v1218 = vadd.f32 0.0, %v1217
    %v1219 = vpop.f32.mrb[0].mxu0
    %1220 = vmatprep.mubr.f32.mxu0 0.0
    %1221 = vmatmul.mubr.f32.gmra.mrb[0].mxu0 %v924
    %v1222 = vpop.f32.mrb[0].mxu0
    %v1223 = vadd.f32 0.0, %v1222
    %v1224 = vpop.f32.mrb[0].mxu0
    %1225 = vmatprep.mubr.f32.mxu0 0.0
    %1226 = vmatmul.mubr.f32.gmra.mrb[0].mxu0 %v927
    %v1227 = vpop.f32.mrb[0].mxu0
    %v1228 = vadd.f32 0.0, %v1227
    %v1229 = vpop.f32.mrb[0].mxu0
    %1230 = vmatprep.mubr.f32.mxu0 0.0
    %1231 = vmatmul.mubr.f32.gmra.mrb[0].mxu0 %v930
    %v1232 = vpop.f32.mrb[0].mxu0
    %v1233 = vadd.f32 0.0, %v1232
    %v1234 = vpop.f32.mrb[0].mxu0
    %1235 = vmatprep.mubr.f32.mxu0 0.0
    %1236 = vmatmul.mubr.f32.gmra.mrb[0].mxu0 %v933
    %v1237 = vpop.f32.mrb[0].mxu0
    %v1238 = vadd.f32 0.0, %v1237
    %v1239 = vpop.f32.mrb[0].mxu0
    %1240 = vmatprep.mubr.f32.mxu0 0.0
    %1241 = vmatmul.mubr.f32.gmra.mrb[0].mxu0 %v936
    %v1242 = vpop.f32.mrb[0].mxu0
    %v1243 = vadd.f32 0.0, %v1242
    %v1244 = vpop.f32.mrb[0].mxu0
    %1245 = vmatprep.mubr.f32.mxu0 0.0
    %1246 = vmatmul.mubr.f32.gmra.mrb[0].mxu0 %v939
    %v1247 = vpop.f32.mrb[0].mxu0
    %v1248 = vadd.f32 0.0, %v1247
    %v1249 = vpop.f32.mrb[0].mxu0
    %1250 = vmatprep.mubr.f32.mxu0 0.0
    %1251 = vmatmul.mubr.f32.gmra.mrb[0].mxu0 %v942
    %v1252 = vpop.f32.mrb[0].mxu0
    %v1253 = vadd.f32 0.0, %v1252
    %v1254 = vpop.f32.mrb[0].mxu0
    %1255 = vmatprep.mubr.f32.mxu0 0.0
    %1256 = vmatmul.mubr.f32.gmra.mrb[0].mxu0 %v945
    %v1257 = vpop.f32.mrb[0].mxu0
    %v1258 = vadd.f32 0.0, %v1257
    %v1259 = vpop.f32.mrb[0].mxu0
    %1260 = vmatprep.mubr.f32.mxu0 0.0
    %1261 = vmatmul.mubr.f32.gmra.mrb[0].mxu0 %v948
    %v1262 = vpop.f32.mrb[0].mxu0
    %v1263 = vadd.f32 0.0, %v1262
    %v1264 = vpop.f32.mrb[0].mxu0
    %1265 = vmatprep.mubr.f32.mxu0 0.0
    %1266 = vmatmul.mubr.f32.gmra.mrb[0].mxu0 %v951
    %v1267 = vpop.f32.mrb[0].mxu0
    %v1268 = vadd.f32 0.0, %v1267
    %v1269 = vpop.f32.mrb[0].mxu0
    %1270 = vmatprep.mubr.f32.mxu0 0.0
    %1271 = vmatmul.mubr.f32.gmra.mrb[0].mxu0 %v954
    %v1272 = vpop.f32.mrb[0].mxu0
    %v1273 = vadd.f32 0.0, %v1272
    %v1274 = vpop.f32.mrb[0].mxu0
    %1275 = vmatprep.mubr.f32.mxu0 0.0
    %1276 = vmatmul.mubr.f32.gmra.mrb[0].mxu0 %v957
    %v1277 = vpop.f32.mrb[0].mxu0
    %v1278 = vadd.f32 0.0, %v1277
    %v1279 = vpop.f32.mrb[0].mxu0
    %1280 = vmatprep.mubr.f32.mxu0 0.0
    %1281 = vmatmul.mubr.f32.gmra.mrb[0].mxu0 %v960
    %v1282 = vpop.f32.mrb[0].mxu0
    %v1283 = vadd.f32 0.0, %v1282
    %v1284 = vpop.f32.mrb[0].mxu0
    %1285 = vmatprep.mubr.f32.mxu0 0.0
    %1286 = vmatmul.mubr.f32.gmra.mrb[0].mxu0 %v963
    %v1287 = vpop.f32.mrb[0].mxu0
    %v1288 = vadd.f32 0.0, %v1287
    %v1289 = vpop.f32.mrb[0].mxu0
    %1290 = vmatprep.mubr.f32.mxu0 0.0
    %1291 = vmatmul.mubr.f32.gmra.mrb[0].mxu0 %v966
    %v1292 = vpop.f32.mrb[0].mxu0
    %v1293 = vadd.f32 0.0, %v1292
    %v1294 = vpop.f32.mrb[0].mxu0
    %1295 = vmatprep.mubr.f32.mxu0 0.0
    %1296 = vmatmul.mubr.f32.gmra.mrb[0].mxu0 %v969
    %v1297 = vpop.f32.mrb[0].mxu0
    %v1298 = vadd.f32 0.0, %v1297
    %v1299 = vpop.f32.mrb[0].mxu0
    %1300 = vmatprep.mubr.f32.mxu0 0.0
    %1301 = vmatmul.mubr.f32.gmra.mrb[0].mxu0 %v972
    %v1302 = vpop.f32.mrb[0].mxu0
    %v1303 = vadd.f32 0.0, %v1302
    %v1304 = vpop.f32.mrb[0].mxu0
    %1305 = vmatprep.mubr.f32.mxu0 0.0
    %1306 = vmatmul.mubr.f32.gmra.mrb[0].mxu0 %v975
    %v1307 = vpop.f32.mrb[0].mxu0
    %v1308 = vadd.f32 0.0, %v1307
    %v1309 = vpop.f32.mrb[0].mxu0
    %1310 = vmatprep.mubr.f32.mxu0 0.0
    %1311 = vmatmul.mubr.f32.gmra.mrb[0].mxu0 %v978
    %v1312 = vpop.f32.mrb[0].mxu0
    %v1313 = vadd.f32 0.0, %v1312
    %v1314 = vpop.f32.mrb[0].mxu0
    %1315 = vmatprep.mubr.f32.mxu0 0.0
    %1316 = vmatmul.mubr.f32.gmra.mrb[0].mxu0 %v981
    %v1317 = vpop.f32.mrb[0].mxu0
    %v1318 = vadd.f32 0.0, %v1317
    %v1319 = vpop.f32.mrb[0].mxu0
    %1320 = vmatprep.mubr.f32.mxu0 0.0
    %1321 = vmatmul.mubr.f32.gmra.mrb[0].mxu0 %v984
    %v1322 = vpop.f32.mrb[0].mxu0
    %v1323 = vadd.f32 0.0, %v1322
    %v1324 = vpop.f32.mrb[0].mxu0
    %1325 = vmatprep.mubr.f32.mxu0 0.0
    %1326 = vmatmul.mubr.f32.gmra.mrb[0].mxu0 %v987
    %v1327 = vpop.f32.mrb[0].mxu0
    %v1328 = vadd.f32 0.0, %v1327
    %v1329 = vpop.f32.mrb[0].mxu0
    %1330 = vmatprep.mubr.f32.mxu0 0.0
    %1331 = vmatmul.mubr.f32.gmra.mrb[0].mxu0 %v990
    %v1332 = vpop.f32.mrb[0].mxu0
    %v1333 = vadd.f32 0.0, %v1332
    %v1334 = vpop.f32.mrb[0].mxu0
    %1335 = vmatprep.mubr.f32.mxu0 0.0
    %1336 = vmatmul.mubr.f32.gmra.mrb[0].mxu0 %v993
    %v1337 = vpop.f32.mrb[0].mxu0
    %v1338 = vadd.f32 0.0, %v1337
    %v1339 = vpop.f32.mrb[0].mxu0
    %1340 = vmatprep.mubr.f32.mxu0 0.0
    %1341 = vmatmul.mubr.f32.gmra.mrb[0].mxu0 %v996
    %v1342 = vpop.f32.mrb[0].mxu0
    %v1343 = vadd.f32 0.0, %v1342
    %v1344 = vpop.f32.mrb[0].mxu0
    %1345 = vmatprep.mubr.f32.mxu0 0.0
    %1346 = vmatmul.mubr.f32.gmra.mrb[0].mxu0 %v999
    %v1347 = vpop.f32.mrb[0].mxu0
    %v1348 = vadd.f32 0.0, %v1347
    %v1349 = vpop.f32.mrb[0].mxu0
    %1350 = vmatprep.mubr.f32.mxu0 0.0
    %1351 = vmatmul.mubr.f32.gmra.mrb[0].mxu0 %v1002
    %v1352 = vpop.f32.mrb[0].mxu0
    %v1353 = vadd.f32 0.0, %v1352
    %v1354 = vpop.f32.mrb[0].mxu0
    %1355 = vmatprep.mubr.f32.mxu0 0.0
    %1356 = vmatmul.mubr.f32.gmra.mrb[0].mxu0 %v1005
    %v1357 = vpop.f32.mrb[0].mxu0
    %v1358 = vadd.f32 0.0, %v1357
    %v1359 = vpop.f32.mrb[0].mxu0
    %1360 = vmatprep.mubr.f32.mxu0 0.0
    %1361 = vmatmul.mubr.f32.gmra.mrb[0].mxu0 %v1008
    %v1362 = vpop.f32.mrb[0].mxu0
    %v1363 = vadd.f32 0.0, %v1362
    %v1364 = vpop.f32.mrb[0].mxu0
    %1365 = vmatprep.mubr.f32.mxu0 0.0
    %1366 = vmatmul.mubr.f32.gmra.mrb[0].mxu0 %v1011
    %v1367 = vpop.f32.mrb[0].mxu0
    %v1368 = vadd.f32 0.0, %v1367
    %v1369 = vpop.f32.mrb[0].mxu0
    %1370 = vmatprep.mubr.f32.mxu0 0.0
    %1371 = vmatmul.mubr.f32.gmra.mrb[0].mxu0 %v1014
    %v1372 = vpop.f32.mrb[0].mxu0
    %v1373 = vadd.f32 0.0, %v1372
    %v1374 = vpop.f32.mrb[0].mxu0
    %1375 = vmatprep.mubr.f32.mxu0 0.0
    %1376 = vmatmul.mubr.f32.gmra.mrb[0].mxu0 %v1017
    %v1377 = vpop.f32.mrb[0].mxu0
    %v1378 = vadd.f32 0.0, %v1377
    %v1379 = vpop.f32.mrb[0].mxu0
    %1380 = vmatprep.mubr.f32.mxu0 0.0
    %1381 = vmatmul.mubr.f32.gmra.mrb[0].mxu0 %v1020
    %v1382 = vpop.f32.mrb[0].mxu0
    %v1383 = vadd.f32 0.0, %v1382
    %v1384 = vpop.f32.mrb[0].mxu0
    %1385 = vmatprep.mubr.f32.mxu0 0.0
    %1386 = vmatmul.mubr.f32.gmra.mrb[0].mxu0 %v1023
    %v1387 = vpop.f32.mrb[0].mxu0
    %v1388 = vadd.f32 0.0, %v1387
    %v1389 = vpop.f32.mrb[0].mxu0
    %1390 = vmatprep.mubr.f32.mxu0 0.0
    %1391 = vmatmul.mubr.f32.gmra.mrb[0].mxu0 %v1026
    %v1392 = vpop.f32.mrb[0].mxu0
    %v1393 = vadd.f32 0.0, %v1392
    %v1394 = vpop.f32.mrb[0].mxu0
    %1395 = vmatprep.mubr.f32.mxu0 0.0
    %1396 = vmatmul.mubr.f32.gmra.mrb[0].mxu0 %v1029
    %v1397 = vpop.f32.mrb[0].mxu0
    %v1398 = vadd.f32 0.0, %v1397
    %v1399 = vpop.f32.mrb[0].mxu0
    %1400 = vmatprep.mubr.f32.mxu0 0.0
    %1401 = vmatmul.mubr.f32.gmra.mrb[0].mxu0 %v1032
    %v1402 = vpop.f32.mrb[0].mxu0
    %v1403 = vadd.f32 0.0, %v1402
    %v1404 = vpop.f32.mrb[0].mxu0
    %1405 = vmatprep.mubr.f32.mxu0 0.0
    %1406 = vmatmul.mubr.f32.gmra.mrb[0].mxu0 %v1035
    %v1407 = vpop.f32.mrb[0].mxu0
    %v1408 = vadd.f32 0.0, %v1407
    %v1409 = vpop.f32.mrb[0].mxu0
    %1410 = vmatprep.mubr.f32.mxu0 0.0
    %1411 = vmatmul.mubr.f32.gmra.mrb[0].mxu0 %v1038
    %v1412 = vpop.f32.mrb[0].mxu0
    %v1413 = vadd.f32 0.0, %v1412
    %v1414 = vpop.f32.mrb[0].mxu0
    %1415 = vmatprep.mubr.f32.mxu0 0.0
    %1416 = vmatmul.mubr.f32.gmra.mrb[0].mxu0 %v1041
    %v1417 = vpop.f32.mrb[0].mxu0
    %v1418 = vadd.f32 0.0, %v1417
    %v1419 = vpop.f32.mrb[0].mxu0
    %1420 = vmatprep.mubr.f32.mxu0 0.0
    %1421 = vmatmul.mubr.f32.gmra.mrb[0].mxu0 %v1044
    %v1422 = vpop.f32.mrb[0].mxu0
    %v1423 = vadd.f32 0.0, %v1422
    %v1424 = vpop.f32.mrb[0].mxu0
    %1425 = vdwg.mxu0
    %1426 = vrot.lane.b32.xlu0 %v88, 112
    %v1427 = vpop.permute.xlu0 %1426
    %v1429 = vadd.f32 %v1113, %v1427
    %v1430 = vadd.f32 %v1118, %v1427
    %v1431 = vadd.f32 %v1123, %v1427
    %v1432 = vadd.f32 %v1128, %v1427
    %v1433 = vadd.f32 %v1133, %v1427
    %v1434 = vadd.f32 %v1138, %v1427
    %v1435 = vadd.f32 %v1143, %v1427
    %v1436 = vadd.f32 %v1148, %v1427
    %v1437 = vadd.f32 %v1153, %v1427
    %v1438 = vadd.f32 %v1158, %v1427
    %v1439 = vadd.f32 %v1163, %v1427
    %v1440 = vadd.f32 %v1168, %v1427
    %v1441 = vadd.f32 %v1173, %v1427
    %v1442 = vadd.f32 %v1178, %v1427
    %v1443 = vadd.f32 %v1183, %v1427
    %v1444 = vadd.f32 %v1188, %v1427
    %v1445 = vadd.f32 %v1193, %v1427
    %v1446 = vadd.f32 %v1198, %v1427
    %v1447 = vadd.f32 %v1203, %v1427
    %v1448 = vadd.f32 %v1208, %v1427
    %v1449 = vadd.f32 %v1213, %v1427
    %v1450 = vadd.f32 %v1218, %v1427
    %v1451 = vadd.f32 %v1223, %v1427
    %v1452 = vadd.f32 %v1228, %v1427
    %v1453 = vadd.f32 %v1233, %v1427
    %v1454 = vadd.f32 %v1238, %v1427
    %v1455 = vadd.f32 %v1243, %v1427
    %v1456 = vadd.f32 %v1248, %v1427
    %v1457 = vadd.f32 %v1253, %v1427
    %v1458 = vadd.f32 %v1258, %v1427
    %v1459 = vadd.f32 %v1263, %v1427
    %v1460 = vadd.f32 %v1268, %v1427
    %v1461 = vadd.f32 %v1273, %v1427
    %v1462 = vadd.f32 %v1278, %v1427
    %v1463 = vadd.f32 %v1283, %v1427
    %v1464 = vadd.f32 %v1288, %v1427
    %v1465 = vadd.f32 %v1293, %v1427
    %v1466 = vadd.f32 %v1298, %v1427
    %v1467 = vadd.f32 %v1303, %v1427
    %v1468 = vadd.f32 %v1308, %v1427
    %v1469 = vadd.f32 %v1313, %v1427
    %v1470 = vadd.f32 %v1318, %v1427
    %v1471 = vadd.f32 %v1323, %v1427
    %v1472 = vadd.f32 %v1328, %v1427
    %v1473 = vadd.f32 %v1333, %v1427
    %v1474 = vadd.f32 %v1338, %v1427
    %v1475 = vadd.f32 %v1343, %v1427
    %v1476 = vadd.f32 %v1348, %v1427
    %v1477 = vadd.f32 %v1353, %v1427
    %v1478 = vadd.f32 %v1358, %v1427
    %v1479 = vadd.f32 %v1363, %v1427
    %v1480 = vadd.f32 %v1368, %v1427
    %v1481 = vadd.f32 %v1373, %v1427
    %v1482 = vadd.f32 %v1378, %v1427
    %v1483 = vadd.f32 %v1383, %v1427
    %v1484 = vadd.f32 %v1388, %v1427
    %v1485 = vadd.f32 %v1393, %v1427
    %v1486 = vadd.f32 %v1398, %v1427
    %v1487 = vadd.f32 %v1403, %v1427
    %v1488 = vadd.f32 %v1408, %v1427
    %v1489 = vadd.f32 %v1413, %v1427
    %v1490 = vadd.f32 %v1418, %v1427
    %v1491 = vadd.f32 %v1423, %v1427
    %vm1492 = vcmp.gt.f32.partialorder %v1429, 0.0
    %vm1493 = vcmp.gt.f32.partialorder %v1430, 0.0
    %vm1494 = vcmp.gt.f32.partialorder %v1431, 0.0
    %vm1495 = vcmp.gt.f32.partialorder %v1432, 0.0
    %vm1496 = vcmp.gt.f32.partialorder %v1433, 0.0
    %vm1497 = vcmp.gt.f32.partialorder %v1434, 0.0
    %vm1498 = vcmp.gt.f32.partialorder %v1435, 0.0
    %vm1499 = vcmp.gt.f32.partialorder %v1436, 0.0
    %vm1500 = vcmp.gt.f32.partialorder %v1437, 0.0
    %vm1501 = vcmp.gt.f32.partialorder %v1438, 0.0
    %vm1502 = vcmp.gt.f32.partialorder %v1439, 0.0
    %vm1503 = vcmp.gt.f32.partialorder %v1440, 0.0
    %vm1504 = vcmp.gt.f32.partialorder %v1441, 0.0
    %vm1505 = vcmp.gt.f32.partialorder %v1442, 0.0
    %vm1506 = vcmp.gt.f32.partialorder %v1443, 0.0
    %vm1507 = vcmp.gt.f32.partialorder %v1444, 0.0
    %vm1508 = vcmp.gt.f32.partialorder %v1445, 0.0
    %vm1509 = vcmp.gt.f32.partialorder %v1446, 0.0
    %vm1510 = vcmp.gt.f32.partialorder %v1447, 0.0
    %vm1511 = vcmp.gt.f32.partialorder %v1448, 0.0
    %vm1512 = vcmp.gt.f32.partialorder %v1449, 0.0
    %vm1513 = vcmp.gt.f32.partialorder %v1450, 0.0
    %vm1514 = vcmp.gt.f32.partialorder %v1451, 0.0
    %vm1515 = vcmp.gt.f32.partialorder %v1452, 0.0
    %vm1516 = vcmp.gt.f32.partialorder %v1453, 0.0
    %vm1517 = vcmp.gt.f32.partialorder %v1454, 0.0
    %vm1518 = vcmp.gt.f32.partialorder %v1455, 0.0
    %vm1519 = vcmp.gt.f32.partialorder %v1456, 0.0
    %vm1520 = vcmp.gt.f32.partialorder %v1457, 0.0
    %vm1521 = vcmp.gt.f32.partialorder %v1458, 0.0
    %vm1522 = vcmp.gt.f32.partialorder %v1459, 0.0
    %vm1523 = vcmp.gt.f32.partialorder %v1460, 0.0
    %vm1524 = vcmp.gt.f32.partialorder %v1461, 0.0
    %vm1525 = vcmp.gt.f32.partialorder %v1462, 0.0
    %vm1526 = vcmp.gt.f32.partialorder %v1463, 0.0
    %vm1527 = vcmp.gt.f32.partialorder %v1464, 0.0
    %vm1528 = vcmp.gt.f32.partialorder %v1465, 0.0
    %vm1529 = vcmp.gt.f32.partialorder %v1466, 0.0
    %vm1530 = vcmp.gt.f32.partialorder %v1467, 0.0
    %vm1531 = vcmp.gt.f32.partialorder %v1468, 0.0
    %vm1532 = vcmp.gt.f32.partialorder %v1469, 0.0
    %vm1533 = vcmp.gt.f32.partialorder %v1470, 0.0
    %vm1534 = vcmp.gt.f32.partialorder %v1471, 0.0
    %vm1535 = vcmp.gt.f32.partialorder %v1472, 0.0
    %vm1536 = vcmp.gt.f32.partialorder %v1473, 0.0
    %vm1537 = vcmp.gt.f32.partialorder %v1474, 0.0
    %vm1538 = vcmp.gt.f32.partialorder %v1475, 0.0
    %vm1539 = vcmp.gt.f32.partialorder %v1476, 0.0
    %vm1540 = vcmp.gt.f32.partialorder %v1477, 0.0
    %vm1541 = vcmp.gt.f32.partialorder %v1478, 0.0
    %vm1542 = vcmp.gt.f32.partialorder %v1479, 0.0
    %vm1543 = vcmp.gt.f32.partialorder %v1480, 0.0
    %vm1544 = vcmp.gt.f32.partialorder %v1481, 0.0
    %vm1545 = vcmp.gt.f32.partialorder %v1482, 0.0
    %vm1546 = vcmp.gt.f32.partialorder %v1483, 0.0
    %vm1547 = vcmp.gt.f32.partialorder %v1484, 0.0
    %vm1548 = vcmp.gt.f32.partialorder %v1485, 0.0
    %vm1549 = vcmp.gt.f32.partialorder %v1486, 0.0
    %vm1550 = vcmp.gt.f32.partialorder %v1487, 0.0
    %vm1551 = vcmp.gt.f32.partialorder %v1488, 0.0
    %vm1552 = vcmp.gt.f32.partialorder %v1489, 0.0
    %vm1553 = vcmp.gt.f32.partialorder %v1490, 0.0
    %vm1554 = vcmp.gt.f32.partialorder %v1491, 0.0
    %v1555 = vmul.f32 %v1429, 0.01
    %v1556 = vmul.f32 %v1430, 0.01
    %v1557 = vmul.f32 %v1431, 0.01
    %v1558 = vmul.f32 %v1432, 0.01
    %v1559 = vmul.f32 %v1433, 0.01
    %v1560 = vmul.f32 %v1434, 0.01
    %v1561 = vmul.f32 %v1435, 0.01
    %v1562 = vmul.f32 %v1436, 0.01
    %v1563 = vmul.f32 %v1437, 0.01
    %v1564 = vmul.f32 %v1438, 0.01
    %v1565 = vmul.f32 %v1439, 0.01
    %v1566 = vmul.f32 %v1440, 0.01
    %v1567 = vmul.f32 %v1441, 0.01
    %v1568 = vmul.f32 %v1442, 0.01
    %v1569 = vmul.f32 %v1443, 0.01
    %v1570 = vmul.f32 %v1444, 0.01
    %v1571 = vmul.f32 %v1445, 0.01
    %v1572 = vmul.f32 %v1446, 0.01
    %v1573 = vmul.f32 %v1447, 0.01
    %v1574 = vmul.f32 %v1448, 0.01
    %v1575 = vmul.f32 %v1449, 0.01
    %v1576 = vmul.f32 %v1450, 0.01
    %v1577 = vmul.f32 %v1451, 0.01
    %v1578 = vmul.f32 %v1452, 0.01
    %v1579 = vmul.f32 %v1453, 0.01
    %v1580 = vmul.f32 %v1454, 0.01
    %v1581 = vmul.f32 %v1455, 0.01
    %v1582 = vmul.f32 %v1456, 0.01
    %v1583 = vmul.f32 %v1457, 0.01
    %v1584 = vmul.f32 %v1458, 0.01
    %v1585 = vmul.f32 %v1459, 0.01
    %v1586 = vmul.f32 %v1460, 0.01
    %v1587 = vmul.f32 %v1461, 0.01
    %v1588 = vmul.f32 %v1462, 0.01
    %v1589 = vmul.f32 %v1463, 0.01
    %v1590 = vmul.f32 %v1464, 0.01
    %v1591 = vmul.f32 %v1465, 0.01
    %v1592 = vmul.f32 %v1466, 0.01
    %v1593 = vmul.f32 %v1467, 0.01
    %v1594 = vmul.f32 %v1468, 0.01
    %v1595 = vmul.f32 %v1469, 0.01
    %v1596 = vmul.f32 %v1470, 0.01
    %v1597 = vmul.f32 %v1471, 0.01
    %v1598 = vmul.f32 %v1472, 0.01
    %v1599 = vmul.f32 %v1473, 0.01
    %v1600 = vmul.f32 %v1474, 0.01
    %v1601 = vmul.f32 %v1475, 0.01
    %v1602 = vmul.f32 %v1476, 0.01
    %v1603 = vmul.f32 %v1477, 0.01
    %v1604 = vmul.f32 %v1478, 0.01
    %v1605 = vmul.f32 %v1479, 0.01
    %v1606 = vmul.f32 %v1480, 0.01
    %v1607 = vmul.f32 %v1481, 0.01
    %v1608 = vmul.f32 %v1482, 0.01
    %v1609 = vmul.f32 %v1483, 0.01
    %v1610 = vmul.f32 %v1484, 0.01
    %v1611 = vmul.f32 %v1485, 0.01
    %v1612 = vmul.f32 %v1486, 0.01
    %v1613 = vmul.f32 %v1487, 0.01
    %v1614 = vmul.f32 %v1488, 0.01
    %v1615 = vmul.f32 %v1489, 0.01
    %v1616 = vmul.f32 %v1490, 0.01
    %v1617 = vmul.f32 %v1491, 0.01
    %v1618 = vsel %vm1492, %v1429, %v1555
    %v1619 = vsel %vm1493, %v1430, %v1556
    %v1620 = vsel %vm1494, %v1431, %v1557
    %v1621 = vsel %vm1495, %v1432, %v1558
    %v1622 = vsel %vm1496, %v1433, %v1559
    %v1623 = vsel %vm1497, %v1434, %v1560
    %v1624 = vsel %vm1498, %v1435, %v1561
    %v1625 = vsel %vm1499, %v1436, %v1562
    %v1626 = vsel %vm1500, %v1437, %v1563
    %v1627 = vsel %vm1501, %v1438, %v1564
    %v1628 = vsel %vm1502, %v1439, %v1565
    %v1629 = vsel %vm1503, %v1440, %v1566
    %v1630 = vsel %vm1504, %v1441, %v1567
    %v1631 = vsel %vm1505, %v1442, %v1568
    %v1632 = vsel %vm1506, %v1443, %v1569
    %v1633 = vsel %vm1507, %v1444, %v1570
    %v1634 = vsel %vm1508, %v1445, %v1571
    %v1635 = vsel %vm1509, %v1446, %v1572
    %v1636 = vsel %vm1510, %v1447, %v1573
    %v1637 = vsel %vm1511, %v1448, %v1574
    %v1638 = vsel %vm1512, %v1449, %v1575
    %v1639 = vsel %vm1513, %v1450, %v1576
    %v1640 = vsel %vm1514, %v1451, %v1577
    %v1641 = vsel %vm1515, %v1452, %v1578
    %v1642 = vsel %vm1516, %v1453, %v1579
    %v1643 = vsel %vm1517, %v1454, %v1580
    %v1644 = vsel %vm1518, %v1455, %v1581
    %v1645 = vsel %vm1519, %v1456, %v1582
    %v1646 = vsel %vm1520, %v1457, %v1583
    %v1647 = vsel %vm1521, %v1458, %v1584
    %v1648 = vsel %vm1522, %v1459, %v1585
    %v1649 = vsel %vm1523, %v1460, %v1586
    %v1650 = vsel %vm1524, %v1461, %v1587
    %v1651 = vsel %vm1525, %v1462, %v1588
    %v1652 = vsel %vm1526, %v1463, %v1589
    %v1653 = vsel %vm1527, %v1464, %v1590
    %v1654 = vsel %vm1528, %v1465, %v1591
    %v1655 = vsel %vm1529, %v1466, %v1592
    %v1656 = vsel %vm1530, %v1467, %v1593
    %v1657 = vsel %vm1531, %v1468, %v1594
    %v1658 = vsel %vm1532, %v1469, %v1595
    %v1659 = vsel %vm1533, %v1470, %v1596
    %v1660 = vsel %vm1534, %v1471, %v1597
    %v1661 = vsel %vm1535, %v1472, %v1598
    %v1662 = vsel %vm1536, %v1473, %v1599
    %v1663 = vsel %vm1537, %v1474, %v1600
    %v1664 = vsel %vm1538, %v1475, %v1601
    %v1665 = vsel %vm1539, %v1476, %v1602
    %v1666 = vsel %vm1540, %v1477, %v1603
    %v1667 = vsel %vm1541, %v1478, %v1604
    %v1668 = vsel %vm1542, %v1479, %v1605
    %v1669 = vsel %vm1543, %v1480, %v1606
    %v1670 = vsel %vm1544, %v1481, %v1607
    %v1671 = vsel %vm1545, %v1482, %v1608
    %v1672 = vsel %vm1546, %v1483, %v1609
    %v1673 = vsel %vm1547, %v1484, %v1610
    %v1674 = vsel %vm1548, %v1485, %v1611
    %v1675 = vsel %vm1549, %v1486, %v1612
    %v1676 = vsel %vm1550, %v1487, %v1613
    %v1677 = vsel %vm1551, %v1488, %v1614
    %v1678 = vsel %vm1552, %v1489, %v1615
    %v1679 = vsel %vm1553, %v1490, %v1616
    %v1680 = vsel %vm1554, %v1491, %v1617
    %1681 = vrot.lane.b32.xlu0 %v82, 80
    %v1682 = vpop.permute.xlu0 %1681
    %1683 = vrot.lane.b32.xlu0 %v83, 80
    %v1684 = vpop.permute.xlu0 %1683
    %1750 = vrot.lane.b32.xlu0 %v1113, 112
    %v1751 = vpop.permute.xlu0 %1750
    %1752 = vrot.lane.b32.xlu0 %v1118, 112
    %v1753 = vpop.permute.xlu0 %1752
    %1754 = vrot.lane.b32.xlu0 %v1123, 112
    %v1755 = vpop.permute.xlu0 %1754
    %1756 = vrot.lane.b32.xlu0 %v1128, 112
    %v1757 = vpop.permute.xlu0 %1756
    %1758 = vrot.lane.b32.xlu0 %v1133, 112
    %v1759 = vpop.permute.xlu0 %1758
    %1760 = vrot.lane.b32.xlu0 %v1138, 112
    %v1761 = vpop.permute.xlu0 %1760
    %1762 = vrot.lane.b32.xlu0 %v1143, 112
    %v1763 = vpop.permute.xlu0 %1762
    %1764 = vrot.lane.b32.xlu0 %v1148, 112
    %v1765 = vpop.permute.xlu0 %1764
    %1766 = vrot.lane.b32.xlu0 %v1153, 112
    %v1767 = vpop.permute.xlu0 %1766
    %1768 = vrot.lane.b32.xlu0 %v1158, 112
    %v1769 = vpop.permute.xlu0 %1768
    %1770 = vrot.lane.b32.xlu0 %v1163, 112
    %v1771 = vpop.permute.xlu0 %1770
    %1772 = vrot.lane.b32.xlu0 %v1168, 112
    %v1773 = vpop.permute.xlu0 %1772
    %1774 = vrot.lane.b32.xlu0 %v1173, 112
    %v1775 = vpop.permute.xlu0 %1774
    %1776 = vrot.lane.b32.xlu0 %v1178, 112
    %v1777 = vpop.permute.xlu0 %1776
    %1778 = vrot.lane.b32.xlu0 %v1183, 112
    %v1779 = vpop.permute.xlu0 %1778
    %1780 = vrot.lane.b32.xlu0 %v1188, 112
    %v1781 = vpop.permute.xlu0 %1780
    %1782 = vrot.lane.b32.xlu0 %v1193, 112
    %v1783 = vpop.permute.xlu0 %1782
    %1784 = vrot.lane.b32.xlu0 %v1198, 112
    %v1785 = vpop.permute.xlu0 %1784
    %1786 = vrot.lane.b32.xlu0 %v1203, 112
    %v1787 = vpop.permute.xlu0 %1786
    %1788 = vrot.lane.b32.xlu0 %v1208, 112
    %v1789 = vpop.permute.xlu0 %1788
    %1790 = vrot.lane.b32.xlu0 %v1213, 112
    %v1791 = vpop.permute.xlu0 %1790
    %1792 = vrot.lane.b32.xlu0 %v1218, 112
    %v1793 = vpop.permute.xlu0 %1792
    %1794 = vrot.lane.b32.xlu0 %v1223, 112
    %v1795 = vpop.permute.xlu0 %1794
    %1796 = vrot.lane.b32.xlu0 %v1228, 112
    %v1797 = vpop.permute.xlu0 %1796
    %1798 = vrot.lane.b32.xlu0 %v1233, 112
    %v1799 = vpop.permute.xlu0 %1798
    %1800 = vrot.lane.b32.xlu0 %v1238, 112
    %v1801 = vpop.permute.xlu0 %1800
    %1802 = vrot.lane.b32.xlu0 %v1243, 112
    %v1803 = vpop.permute.xlu0 %1802
    %1804 = vrot.lane.b32.xlu0 %v1248, 112
    %v1805 = vpop.permute.xlu0 %1804
    %1806 = vrot.lane.b32.xlu0 %v1253, 112
    %v1807 = vpop.permute.xlu0 %1806
    %1808 = vrot.lane.b32.xlu0 %v1258, 112
    %v1809 = vpop.permute.xlu0 %1808
    %1810 = vrot.lane.b32.xlu0 %v1263, 112
    %v1811 = vpop.permute.xlu0 %1810
    %1812 = vrot.lane.b32.xlu0 %v1268, 112
    %v1813 = vpop.permute.xlu0 %1812
    %1814 = vrot.lane.b32.xlu0 %v1273, 112
    %v1815 = vpop.permute.xlu0 %1814
    %1816 = vrot.lane.b32.xlu0 %v1278, 112
    %v1817 = vpop.permute.xlu0 %1816
    %1818 = vrot.lane.b32.xlu0 %v1283, 112
    %v1819 = vpop.permute.xlu0 %1818
    %1820 = vrot.lane.b32.xlu0 %v1288, 112
    %v1821 = vpop.permute.xlu0 %1820
    %1822 = vrot.lane.b32.xlu0 %v1293, 112
    %v1823 = vpop.permute.xlu0 %1822
    %1824 = vrot.lane.b32.xlu0 %v1298, 112
    %v1825 = vpop.permute.xlu0 %1824
    %1826 = vrot.lane.b32.xlu0 %v1303, 112
    %v1827 = vpop.permute.xlu0 %1826
    %1828 = vrot.lane.b32.xlu0 %v1308, 112
    %v1829 = vpop.permute.xlu0 %1828
    %1830 = vrot.lane.b32.xlu0 %v1313, 112
    %v1831 = vpop.permute.xlu0 %1830
    %1832 = vrot.lane.b32.xlu0 %v1318, 112
    %v1833 = vpop.permute.xlu0 %1832
    %1834 = vrot.lane.b32.xlu0 %v1323, 112
    %v1835 = vpop.permute.xlu0 %1834
    %1836 = vrot.lane.b32.xlu0 %v1328, 112
    %v1837 = vpop.permute.xlu0 %1836
    %1838 = vrot.lane.b32.xlu0 %v1333, 112
    %v1839 = vpop.permute.xlu0 %1838
    %1840 = vrot.lane.b32.xlu0 %v1338, 112
    %v1841 = vpop.permute.xlu0 %1840
    %1842 = vrot.lane.b32.xlu0 %v1343, 112
    %v1843 = vpop.permute.xlu0 %1842
    %1844 = vrot.lane.b32.xlu0 %v1348, 112
    %v1845 = vpop.permute.xlu0 %1844
    %1846 = vrot.lane.b32.xlu0 %v1353, 112
    %v1847 = vpop.permute.xlu0 %1846
    %1848 = vrot.lane.b32.xlu0 %v1358, 112
    %v1849 = vpop.permute.xlu0 %1848
    %1850 = vrot.lane.b32.xlu0 %v1363, 112
    %v1851 = vpop.permute.xlu0 %1850
    %1852 = vrot.lane.b32.xlu0 %v1368, 112
    %v1853 = vpop.permute.xlu0 %1852
    %1854 = vrot.lane.b32.xlu0 %v1373, 112
    %v1855 = vpop.permute.xlu0 %1854
    %1856 = vrot.lane.b32.xlu0 %v1378, 112
    %v1857 = vpop.permute.xlu0 %1856
    %1858 = vrot.lane.b32.xlu0 %v1383, 112
    %v1859 = vpop.permute.xlu0 %1858
    %1860 = vrot.lane.b32.xlu0 %v1388, 112
    %v1861 = vpop.permute.xlu0 %1860
    %1862 = vrot.lane.b32.xlu0 %v1393, 112
    %v1863 = vpop.permute.xlu0 %1862
    %1864 = vrot.lane.b32.xlu0 %v1398, 112
    %v1865 = vpop.permute.xlu0 %1864
    %1866 = vrot.lane.b32.xlu0 %v1403, 112
    %v1867 = vpop.permute.xlu0 %1866
    %1868 = vrot.lane.b32.xlu0 %v1408, 112
    %v1869 = vpop.permute.xlu0 %1868
    %1870 = vrot.lane.b32.xlu0 %v1413, 112
    %v1871 = vpop.permute.xlu0 %1870
    %1872 = vrot.lane.b32.xlu0 %v1418, 112
    %v1873 = vpop.permute.xlu0 %1872
    %1874 = vrot.lane.b32.xlu0 %v1423, 112
    %v1875 = vpop.permute.xlu0 %1874
    %v1940 = vsel %vm90, %v1618, 0
    %v1943 = vsel %vm90, %v1619, 0
    %v1946 = vsel %vm90, %v1620, 0
    %v1949 = vsel %vm90, %v1621, 0
    %v1952 = vsel %vm90, %v1622, 0
    %v1955 = vsel %vm90, %v1623, 0
    %v1958 = vsel %vm90, %v1624, 0
    %v1961 = vsel %vm90, %v1625, 0
    %v1964 = vsel %vm90, %v1626, 0
    %v1967 = vsel %vm90, %v1627, 0
    %v1970 = vsel %vm90, %v1628, 0
    %v1973 = vsel %vm90, %v1629, 0
    %v1976 = vsel %vm90, %v1630, 0
    %v1979 = vsel %vm90, %v1631, 0
    %v1982 = vsel %vm90, %v1632, 0
    %v1985 = vsel %vm90, %v1633, 0
    %v1988 = vsel %vm90, %v1634, 0
    %v1991 = vsel %vm90, %v1635, 0
    %v1994 = vsel %vm90, %v1636, 0
    %v1997 = vsel %vm90, %v1637, 0
    %v2000 = vsel %vm90, %v1638, 0
    %v2003 = vsel %vm90, %v1639, 0
    %v2006 = vsel %vm90, %v1640, 0
    %v2009 = vsel %vm90, %v1641, 0
    %v2012 = vsel %vm90, %v1642, 0
    %v2015 = vsel %vm90, %v1643, 0
    %v2018 = vsel %vm90, %v1644, 0
    %v2021 = vsel %vm90, %v1645, 0
    %v2024 = vsel %vm90, %v1646, 0
    %v2027 = vsel %vm90, %v1647, 0
    %v2030 = vsel %vm90, %v1648, 0
    %v2033 = vsel %vm90, %v1649, 0
    %v2036 = vsel %vm90, %v1650, 0
    %v2039 = vsel %vm90, %v1651, 0
    %v2042 = vsel %vm90, %v1652, 0
    %v2045 = vsel %vm90, %v1653, 0
    %v2048 = vsel %vm90, %v1654, 0
    %v2051 = vsel %vm90, %v1655, 0
    %v2054 = vsel %vm90, %v1656, 0
    %v2057 = vsel %vm90, %v1657, 0
    %v2060 = vsel %vm90, %v1658, 0
    %v2063 = vsel %vm90, %v1659, 0
    %v2066 = vsel %vm90, %v1660, 0
    %v2069 = vsel %vm90, %v1661, 0
    %v2072 = vsel %vm90, %v1662, 0
    %v2075 = vsel %vm90, %v1663, 0
    %v2078 = vsel %vm90, %v1664, 0
    %v2081 = vsel %vm90, %v1665, 0
    %v2084 = vsel %vm90, %v1666, 0
    %v2087 = vsel %vm90, %v1667, 0
    %v2090 = vsel %vm90, %v1668, 0
    %v2093 = vsel %vm90, %v1669, 0
    %v2096 = vsel %vm90, %v1670, 0
    %v2099 = vsel %vm90, %v1671, 0
    %v2102 = vsel %vm90, %v1672, 0
    %v2105 = vsel %vm90, %v1673, 0
    %v2108 = vsel %vm90, %v1674, 0
    %v2111 = vsel %vm90, %v1675, 0
    %v2114 = vsel %vm90, %v1676, 0
    %v2117 = vsel %vm90, %v1677, 0
    %v2120 = vsel %vm90, %v1678, 0
    %v2123 = vsel %vm90, %v1679, 0
    %v2126 = vsel %vm90, %v1680, 0
    %2128 = vmatprep.subr.mxu0 0.0
    %2129 = vmatpush1.msra.mxu0 %v1682
    %2130 = vmatprep.subr.mxu0 0.0
    %2131 = vmatpush1.msra.mxu0 %v1684
    %2132 = vmatprep.subr.mxu0 0.0
    %2133 = vmatpush1.msra.mxu0 0.0
    %2134 = vmatprep.subr.mxu0 0.0
    %2135 = vmatpush1.msra.mxu0 0.0
    %2136 = vmatprep.subr.mxu0 0.0
    %2137 = vmatpush1.msra.mxu0 0.0
    %2138 = vmatprep.subr.mxu0 0.0
    %2139 = vmatpush1.msra.mxu0 0.0
    %2140 = vmatprep.subr.mxu0 0.0
    %2141 = vmatpush1.msra.mxu0 0.0
    %2142 = vmatprep.subr.mxu0 0.0
    %2143 = vmatpush1.msra.mxu0 0.0
    %2144 = vmatprep.subr.mxu0 0.0
    %2145 = vmatpush1.msra.mxu0 0.0
    %2146 = vmatprep.subr.mxu0 0.0
    %2147 = vmatpush1.msra.mxu0 0.0
    %2148 = vmatprep.subr.mxu0 0.0
    %2149 = vmatpush1.msra.mxu0 0.0
    %2150 = vmatprep.subr.mxu0 0.0
    %2151 = vmatpush1.msra.mxu0 0.0
    %2152 = vmatprep.subr.mxu0 0.0
    %2153 = vmatpush1.msra.mxu0 0.0
    %2154 = vmatprep.subr.mxu0 0.0
    %2155 = vmatpush1.msra.mxu0 0.0
    %2156 = vmatprep.subr.mxu0 0.0
    %2157 = vmatpush1.msra.mxu0 0.0
    %2158 = vmatprep.subr.mxu0 0.0
    %2159 = vmatpush1.msra.mxu0 0.0
    %2160 = vmatprep.subr.mxu0 0.0
    %2161 = vmatpush1.msra.mxu0 0.0
    %2162 = vmatprep.subr.mxu0 0.0
    %2163 = vmatpush1.msra.mxu0 0.0
    %2164 = vmatprep.subr.mxu0 0.0
    %2165 = vmatpush1.msra.mxu0 0.0
    %2166 = vmatprep.subr.mxu0 0.0
    %2167 = vmatpush1.msra.mxu0 0.0
    %2168 = vmatprep.subr.mxu0 0.0
    %2169 = vmatpush1.msra.mxu0 0.0
    %2170 = vmatprep.subr.mxu0 0.0
    %2171 = vmatpush1.msra.mxu0 0.0
    %2172 = vmatprep.subr.mxu0 0.0
    %2173 = vmatpush1.msra.mxu0 0.0
    %2174 = vmatprep.subr.mxu0 0.0
    %2175 = vmatpush1.msra.mxu0 0.0
    %2176 = vmatprep.subr.mxu0 0.0
    %2177 = vmatpush1.msra.mxu0 0.0
    %2178 = vmatprep.subr.mxu0 0.0
    %2179 = vmatpush1.msra.mxu0 0.0
    %2180 = vmatprep.subr.mxu0 0.0
    %2181 = vmatpush1.msra.mxu0 0.0
    %2182 = vmatprep.subr.mxu0 0.0
    %2183 = vmatpush1.msra.mxu0 0.0
    %2184 = vmatprep.subr.mxu0 0.0
    %2185 = vmatpush1.msra.mxu0 0.0
    %2186 = vmatprep.subr.mxu0 0.0
    %2187 = vmatpush1.msra.mxu0 0.0
    %2188 = vmatprep.subr.mxu0 0.0
    %2189 = vmatpush1.msra.mxu0 0.0
    %2190 = vmatprep.subr.mxu0 0.0
    %2191 = vmatpush1.msra.mxu0 0.0
    %2192 = vmatprep.mubr.f32.mxu0 0.0
    %2193 = vmatmul.mubr.f32.gmra.mrb[0].mxu0 %v1940
    %v2194 = vpop.f32.mrb[0].mxu0
    %v2195 = vadd.f32 %v1751, %v2194
    %v2196 = vpop.f32.mrb[0].mxu0
    %2197 = vmatprep.mubr.f32.mxu0 0.0
    %2198 = vmatmul.mubr.f32.gmra.mrb[0].mxu0 %v1943
    %v2199 = vpop.f32.mrb[0].mxu0
    %v2200 = vadd.f32 %v1753, %v2199
    %v2201 = vpop.f32.mrb[0].mxu0
    %2202 = vmatprep.mubr.f32.mxu0 0.0
    %2203 = vmatmul.mubr.f32.gmra.mrb[0].mxu0 %v1946
    %v2204 = vpop.f32.mrb[0].mxu0
    %v2205 = vadd.f32 %v1755, %v2204
    %v2206 = vpop.f32.mrb[0].mxu0
    %2207 = vmatprep.mubr.f32.mxu0 0.0
    %2208 = vmatmul.mubr.f32.gmra.mrb[0].mxu0 %v1949
    %v2209 = vpop.f32.mrb[0].mxu0
    %v2210 = vadd.f32 %v1757, %v2209
    %v2211 = vpop.f32.mrb[0].mxu0
    %2212 = vmatprep.mubr.f32.mxu0 0.0
    %2213 = vmatmul.mubr.f32.gmra.mrb[0].mxu0 %v1952
    %v2214 = vpop.f32.mrb[0].mxu0
    %v2215 = vadd.f32 %v1759, %v2214
    %v2216 = vpop.f32.mrb[0].mxu0
    %2217 = vmatprep.mubr.f32.mxu0 0.0
    %2218 = vmatmul.mubr.f32.gmra.mrb[0].mxu0 %v1955
    %v2219 = vpop.f32.mrb[0].mxu0
    %v2220 = vadd.f32 %v1761, %v2219
    %v2221 = vpop.f32.mrb[0].mxu0
    %2222 = vmatprep.mubr.f32.mxu0 0.0
    %2223 = vmatmul.mubr.f32.gmra.mrb[0].mxu0 %v1958
    %v2224 = vpop.f32.mrb[0].mxu0
    %v2225 = vadd.f32 %v1763, %v2224
    %v2226 = vpop.f32.mrb[0].mxu0
    %2227 = vmatprep.mubr.f32.mxu0 0.0
    %2228 = vmatmul.mubr.f32.gmra.mrb[0].mxu0 %v1961
    %v2229 = vpop.f32.mrb[0].mxu0
    %v2230 = vadd.f32 %v1765, %v2229
    %v2231 = vpop.f32.mrb[0].mxu0
    %2232 = vmatprep.mubr.f32.mxu0 0.0
    %2233 = vmatmul.mubr.f32.gmra.mrb[0].mxu0 %v1964
    %v2234 = vpop.f32.mrb[0].mxu0
    %v2235 = vadd.f32 %v1767, %v2234
    %v2236 = vpop.f32.mrb[0].mxu0
    %2237 = vmatprep.mubr.f32.mxu0 0.0
    %2238 = vmatmul.mubr.f32.gmra.mrb[0].mxu0 %v1967
    %v2239 = vpop.f32.mrb[0].mxu0
    %v2240 = vadd.f32 %v1769, %v2239
    %v2241 = vpop.f32.mrb[0].mxu0
    %2242 = vmatprep.mubr.f32.mxu0 0.0
    %2243 = vmatmul.mubr.f32.gmra.mrb[0].mxu0 %v1970
    %v2244 = vpop.f32.mrb[0].mxu0
    %v2245 = vadd.f32 %v1771, %v2244
    %v2246 = vpop.f32.mrb[0].mxu0
    %2247 = vmatprep.mubr.f32.mxu0 0.0
    %2248 = vmatmul.mubr.f32.gmra.mrb[0].mxu0 %v1973
    %v2249 = vpop.f32.mrb[0].mxu0
    %v2250 = vadd.f32 %v1773, %v2249
    %v2251 = vpop.f32.mrb[0].mxu0
    %2252 = vmatprep.mubr.f32.mxu0 0.0
    %2253 = vmatmul.mubr.f32.gmra.mrb[0].mxu0 %v1976
    %v2254 = vpop.f32.mrb[0].mxu0
    %v2255 = vadd.f32 %v1775, %v2254
    %v2256 = vpop.f32.mrb[0].mxu0
    %2257 = vmatprep.mubr.f32.mxu0 0.0
    %2258 = vmatmul.mubr.f32.gmra.mrb[0].mxu0 %v1979
    %v2259 = vpop.f32.mrb[0].mxu0
    %v2260 = vadd.f32 %v1777, %v2259
    %v2261 = vpop.f32.mrb[0].mxu0
    %2262 = vmatprep.mubr.f32.mxu0 0.0
    %2263 = vmatmul.mubr.f32.gmra.mrb[0].mxu0 %v1982
    %v2264 = vpop.f32.mrb[0].mxu0
    %v2265 = vadd.f32 %v1779, %v2264
    %v2266 = vpop.f32.mrb[0].mxu0
    %2267 = vmatprep.mubr.f32.mxu0 0.0
    %2268 = vmatmul.mubr.f32.gmra.mrb[0].mxu0 %v1985
    %v2269 = vpop.f32.mrb[0].mxu0
    %v2270 = vadd.f32 %v1781, %v2269
    %v2271 = vpop.f32.mrb[0].mxu0
    %2272 = vmatprep.mubr.f32.mxu0 0.0
    %2273 = vmatmul.mubr.f32.gmra.mrb[0].mxu0 %v1988
    %v2274 = vpop.f32.mrb[0].mxu0
    %v2275 = vadd.f32 %v1783, %v2274
    %v2276 = vpop.f32.mrb[0].mxu0
    %2277 = vmatprep.mubr.f32.mxu0 0.0
    %2278 = vmatmul.mubr.f32.gmra.mrb[0].mxu0 %v1991
    %v2279 = vpop.f32.mrb[0].mxu0
    %v2280 = vadd.f32 %v1785, %v2279
    %v2281 = vpop.f32.mrb[0].mxu0
    %2282 = vmatprep.mubr.f32.mxu0 0.0
    %2283 = vmatmul.mubr.f32.gmra.mrb[0].mxu0 %v1994
    %v2284 = vpop.f32.mrb[0].mxu0
    %v2285 = vadd.f32 %v1787, %v2284
    %v2286 = vpop.f32.mrb[0].mxu0
    %2287 = vmatprep.mubr.f32.mxu0 0.0
    %2288 = vmatmul.mubr.f32.gmra.mrb[0].mxu0 %v1997
    %v2289 = vpop.f32.mrb[0].mxu0
    %v2290 = vadd.f32 %v1789, %v2289
    %v2291 = vpop.f32.mrb[0].mxu0
    %2292 = vmatprep.mubr.f32.mxu0 0.0
    %2293 = vmatmul.mubr.f32.gmra.mrb[0].mxu0 %v2000
    %v2294 = vpop.f32.mrb[0].mxu0
    %v2295 = vadd.f32 %v1791, %v2294
    %v2296 = vpop.f32.mrb[0].mxu0
    %2297 = vmatprep.mubr.f32.mxu0 0.0
    %2298 = vmatmul.mubr.f32.gmra.mrb[0].mxu0 %v2003
    %v2299 = vpop.f32.mrb[0].mxu0
    %v2300 = vadd.f32 %v1793, %v2299
    %v2301 = vpop.f32.mrb[0].mxu0
    %2302 = vmatprep.mubr.f32.mxu0 0.0
    %2303 = vmatmul.mubr.f32.gmra.mrb[0].mxu0 %v2006
    %v2304 = vpop.f32.mrb[0].mxu0
    %v2305 = vadd.f32 %v1795, %v2304
    %v2306 = vpop.f32.mrb[0].mxu0
    %2307 = vmatprep.mubr.f32.mxu0 0.0
    %2308 = vmatmul.mubr.f32.gmra.mrb[0].mxu0 %v2009
    %v2309 = vpop.f32.mrb[0].mxu0
    %v2310 = vadd.f32 %v1797, %v2309
    %v2311 = vpop.f32.mrb[0].mxu0
    %2312 = vmatprep.mubr.f32.mxu0 0.0
    %2313 = vmatmul.mubr.f32.gmra.mrb[0].mxu0 %v2012
    %v2314 = vpop.f32.mrb[0].mxu0
    %v2315 = vadd.f32 %v1799, %v2314
    %v2316 = vpop.f32.mrb[0].mxu0
    %2317 = vmatprep.mubr.f32.mxu0 0.0
    %2318 = vmatmul.mubr.f32.gmra.mrb[0].mxu0 %v2015
    %v2319 = vpop.f32.mrb[0].mxu0
    %v2320 = vadd.f32 %v1801, %v2319
    %v2321 = vpop.f32.mrb[0].mxu0
    %2322 = vmatprep.mubr.f32.mxu0 0.0
    %2323 = vmatmul.mubr.f32.gmra.mrb[0].mxu0 %v2018
    %v2324 = vpop.f32.mrb[0].mxu0
    %v2325 = vadd.f32 %v1803, %v2324
    %v2326 = vpop.f32.mrb[0].mxu0
    %2327 = vmatprep.mubr.f32.mxu0 0.0
    %2328 = vmatmul.mubr.f32.gmra.mrb[0].mxu0 %v2021
    %v2329 = vpop.f32.mrb[0].mxu0
    %v2330 = vadd.f32 %v1805, %v2329
    %v2331 = vpop.f32.mrb[0].mxu0
    %2332 = vmatprep.mubr.f32.mxu0 0.0
    %2333 = vmatmul.mubr.f32.gmra.mrb[0].mxu0 %v2024
    %v2334 = vpop.f32.mrb[0].mxu0
    %v2335 = vadd.f32 %v1807, %v2334
    %v2336 = vpop.f32.mrb[0].mxu0
    %2337 = vmatprep.mubr.f32.mxu0 0.0
    %2338 = vmatmul.mubr.f32.gmra.mrb[0].mxu0 %v2027
    %v2339 = vpop.f32.mrb[0].mxu0
    %v2340 = vadd.f32 %v1809, %v2339
    %v2341 = vpop.f32.mrb[0].mxu0
    %2342 = vmatprep.mubr.f32.mxu0 0.0
    %2343 = vmatmul.mubr.f32.gmra.mrb[0].mxu0 %v2030
    %v2344 = vpop.f32.mrb[0].mxu0
    %v2345 = vadd.f32 %v1811, %v2344
    %v2346 = vpop.f32.mrb[0].mxu0
    %2347 = vmatprep.mubr.f32.mxu0 0.0
    %2348 = vmatmul.mubr.f32.gmra.mrb[0].mxu0 %v2033
    %v2349 = vpop.f32.mrb[0].mxu0
    %v2350 = vadd.f32 %v1813, %v2349
    %v2351 = vpop.f32.mrb[0].mxu0
    %2352 = vmatprep.mubr.f32.mxu0 0.0
    %2353 = vmatmul.mubr.f32.gmra.mrb[0].mxu0 %v2036
    %v2354 = vpop.f32.mrb[0].mxu0
    %v2355 = vadd.f32 %v1815, %v2354
    %v2356 = vpop.f32.mrb[0].mxu0
    %2357 = vmatprep.mubr.f32.mxu0 0.0
    %2358 = vmatmul.mubr.f32.gmra.mrb[0].mxu0 %v2039
    %v2359 = vpop.f32.mrb[0].mxu0
    %v2360 = vadd.f32 %v1817, %v2359
    %v2361 = vpop.f32.mrb[0].mxu0
    %2362 = vmatprep.mubr.f32.mxu0 0.0
    %2363 = vmatmul.mubr.f32.gmra.mrb[0].mxu0 %v2042
    %v2364 = vpop.f32.mrb[0].mxu0
    %v2365 = vadd.f32 %v1819, %v2364
    %v2366 = vpop.f32.mrb[0].mxu0
    %2367 = vmatprep.mubr.f32.mxu0 0.0
    %2368 = vmatmul.mubr.f32.gmra.mrb[0].mxu0 %v2045
    %v2369 = vpop.f32.mrb[0].mxu0
    %v2370 = vadd.f32 %v1821, %v2369
    %v2371 = vpop.f32.mrb[0].mxu0
    %2372 = vmatprep.mubr.f32.mxu0 0.0
    %2373 = vmatmul.mubr.f32.gmra.mrb[0].mxu0 %v2048
    %v2374 = vpop.f32.mrb[0].mxu0
    %v2375 = vadd.f32 %v1823, %v2374
    %v2376 = vpop.f32.mrb[0].mxu0
    %2377 = vmatprep.mubr.f32.mxu0 0.0
    %2378 = vmatmul.mubr.f32.gmra.mrb[0].mxu0 %v2051
    %v2379 = vpop.f32.mrb[0].mxu0
    %v2380 = vadd.f32 %v1825, %v2379
    %v2381 = vpop.f32.mrb[0].mxu0
    %2382 = vmatprep.mubr.f32.mxu0 0.0
    %2383 = vmatmul.mubr.f32.gmra.mrb[0].mxu0 %v2054
    %v2384 = vpop.f32.mrb[0].mxu0
    %v2385 = vadd.f32 %v1827, %v2384
    %v2386 = vpop.f32.mrb[0].mxu0
    %2387 = vmatprep.mubr.f32.mxu0 0.0
    %2388 = vmatmul.mubr.f32.gmra.mrb[0].mxu0 %v2057
    %v2389 = vpop.f32.mrb[0].mxu0
    %v2390 = vadd.f32 %v1829, %v2389
    %v2391 = vpop.f32.mrb[0].mxu0
    %2392 = vmatprep.mubr.f32.mxu0 0.0
    %2393 = vmatmul.mubr.f32.gmra.mrb[0].mxu0 %v2060
    %v2394 = vpop.f32.mrb[0].mxu0
    %v2395 = vadd.f32 %v1831, %v2394
    %v2396 = vpop.f32.mrb[0].mxu0
    %2397 = vmatprep.mubr.f32.mxu0 0.0
    %2398 = vmatmul.mubr.f32.gmra.mrb[0].mxu0 %v2063
    %v2399 = vpop.f32.mrb[0].mxu0
    %v2400 = vadd.f32 %v1833, %v2399
    %v2401 = vpop.f32.mrb[0].mxu0
    %2402 = vmatprep.mubr.f32.mxu0 0.0
    %2403 = vmatmul.mubr.f32.gmra.mrb[0].mxu0 %v2066
    %v2404 = vpop.f32.mrb[0].mxu0
    %v2405 = vadd.f32 %v1835, %v2404
    %v2406 = vpop.f32.mrb[0].mxu0
    %2407 = vmatprep.mubr.f32.mxu0 0.0
    %2408 = vmatmul.mubr.f32.gmra.mrb[0].mxu0 %v2069
    %v2409 = vpop.f32.mrb[0].mxu0
    %v2410 = vadd.f32 %v1837, %v2409
    %v2411 = vpop.f32.mrb[0].mxu0
    %2412 = vmatprep.mubr.f32.mxu0 0.0
    %2413 = vmatmul.mubr.f32.gmra.mrb[0].mxu0 %v2072
    %v2414 = vpop.f32.mrb[0].mxu0
    %v2415 = vadd.f32 %v1839, %v2414
    %v2416 = vpop.f32.mrb[0].mxu0
    %2417 = vmatprep.mubr.f32.mxu0 0.0
    %2418 = vmatmul.mubr.f32.gmra.mrb[0].mxu0 %v2075
    %v2419 = vpop.f32.mrb[0].mxu0
    %v2420 = vadd.f32 %v1841, %v2419
    %v2421 = vpop.f32.mrb[0].mxu0
    %2422 = vmatprep.mubr.f32.mxu0 0.0
    %2423 = vmatmul.mubr.f32.gmra.mrb[0].mxu0 %v2078
    %v2424 = vpop.f32.mrb[0].mxu0
    %v2425 = vadd.f32 %v1843, %v2424
    %v2426 = vpop.f32.mrb[0].mxu0
    %2427 = vmatprep.mubr.f32.mxu0 0.0
    %2428 = vmatmul.mubr.f32.gmra.mrb[0].mxu0 %v2081
    %v2429 = vpop.f32.mrb[0].mxu0
    %v2430 = vadd.f32 %v1845, %v2429
    %v2431 = vpop.f32.mrb[0].mxu0
    %2432 = vmatprep.mubr.f32.mxu0 0.0
    %2433 = vmatmul.mubr.f32.gmra.mrb[0].mxu0 %v2084
    %v2434 = vpop.f32.mrb[0].mxu0
    %v2435 = vadd.f32 %v1847, %v2434
    %v2436 = vpop.f32.mrb[0].mxu0
    %2437 = vmatprep.mubr.f32.mxu0 0.0
    %2438 = vmatmul.mubr.f32.gmra.mrb[0].mxu0 %v2087
    %v2439 = vpop.f32.mrb[0].mxu0
    %v2440 = vadd.f32 %v1849, %v2439
    %v2441 = vpop.f32.mrb[0].mxu0
    %2442 = vmatprep.mubr.f32.mxu0 0.0
    %2443 = vmatmul.mubr.f32.gmra.mrb[0].mxu0 %v2090
    %v2444 = vpop.f32.mrb[0].mxu0
    %v2445 = vadd.f32 %v1851, %v2444
    %v2446 = vpop.f32.mrb[0].mxu0
    %2447 = vmatprep.mubr.f32.mxu0 0.0
    %2448 = vmatmul.mubr.f32.gmra.mrb[0].mxu0 %v2093
    %v2449 = vpop.f32.mrb[0].mxu0
    %v2450 = vadd.f32 %v1853, %v2449
    %v2451 = vpop.f32.mrb[0].mxu0
    %2452 = vmatprep.mubr.f32.mxu0 0.0
    %2453 = vmatmul.mubr.f32.gmra.mrb[0].mxu0 %v2096
    %v2454 = vpop.f32.mrb[0].mxu0
    %v2455 = vadd.f32 %v1855, %v2454
    %v2456 = vpop.f32.mrb[0].mxu0
    %2457 = vmatprep.mubr.f32.mxu0 0.0
    %2458 = vmatmul.mubr.f32.gmra.mrb[0].mxu0 %v2099
    %v2459 = vpop.f32.mrb[0].mxu0
    %v2460 = vadd.f32 %v1857, %v2459
    %v2461 = vpop.f32.mrb[0].mxu0
    %2462 = vmatprep.mubr.f32.mxu0 0.0
    %2463 = vmatmul.mubr.f32.gmra.mrb[0].mxu0 %v2102
    %v2464 = vpop.f32.mrb[0].mxu0
    %v2465 = vadd.f32 %v1859, %v2464
    %v2466 = vpop.f32.mrb[0].mxu0
    %2467 = vmatprep.mubr.f32.mxu0 0.0
    %2468 = vmatmul.mubr.f32.gmra.mrb[0].mxu0 %v2105
    %v2469 = vpop.f32.mrb[0].mxu0
    %v2470 = vadd.f32 %v1861, %v2469
    %v2471 = vpop.f32.mrb[0].mxu0
    %2472 = vmatprep.mubr.f32.mxu0 0.0
    %2473 = vmatmul.mubr.f32.gmra.mrb[0].mxu0 %v2108
    %v2474 = vpop.f32.mrb[0].mxu0
    %v2475 = vadd.f32 %v1863, %v2474
    %v2476 = vpop.f32.mrb[0].mxu0
    %2477 = vmatprep.mubr.f32.mxu0 0.0
    %2478 = vmatmul.mubr.f32.gmra.mrb[0].mxu0 %v2111
    %v2479 = vpop.f32.mrb[0].mxu0
    %v2480 = vadd.f32 %v1865, %v2479
    %v2481 = vpop.f32.mrb[0].mxu0
    %2482 = vmatprep.mubr.f32.mxu0 0.0
    %2483 = vmatmul.mubr.f32.gmra.mrb[0].mxu0 %v2114
    %v2484 = vpop.f32.mrb[0].mxu0
    %v2485 = vadd.f32 %v1867, %v2484
    %v2486 = vpop.f32.mrb[0].mxu0
    %2487 = vmatprep.mubr.f32.mxu0 0.0
    %2488 = vmatmul.mubr.f32.gmra.mrb[0].mxu0 %v2117
    %v2489 = vpop.f32.mrb[0].mxu0
    %v2490 = vadd.f32 %v1869, %v2489
    %v2491 = vpop.f32.mrb[0].mxu0
    %2492 = vmatprep.mubr.f32.mxu0 0.0
    %2493 = vmatmul.mubr.f32.gmra.mrb[0].mxu0 %v2120
    %v2494 = vpop.f32.mrb[0].mxu0
    %v2495 = vadd.f32 %v1871, %v2494
    %v2496 = vpop.f32.mrb[0].mxu0
    %2497 = vmatprep.mubr.f32.mxu0 0.0
    %2498 = vmatmul.mubr.f32.gmra.mrb[0].mxu0 %v2123
    %v2499 = vpop.f32.mrb[0].mxu0
    %v2500 = vadd.f32 %v1873, %v2499
    %v2501 = vpop.f32.mrb[0].mxu0
    %2502 = vmatprep.mubr.f32.mxu0 0.0
    %2503 = vmatmul.mubr.f32.gmra.mrb[0].mxu0 %v2126
    %v2504 = vpop.f32.mrb[0].mxu0
    %v2505 = vadd.f32 %v1875, %v2504
    %v2506 = vpop.f32.mrb[0].mxu0
    %2507 = vdwg.mxu0
    %2508 = vrot.lane.b32.xlu0 %v88, 96
    %v2509 = vpop.permute.xlu0 %2508
    %v2511 = vadd.f32 %v2195, %v2509
    %v2512 = vadd.f32 %v2200, %v2509
    %v2513 = vadd.f32 %v2205, %v2509
    %v2514 = vadd.f32 %v2210, %v2509
    %v2515 = vadd.f32 %v2215, %v2509
    %v2516 = vadd.f32 %v2220, %v2509
    %v2517 = vadd.f32 %v2225, %v2509
    %v2518 = vadd.f32 %v2230, %v2509
    %v2519 = vadd.f32 %v2235, %v2509
    %v2520 = vadd.f32 %v2240, %v2509
    %v2521 = vadd.f32 %v2245, %v2509
    %v2522 = vadd.f32 %v2250, %v2509
    %v2523 = vadd.f32 %v2255, %v2509
    %v2524 = vadd.f32 %v2260, %v2509
    %v2525 = vadd.f32 %v2265, %v2509
    %v2526 = vadd.f32 %v2270, %v2509
    %v2527 = vadd.f32 %v2275, %v2509
    %v2528 = vadd.f32 %v2280, %v2509
    %v2529 = vadd.f32 %v2285, %v2509
    %v2530 = vadd.f32 %v2290, %v2509
    %v2531 = vadd.f32 %v2295, %v2509
    %v2532 = vadd.f32 %v2300, %v2509
    %v2533 = vadd.f32 %v2305, %v2509
    %v2534 = vadd.f32 %v2310, %v2509
    %v2535 = vadd.f32 %v2315, %v2509
    %v2536 = vadd.f32 %v2320, %v2509
    %v2537 = vadd.f32 %v2325, %v2509
    %v2538 = vadd.f32 %v2330, %v2509
    %v2539 = vadd.f32 %v2335, %v2509
    %v2540 = vadd.f32 %v2340, %v2509
    %v2541 = vadd.f32 %v2345, %v2509
    %v2542 = vadd.f32 %v2350, %v2509
    %v2543 = vadd.f32 %v2355, %v2509
    %v2544 = vadd.f32 %v2360, %v2509
    %v2545 = vadd.f32 %v2365, %v2509
    %v2546 = vadd.f32 %v2370, %v2509
    %v2547 = vadd.f32 %v2375, %v2509
    %v2548 = vadd.f32 %v2380, %v2509
    %v2549 = vadd.f32 %v2385, %v2509
    %v2550 = vadd.f32 %v2390, %v2509
    %v2551 = vadd.f32 %v2395, %v2509
    %v2552 = vadd.f32 %v2400, %v2509
    %v2553 = vadd.f32 %v2405, %v2509
    %v2554 = vadd.f32 %v2410, %v2509
    %v2555 = vadd.f32 %v2415, %v2509
    %v2556 = vadd.f32 %v2420, %v2509
    %v2557 = vadd.f32 %v2425, %v2509
    %v2558 = vadd.f32 %v2430, %v2509
    %v2559 = vadd.f32 %v2435, %v2509
    %v2560 = vadd.f32 %v2440, %v2509
    %v2561 = vadd.f32 %v2445, %v2509
    %v2562 = vadd.f32 %v2450, %v2509
    %v2563 = vadd.f32 %v2455, %v2509
    %v2564 = vadd.f32 %v2460, %v2509
    %v2565 = vadd.f32 %v2465, %v2509
    %v2566 = vadd.f32 %v2470, %v2509
    %v2567 = vadd.f32 %v2475, %v2509
    %v2568 = vadd.f32 %v2480, %v2509
    %v2569 = vadd.f32 %v2485, %v2509
    %v2570 = vadd.f32 %v2490, %v2509
    %v2571 = vadd.f32 %v2495, %v2509
    %v2572 = vadd.f32 %v2500, %v2509
    %v2573 = vadd.f32 %v2505, %v2509
    %v2574 = vmul.f32 %v2511, 0.5
    %v2575 = vmul.f32 %v2512, 0.5
    %v2576 = vmul.f32 %v2513, 0.5
    %v2577 = vmul.f32 %v2514, 0.5
    %v2578 = vmul.f32 %v2515, 0.5
    %v2579 = vmul.f32 %v2516, 0.5
    %v2580 = vmul.f32 %v2517, 0.5
    %v2581 = vmul.f32 %v2518, 0.5
    %v2582 = vmul.f32 %v2519, 0.5
    %v2583 = vmul.f32 %v2520, 0.5
    %v2584 = vmul.f32 %v2521, 0.5
    %v2585 = vmul.f32 %v2522, 0.5
    %v2586 = vmul.f32 %v2523, 0.5
    %v2587 = vmul.f32 %v2524, 0.5
    %v2588 = vmul.f32 %v2525, 0.5
    %v2589 = vmul.f32 %v2526, 0.5
    %v2590 = vmul.f32 %v2527, 0.5
    %v2591 = vmul.f32 %v2528, 0.5
    %v2592 = vmul.f32 %v2529, 0.5
    %v2593 = vmul.f32 %v2530, 0.5
    %v2594 = vmul.f32 %v2531, 0.5
    %v2595 = vmul.f32 %v2532, 0.5
    %v2596 = vmul.f32 %v2533, 0.5
    %v2597 = vmul.f32 %v2534, 0.5
    %v2598 = vmul.f32 %v2535, 0.5
    %v2599 = vmul.f32 %v2536, 0.5
    %v2600 = vmul.f32 %v2537, 0.5
    %v2601 = vmul.f32 %v2538, 0.5
    %v2602 = vmul.f32 %v2539, 0.5
    %v2603 = vmul.f32 %v2540, 0.5
    %v2604 = vmul.f32 %v2541, 0.5
    %v2605 = vmul.f32 %v2542, 0.5
    %v2606 = vmul.f32 %v2543, 0.5
    %v2607 = vmul.f32 %v2544, 0.5
    %v2608 = vmul.f32 %v2545, 0.5
    %v2609 = vmul.f32 %v2546, 0.5
    %v2610 = vmul.f32 %v2547, 0.5
    %v2611 = vmul.f32 %v2548, 0.5
    %v2612 = vmul.f32 %v2549, 0.5
    %v2613 = vmul.f32 %v2550, 0.5
    %v2614 = vmul.f32 %v2551, 0.5
    %v2615 = vmul.f32 %v2552, 0.5
    %v2616 = vmul.f32 %v2553, 0.5
    %v2617 = vmul.f32 %v2554, 0.5
    %v2618 = vmul.f32 %v2555, 0.5
    %v2619 = vmul.f32 %v2556, 0.5
    %v2620 = vmul.f32 %v2557, 0.5
    %v2621 = vmul.f32 %v2558, 0.5
    %v2622 = vmul.f32 %v2559, 0.5
    %v2623 = vmul.f32 %v2560, 0.5
    %v2624 = vmul.f32 %v2561, 0.5
    %v2625 = vmul.f32 %v2562, 0.5
    %v2626 = vmul.f32 %v2563, 0.5
    %v2627 = vmul.f32 %v2564, 0.5
    %v2628 = vmul.f32 %v2565, 0.5
    %v2629 = vmul.f32 %v2566, 0.5
    %v2630 = vmul.f32 %v2567, 0.5
    %v2631 = vmul.f32 %v2568, 0.5
    %v2632 = vmul.f32 %v2569, 0.5
    %v2633 = vmul.f32 %v2570, 0.5
    %v2634 = vmul.f32 %v2571, 0.5
    %v2635 = vmul.f32 %v2572, 0.5
    %v2636 = vmul.f32 %v2573, 0.5
    %v2637 = vmul.f32 %v2574, 1.442695
    %v2638 = vpow.pop %v2637
    %v2639 = vmul.f32 %v2575, 1.442695
    %v2640 = vpow.pop %v2639
    %v2641 = vmul.f32 %v2576, 1.442695
    %v2642 = vpow.pop %v2641
    %v2643 = vmul.f32 %v2577, 1.442695
    %v2644 = vpow.pop %v2643
    %v2645 = vmul.f32 %v2578, 1.442695
    %v2646 = vpow.pop %v2645
    %v2647 = vmul.f32 %v2579, 1.442695
    %v2648 = vpow.pop %v2647
    %v2649 = vmul.f32 %v2580, 1.442695
    %v2650 = vpow.pop %v2649
    %v2651 = vmul.f32 %v2581, 1.442695
    %v2652 = vpow.pop %v2651
    %v2653 = vmul.f32 %v2582, 1.442695
    %v2654 = vpow.pop %v2653
    %v2655 = vmul.f32 %v2583, 1.442695
    %v2656 = vpow.pop %v2655
    %v2657 = vmul.f32 %v2584, 1.442695
    %v2658 = vpow.pop %v2657
    %v2659 = vmul.f32 %v2585, 1.442695
    %v2660 = vpow.pop %v2659
    %v2661 = vmul.f32 %v2586, 1.442695
    %v2662 = vpow.pop %v2661
    %v2663 = vmul.f32 %v2587, 1.442695
    %v2664 = vpow.pop %v2663
    %v2665 = vmul.f32 %v2588, 1.442695
    %v2666 = vpow.pop %v2665
    %v2667 = vmul.f32 %v2589, 1.442695
    %v2668 = vpow.pop %v2667
    %v2669 = vmul.f32 %v2590, 1.442695
    %v2670 = vpow.pop %v2669
    %v2671 = vmul.f32 %v2591, 1.442695
    %v2672 = vpow.pop %v2671
    %v2673 = vmul.f32 %v2592, 1.442695
    %v2674 = vpow.pop %v2673
    %v2675 = vmul.f32 %v2593, 1.442695
    %v2676 = vpow.pop %v2675
    %v2677 = vmul.f32 %v2594, 1.442695
    %v2678 = vpow.pop %v2677
    %v2679 = vmul.f32 %v2595, 1.442695
    %v2680 = vpow.pop %v2679
    %v2681 = vmul.f32 %v2596, 1.442695
    %v2682 = vpow.pop %v2681
    %v2683 = vmul.f32 %v2597, 1.442695
    %v2684 = vpow.pop %v2683
    %v2685 = vmul.f32 %v2598, 1.442695
    %v2686 = vpow.pop %v2685
    %v2687 = vmul.f32 %v2599, 1.442695
    %v2688 = vpow.pop %v2687
    %v2689 = vmul.f32 %v2600, 1.442695
    %v2690 = vpow.pop %v2689
    %v2691 = vmul.f32 %v2601, 1.442695
    %v2692 = vpow.pop %v2691
    %v2693 = vmul.f32 %v2602, 1.442695
    %v2694 = vpow.pop %v2693
    %v2695 = vmul.f32 %v2603, 1.442695
    %v2696 = vpow.pop %v2695
    %v2697 = vmul.f32 %v2604, 1.442695
    %v2698 = vpow.pop %v2697
    %v2699 = vmul.f32 %v2605, 1.442695
    %v2700 = vpow.pop %v2699
    %v2701 = vmul.f32 %v2606, 1.442695
    %v2702 = vpow.pop %v2701
    %v2703 = vmul.f32 %v2607, 1.442695
    %v2704 = vpow.pop %v2703
    %v2705 = vmul.f32 %v2608, 1.442695
    %v2706 = vpow.pop %v2705
    %v2707 = vmul.f32 %v2609, 1.442695
    %v2708 = vpow.pop %v2707
    %v2709 = vmul.f32 %v2610, 1.442695
    %v2710 = vpow.pop %v2709
    %v2711 = vmul.f32 %v2611, 1.442695
    %v2712 = vpow.pop %v2711
    %v2713 = vmul.f32 %v2612, 1.442695
    %v2714 = vpow.pop %v2713
    %v2715 = vmul.f32 %v2613, 1.442695
    %v2716 = vpow.pop %v2715
    %v2717 = vmul.f32 %v2614, 1.442695
    %v2718 = vpow.pop %v2717
    %v2719 = vmul.f32 %v2615, 1.442695
    %v2720 = vpow.pop %v2719
    %v2721 = vmul.f32 %v2616, 1.442695
    %v2722 = vpow.pop %v2721
    %v2723 = vmul.f32 %v2617, 1.442695
    %v2724 = vpow.pop %v2723
    %v2725 = vmul.f32 %v2618, 1.442695
    %v2726 = vpow.pop %v2725
    %v2727 = vmul.f32 %v2619, 1.442695
    %v2728 = vpow.pop %v2727
    %v2729 = vmul.f32 %v2620, 1.442695
    %v2730 = vpow.pop %v2729
    %v2731 = vmul.f32 %v2621, 1.442695
    %v2732 = vpow.pop %v2731
    %v2733 = vmul.f32 %v2622, 1.442695
    %v2734 = vpow.pop %v2733
    %v2735 = vmul.f32 %v2623, 1.442695
    %v2736 = vpow.pop %v2735
    %v2737 = vmul.f32 %v2624, 1.442695
    %v2738 = vpow.pop %v2737
    %v2739 = vmul.f32 %v2625, 1.442695
    %v2740 = vpow.pop %v2739
    %v2741 = vmul.f32 %v2626, 1.442695
    %v2742 = vpow.pop %v2741
    %v2743 = vmul.f32 %v2627, 1.442695
    %v2744 = vpow.pop %v2743
    %v2745 = vmul.f32 %v2628, 1.442695
    %v2746 = vpow.pop %v2745
    %v2747 = vmul.f32 %v2629, 1.442695
    %v2748 = vpow.pop %v2747
    %v2749 = vmul.f32 %v2630, 1.442695
    %v2750 = vpow.pop %v2749
    %v2751 = vmul.f32 %v2631, 1.442695
    %v2752 = vpow.pop %v2751
    %v2753 = vmul.f32 %v2632, 1.442695
    %v2754 = vpow.pop %v2753
    %v2755 = vmul.f32 %v2633, 1.442695
    %v2756 = vpow.pop %v2755
    %v2757 = vmul.f32 %v2634, 1.442695
    %v2758 = vpow.pop %v2757
    %v2759 = vmul.f32 %v2635, 1.442695
    %v2760 = vpow.pop %v2759
    %v2761 = vmul.f32 %v2636, 1.442695
    %v2762 = vpow.pop %v2761
    %v2763 = vld [vmem:[%s1] sm:$0xff]
    %v2764 = vld [vmem:[%s1 + $0x8] sm:$0xff]
    %v2765 = vld [vmem:[%s1 + $0x10] sm:$0xff]
    %v2766 = vld [vmem:[%s1 + $0x18] sm:$0xff]
    %v2767 = vld [vmem:[%s1 + $0x20] sm:$0xff]
    %v2768 = vld [vmem:[%s1 + $0x28] sm:$0xff]
    %v2769 = vld [vmem:[%s1 + $0x30] sm:$0xff]
    %v2770 = vld [vmem:[%s1 + $0x38] sm:$0xff]
    %v2771 = vld [vmem:[%s1 + $0x40] sm:$0xff]
    %v2772 = vld [vmem:[%s1 + $0x48] sm:$0xff]
    %v2773 = vld [vmem:[%s1 + $0x50] sm:$0xff]
    %v2774 = vld [vmem:[%s1 + $0x58] sm:$0xff]
    %v2775 = vld [vmem:[%s1 + $0x60] sm:$0xff]
    %v2776 = vld [vmem:[%s1 + $0x68] sm:$0xff]
    %v2777 = vld [vmem:[%s1 + $0x70] sm:$0xff]
    %v2778 = vld [vmem:[%s1 + $0x78] sm:$0xff]
    %v2779 = vld [vmem:[%s1 + $0x80] sm:$0xff]
    %v2780 = vld [vmem:[%s1 + $0x88] sm:$0xff]
    %v2781 = vld [vmem:[%s1 + $0x90] sm:$0xff]
    %v2782 = vld [vmem:[%s1 + $0x98] sm:$0xff]
    %v2783 = vld [vmem:[%s1 + $0xa0] sm:$0xff]
    %v2784 = vld [vmem:[%s1 + $0xa8] sm:$0xff]
    %v2785 = vld [vmem:[%s1 + $0xb0] sm:$0xff]
    %v2786 = vld [vmem:[%s1 + $0xb8] sm:$0xff]
    %v2787 = vld [vmem:[%s1 + $0xc0] sm:$0xff]
    %v2788 = vld [vmem:[%s1 + $0xc8] sm:$0xff]
    %v2789 = vld [vmem:[%s1 + $0xd0] sm:$0xff]
    %v2790 = vld [vmem:[%s1 + $0xd8] sm:$0xff]
    %v2791 = vld [vmem:[%s1 + $0xe0] sm:$0xff]
    %v2792 = vld [vmem:[%s1 + $0xe8] sm:$0xff]
    %v2793 = vld [vmem:[%s1 + $0xf0] sm:$0xff]
    %v2794 = vld [vmem:[%s1 + $0xf8] sm:$0xff]
    %v2795 = vld [vmem:[%s1 + $0x100] sm:$0xff]
    %v2796 = vld [vmem:[%s1 + $0x108] sm:$0xff]
    %v2797 = vld [vmem:[%s1 + $0x110] sm:$0xff]
    %v2798 = vld [vmem:[%s1 + $0x118] sm:$0xff]
    %v2799 = vld [vmem:[%s1 + $0x120] sm:$0xff]
    %v2800 = vld [vmem:[%s1 + $0x128] sm:$0xff]
    %v2801 = vld [vmem:[%s1 + $0x130] sm:$0xff]
    %v2802 = vld [vmem:[%s1 + $0x138] sm:$0xff]
    %v2803 = vld [vmem:[%s1 + $0x140] sm:$0xff]
    %v2804 = vld [vmem:[%s1 + $0x148] sm:$0xff]
    %v2805 = vld [vmem:[%s1 + $0x150] sm:$0xff]
    %v2806 = vld [vmem:[%s1 + $0x158] sm:$0xff]
    %v2807 = vld [vmem:[%s1 + $0x160] sm:$0xff]
    %v2808 = vld [vmem:[%s1 + $0x168] sm:$0xff]
    %v2809 = vld [vmem:[%s1 + $0x170] sm:$0xff]
    %v2810 = vld [vmem:[%s1 + $0x178] sm:$0xff]
    %v2811 = vld [vmem:[%s1 + $0x180] sm:$0xff]
    %v2812 = vld [vmem:[%s1 + $0x188] sm:$0xff]
    %v2813 = vld [vmem:[%s1 + $0x190] sm:$0xff]
    %v2814 = vld [vmem:[%s1 + $0x198] sm:$0xff]
    %v2815 = vld [vmem:[%s1 + $0x1a0] sm:$0xff]
    %v2816 = vld [vmem:[%s1 + $0x1a8] sm:$0xff]
    %v2817 = vld [vmem:[%s1 + $0x1b0] sm:$0xff]
    %v2818 = vld [vmem:[%s1 + $0x1b8] sm:$0xff]
    %v2819 = vld [vmem:[%s1 + $0x1c0] sm:$0xff]
    %v2820 = vld [vmem:[%s1 + $0x1c8] sm:$0xff]
    %v2821 = vld [vmem:[%s1 + $0x1d0] sm:$0xff]
    %v2822 = vld [vmem:[%s1 + $0x1d8] sm:$0xff]
    %v2823 = vld [vmem:[%s1 + $0x1e0] sm:$0xff]
    %v2824 = vld [vmem:[%s1 + $0x1e8] sm:$0xff]
    %v2825 = vld [vmem:[%s1 + $0x1f0] sm:$0xff]
    %2889 = vrot.lane.b32.xlu0 %v2763, 8
    %v2890 = vpop.permute.xlu0 %2889
    %2891 = vrot.lane.b32.xlu0 %v2764, 8
    %v2892 = vpop.permute.xlu0 %2891
    %2893 = vrot.lane.b32.xlu0 %v2765, 8
    %v2894 = vpop.permute.xlu0 %2893
    %2895 = vrot.lane.b32.xlu0 %v2766, 8
    %v2896 = vpop.permute.xlu0 %2895
    %2897 = vrot.lane.b32.xlu0 %v2767, 8
    %v2898 = vpop.permute.xlu0 %2897
    %2899 = vrot.lane.b32.xlu0 %v2768, 8
    %v2900 = vpop.permute.xlu0 %2899
    %2901 = vrot.lane.b32.xlu0 %v2769, 8
    %v2902 = vpop.permute.xlu0 %2901
    %2903 = vrot.lane.b32.xlu0 %v2770, 8
    %v2904 = vpop.permute.xlu0 %2903
    %2905 = vrot.lane.b32.xlu0 %v2771, 8
    %v2906 = vpop.permute.xlu0 %2905
    %2907 = vrot.lane.b32.xlu0 %v2772, 8
    %v2908 = vpop.permute.xlu0 %2907
    %2909 = vrot.lane.b32.xlu0 %v2773, 8
    %v2910 = vpop.permute.xlu0 %2909
    %2911 = vrot.lane.b32.xlu0 %v2774, 8
    %v2912 = vpop.permute.xlu0 %2911
    %2913 = vrot.lane.b32.xlu0 %v2775, 8
    %v2914 = vpop.permute.xlu0 %2913
    %2915 = vrot.lane.b32.xlu0 %v2776, 8
    %v2916 = vpop.permute.xlu0 %2915
    %2917 = vrot.lane.b32.xlu0 %v2777, 8
    %v2918 = vpop.permute.xlu0 %2917
    %2919 = vrot.lane.b32.xlu0 %v2778, 8
    %v2920 = vpop.permute.xlu0 %2919
    %2921 = vrot.lane.b32.xlu0 %v2779, 8
    %v2922 = vpop.permute.xlu0 %2921
    %2923 = vrot.lane.b32.xlu0 %v2780, 8
    %v2924 = vpop.permute.xlu0 %2923
    %2925 = vrot.lane.b32.xlu0 %v2781, 8
    %v2926 = vpop.permute.xlu0 %2925
    %2927 = vrot.lane.b32.xlu0 %v2782, 8
    %v2928 = vpop.permute.xlu0 %2927
    %2929 = vrot.lane.b32.xlu0 %v2783, 8
    %v2930 = vpop.permute.xlu0 %2929
    %2931 = vrot.lane.b32.xlu0 %v2784, 8
    %v2932 = vpop.permute.xlu0 %2931
    %2933 = vrot.lane.b32.xlu0 %v2785, 8
    %v2934 = vpop.permute.xlu0 %2933
    %2935 = vrot.lane.b32.xlu0 %v2786, 8
    %v2936 = vpop.permute.xlu0 %2935
    %2937 = vrot.lane.b32.xlu0 %v2787, 8
    %v2938 = vpop.permute.xlu0 %2937
    %2939 = vrot.lane.b32.xlu0 %v2788, 8
    %v2940 = vpop.permute.xlu0 %2939
    %2941 = vrot.lane.b32.xlu0 %v2789, 8
    %v2942 = vpop.permute.xlu0 %2941
    %2943 = vrot.lane.b32.xlu0 %v2790, 8
    %v2944 = vpop.permute.xlu0 %2943
    %2945 = vrot.lane.b32.xlu0 %v2791, 8
    %v2946 = vpop.permute.xlu0 %2945
    %2947 = vrot.lane.b32.xlu0 %v2792, 8
    %v2948 = vpop.permute.xlu0 %2947
    %2949 = vrot.lane.b32.xlu0 %v2793, 8
    %v2950 = vpop.permute.xlu0 %2949
    %2951 = vrot.lane.b32.xlu0 %v2794, 8
    %v2952 = vpop.permute.xlu0 %2951
    %2953 = vrot.lane.b32.xlu0 %v2795, 8
    %v2954 = vpop.permute.xlu0 %2953
    %2955 = vrot.lane.b32.xlu0 %v2796, 8
    %v2956 = vpop.permute.xlu0 %2955
    %2957 = vrot.lane.b32.xlu0 %v2797, 8
    %v2958 = vpop.permute.xlu0 %2957
    %2959 = vrot.lane.b32.xlu0 %v2798, 8
    %v2960 = vpop.permute.xlu0 %2959
    %2961 = vrot.lane.b32.xlu0 %v2799, 8
    %v2962 = vpop.permute.xlu0 %2961
    %2963 = vrot.lane.b32.xlu0 %v2800, 8
    %v2964 = vpop.permute.xlu0 %2963
    %2965 = vrot.lane.b32.xlu0 %v2801, 8
    %v2966 = vpop.permute.xlu0 %2965
    %2967 = vrot.lane.b32.xlu0 %v2802, 8
    %v2968 = vpop.permute.xlu0 %2967
    %2969 = vrot.lane.b32.xlu0 %v2803, 8
    %v2970 = vpop.permute.xlu0 %2969
    %2971 = vrot.lane.b32.xlu0 %v2804, 8
    %v2972 = vpop.permute.xlu0 %2971
    %2973 = vrot.lane.b32.xlu0 %v2805, 8
    %v2974 = vpop.permute.xlu0 %2973
    %2975 = vrot.lane.b32.xlu0 %v2806, 8
    %v2976 = vpop.permute.xlu0 %2975
    %2977 = vrot.lane.b32.xlu0 %v2807, 8
    %v2978 = vpop.permute.xlu0 %2977
    %2979 = vrot.lane.b32.xlu0 %v2808, 8
    %v2980 = vpop.permute.xlu0 %2979
    %2981 = vrot.lane.b32.xlu0 %v2809, 8
    %v2982 = vpop.permute.xlu0 %2981
    %2983 = vrot.lane.b32.xlu0 %v2810, 8
    %v2984 = vpop.permute.xlu0 %2983
    %2985 = vrot.lane.b32.xlu0 %v2811, 8
    %v2986 = vpop.permute.xlu0 %2985
    %2987 = vrot.lane.b32.xlu0 %v2812, 8
    %v2988 = vpop.permute.xlu0 %2987
    %2989 = vrot.lane.b32.xlu0 %v2813, 8
    %v2990 = vpop.permute.xlu0 %2989
    %2991 = vrot.lane.b32.xlu0 %v2814, 8
    %v2992 = vpop.permute.xlu0 %2991
    %2993 = vrot.lane.b32.xlu0 %v2815, 8
    %v2994 = vpop.permute.xlu0 %2993
    %2995 = vrot.lane.b32.xlu0 %v2816, 8
    %v2996 = vpop.permute.xlu0 %2995
    %2997 = vrot.lane.b32.xlu0 %v2817, 8
    %v2998 = vpop.permute.xlu0 %2997
    %2999 = vrot.lane.b32.xlu0 %v2818, 8
    %v3000 = vpop.permute.xlu0 %2999
    %3001 = vrot.lane.b32.xlu0 %v2819, 8
    %v3002 = vpop.permute.xlu0 %3001
    %3003 = vrot.lane.b32.xlu0 %v2820, 8
    %v3004 = vpop.permute.xlu0 %3003
    %3005 = vrot.lane.b32.xlu0 %v2821, 8
    %v3006 = vpop.permute.xlu0 %3005
    %3007 = vrot.lane.b32.xlu0 %v2822, 8
    %v3008 = vpop.permute.xlu0 %3007
    %3009 = vrot.lane.b32.xlu0 %v2823, 8
    %v3010 = vpop.permute.xlu0 %3009
    %3011 = vrot.lane.b32.xlu0 %v2824, 8
    %v3012 = vpop.permute.xlu0 %3011
    %3013 = vrot.lane.b32.xlu0 %v2825, 8
    %v3014 = vpop.permute.xlu0 %3013
    %v3078 = vmul.f32 %v2638, %v2890
    %v3079 = vmul.f32 %v2640, %v2892
    %v3080 = vmul.f32 %v2642, %v2894
    %v3081 = vmul.f32 %v2644, %v2896
    %v3082 = vmul.f32 %v2646, %v2898
    %v3083 = vmul.f32 %v2648, %v2900
    %v3084 = vmul.f32 %v2650, %v2902
    %v3085 = vmul.f32 %v2652, %v2904
    %v3086 = vmul.f32 %v2654, %v2906
    %v3087 = vmul.f32 %v2656, %v2908
    %v3088 = vmul.f32 %v2658, %v2910
    %v3089 = vmul.f32 %v2660, %v2912
    %v3090 = vmul.f32 %v2662, %v2914
    %v3091 = vmul.f32 %v2664, %v2916
    %v3092 = vmul.f32 %v2666, %v2918
    %v3093 = vmul.f32 %v2668, %v2920
    %v3094 = vmul.f32 %v2670, %v2922
    %v3095 = vmul.f32 %v2672, %v2924
    %v3096 = vmul.f32 %v2674, %v2926
    %v3097 = vmul.f32 %v2676, %v2928
    %v3098 = vmul.f32 %v2678, %v2930
    %v3099 = vmul.f32 %v2680, %v2932
    %v3100 = vmul.f32 %v2682, %v2934
    %v3101 = vmul.f32 %v2684, %v2936
    %v3102 = vmul.f32 %v2686, %v2938
    %v3103 = vmul.f32 %v2688, %v2940
    %v3104 = vmul.f32 %v2690, %v2942
    %v3105 = vmul.f32 %v2692, %v2944
    %v3106 = vmul.f32 %v2694, %v2946
    %v3107 = vmul.f32 %v2696, %v2948
    %v3108 = vmul.f32 %v2698, %v2950
    %v3109 = vmul.f32 %v2700, %v2952
    %v3110 = vmul.f32 %v2702, %v2954
    %v3111 = vmul.f32 %v2704, %v2956
    %v3112 = vmul.f32 %v2706, %v2958
    %v3113 = vmul.f32 %v2708, %v2960
    %v3114 = vmul.f32 %v2710, %v2962
    %v3115 = vmul.f32 %v2712, %v2964
    %v3116 = vmul.f32 %v2714, %v2966
    %v3117 = vmul.f32 %v2716, %v2968
    %v3118 = vmul.f32 %v2718, %v2970
    %v3119 = vmul.f32 %v2720, %v2972
    %v3120 = vmul.f32 %v2722, %v2974
    %v3121 = vmul.f32 %v2724, %v2976
    %v3122 = vmul.f32 %v2726, %v2978
    %v3123 = vmul.f32 %v2728, %v2980
    %v3124 = vmul.f32 %v2730, %v2982
    %v3125 = vmul.f32 %v2732, %v2984
    %v3126 = vmul.f32 %v2734, %v2986
    %v3127 = vmul.f32 %v2736, %v2988
    %v3128 = vmul.f32 %v2738, %v2990
    %v3129 = vmul.f32 %v2740, %v2992
    %v3130 = vmul.f32 %v2742, %v2994
    %v3131 = vmul.f32 %v2744, %v2996
    %v3132 = vmul.f32 %v2746, %v2998
    %v3133 = vmul.f32 %v2748, %v3000
    %v3134 = vmul.f32 %v2750, %v3002
    %v3135 = vmul.f32 %v2752, %v3004
    %v3136 = vmul.f32 %v2754, %v3006
    %v3137 = vmul.f32 %v2756, %v3008
    %v3138 = vmul.f32 %v2758, %v3010
    %v3139 = vmul.f32 %v2760, %v3012
    %v3140 = vmul.f32 %v2762, %v3014
    %3204 = vrot.lane.b32.xlu0 %v3078, 120
    %v3205 = vpop.permute.xlu0 %3204
    %3206 = vrot.lane.b32.xlu0 %v3079, 120
    %v3207 = vpop.permute.xlu0 %3206
    %3208 = vrot.lane.b32.xlu0 %v3080, 120
    %v3209 = vpop.permute.xlu0 %3208
    %3210 = vrot.lane.b32.xlu0 %v3081, 120
    %v3211 = vpop.permute.xlu0 %3210
    %3212 = vrot.lane.b32.xlu0 %v3082, 120
    %v3213 = vpop.permute.xlu0 %3212
    %3214 = vrot.lane.b32.xlu0 %v3083, 120
    %v3215 = vpop.permute.xlu0 %3214
    %3216 = vrot.lane.b32.xlu0 %v3084, 120
    %v3217 = vpop.permute.xlu0 %3216
    %3218 = vrot.lane.b32.xlu0 %v3085, 120
    %v3219 = vpop.permute.xlu0 %3218
    %3220 = vrot.lane.b32.xlu0 %v3086, 120
    %v3221 = vpop.permute.xlu0 %3220
    %3222 = vrot.lane.b32.xlu0 %v3087, 120
    %v3223 = vpop.permute.xlu0 %3222
    %3224 = vrot.lane.b32.xlu0 %v3088, 120
    %v3225 = vpop.permute.xlu0 %3224
    %3226 = vrot.lane.b32.xlu0 %v3089, 120
    %v3227 = vpop.permute.xlu0 %3226
    %3228 = vrot.lane.b32.xlu0 %v3090, 120
    %v3229 = vpop.permute.xlu0 %3228
    %3230 = vrot.lane.b32.xlu0 %v3091, 120
    %v3231 = vpop.permute.xlu0 %3230
    %3232 = vrot.lane.b32.xlu0 %v3092, 120
    %v3233 = vpop.permute.xlu0 %3232
    %3234 = vrot.lane.b32.xlu0 %v3093, 120
    %v3235 = vpop.permute.xlu0 %3234
    %3236 = vrot.lane.b32.xlu0 %v3094, 120
    %v3237 = vpop.permute.xlu0 %3236
    %3238 = vrot.lane.b32.xlu0 %v3095, 120
    %v3239 = vpop.permute.xlu0 %3238
    %3240 = vrot.lane.b32.xlu0 %v3096, 120
    %v3241 = vpop.permute.xlu0 %3240
    %3242 = vrot.lane.b32.xlu0 %v3097, 120
    %v3243 = vpop.permute.xlu0 %3242
    %3244 = vrot.lane.b32.xlu0 %v3098, 120
    %v3245 = vpop.permute.xlu0 %3244
    %3246 = vrot.lane.b32.xlu0 %v3099, 120
    %v3247 = vpop.permute.xlu0 %3246
    %3248 = vrot.lane.b32.xlu0 %v3100, 120
    %v3249 = vpop.permute.xlu0 %3248
    %3250 = vrot.lane.b32.xlu0 %v3101, 120
    %v3251 = vpop.permute.xlu0 %3250
    %3252 = vrot.lane.b32.xlu0 %v3102, 120
    %v3253 = vpop.permute.xlu0 %3252
    %3254 = vrot.lane.b32.xlu0 %v3103, 120
    %v3255 = vpop.permute.xlu0 %3254
    %3256 = vrot.lane.b32.xlu0 %v3104, 120
    %v3257 = vpop.permute.xlu0 %3256
    %3258 = vrot.lane.b32.xlu0 %v3105, 120
    %v3259 = vpop.permute.xlu0 %3258
    %3260 = vrot.lane.b32.xlu0 %v3106, 120
    %v3261 = vpop.permute.xlu0 %3260
    %3262 = vrot.lane.b32.xlu0 %v3107, 120
    %v3263 = vpop.permute.xlu0 %3262
    %3264 = vrot.lane.b32.xlu0 %v3108, 120
    %v3265 = vpop.permute.xlu0 %3264
    %3266 = vrot.lane.b32.xlu0 %v3109, 120
    %v3267 = vpop.permute.xlu0 %3266
    %3268 = vrot.lane.b32.xlu0 %v3110, 120
    %v3269 = vpop.permute.xlu0 %3268
    %3270 = vrot.lane.b32.xlu0 %v3111, 120
    %v3271 = vpop.permute.xlu0 %3270
    %3272 = vrot.lane.b32.xlu0 %v3112, 120
    %v3273 = vpop.permute.xlu0 %3272
    %3274 = vrot.lane.b32.xlu0 %v3113, 120
    %v3275 = vpop.permute.xlu0 %3274
    %3276 = vrot.lane.b32.xlu0 %v3114, 120
    %v3277 = vpop.permute.xlu0 %3276
    %3278 = vrot.lane.b32.xlu0 %v3115, 120
    %v3279 = vpop.permute.xlu0 %3278
    %3280 = vrot.lane.b32.xlu0 %v3116, 120
    %v3281 = vpop.permute.xlu0 %3280
    %3282 = vrot.lane.b32.xlu0 %v3117, 120
    %v3283 = vpop.permute.xlu0 %3282
    %3284 = vrot.lane.b32.xlu0 %v3118, 120
    %v3285 = vpop.permute.xlu0 %3284
    %3286 = vrot.lane.b32.xlu0 %v3119, 120
    %v3287 = vpop.permute.xlu0 %3286
    %3288 = vrot.lane.b32.xlu0 %v3120, 120
    %v3289 = vpop.permute.xlu0 %3288
    %3290 = vrot.lane.b32.xlu0 %v3121, 120
    %v3291 = vpop.permute.xlu0 %3290
    %3292 = vrot.lane.b32.xlu0 %v3122, 120
    %v3293 = vpop.permute.xlu0 %3292
    %3294 = vrot.lane.b32.xlu0 %v3123, 120
    %v3295 = vpop.permute.xlu0 %3294
    %3296 = vrot.lane.b32.xlu0 %v3124, 120
    %v3297 = vpop.permute.xlu0 %3296
    %3298 = vrot.lane.b32.xlu0 %v3125, 120
    %v3299 = vpop.permute.xlu0 %3298
    %3300 = vrot.lane.b32.xlu0 %v3126, 120
    %v3301 = vpop.permute.xlu0 %3300
    %3302 = vrot.lane.b32.xlu0 %v3127, 120
    %v3303 = vpop.permute.xlu0 %3302
    %3304 = vrot.lane.b32.xlu0 %v3128, 120
    %v3305 = vpop.permute.xlu0 %3304
    %3306 = vrot.lane.b32.xlu0 %v3129, 120
    %v3307 = vpop.permute.xlu0 %3306
    %3308 = vrot.lane.b32.xlu0 %v3130, 120
    %v3309 = vpop.permute.xlu0 %3308
    %3310 = vrot.lane.b32.xlu0 %v3131, 120
    %v3311 = vpop.permute.xlu0 %3310
    %3312 = vrot.lane.b32.xlu0 %v3132, 120
    %v3313 = vpop.permute.xlu0 %3312
    %3314 = vrot.lane.b32.xlu0 %v3133, 120
    %v3315 = vpop.permute.xlu0 %3314
    %3316 = vrot.lane.b32.xlu0 %v3134, 120
    %v3317 = vpop.permute.xlu0 %3316
    %3318 = vrot.lane.b32.xlu0 %v3135, 120
    %v3319 = vpop.permute.xlu0 %3318
    %3320 = vrot.lane.b32.xlu0 %v3136, 120
    %v3321 = vpop.permute.xlu0 %3320
    %3322 = vrot.lane.b32.xlu0 %v3137, 120
    %v3323 = vpop.permute.xlu0 %3322
    %3324 = vrot.lane.b32.xlu0 %v3138, 120
    %v3325 = vpop.permute.xlu0 %3324
    %3326 = vrot.lane.b32.xlu0 %v3139, 120
    %v3327 = vpop.permute.xlu0 %3326
    %3328 = vrot.lane.b32.xlu0 %v3140, 120
    %v3329 = vpop.permute.xlu0 %3328
    %v3393 = vadd.f32 %v2511, %v3205
    %v3394 = vadd.f32 %v2512, %v3207
    %v3395 = vadd.f32 %v2513, %v3209
    %v3396 = vadd.f32 %v2514, %v3211
    %v3397 = vadd.f32 %v2515, %v3213
    %v3398 = vadd.f32 %v2516, %v3215
    %v3399 = vadd.f32 %v2517, %v3217
    %v3400 = vadd.f32 %v2518, %v3219
    %v3401 = vadd.f32 %v2519, %v3221
    %v3402 = vadd.f32 %v2520, %v3223
    %v3403 = vadd.f32 %v2521, %v3225
    %v3404 = vadd.f32 %v2522, %v3227
    %v3405 = vadd.f32 %v2523, %v3229
    %v3406 = vadd.f32 %v2524, %v3231
    %v3407 = vadd.f32 %v2525, %v3233
    %v3408 = vadd.f32 %v2526, %v3235
    %v3409 = vadd.f32 %v2527, %v3237
    %v3410 = vadd.f32 %v2528, %v3239
    %v3411 = vadd.f32 %v2529, %v3241
    %v3412 = vadd.f32 %v2530, %v3243
    %v3413 = vadd.f32 %v2531, %v3245
    %v3414 = vadd.f32 %v2532, %v3247
    %v3415 = vadd.f32 %v2533, %v3249
    %v3416 = vadd.f32 %v2534, %v3251
    %v3417 = vadd.f32 %v2535, %v3253
    %v3418 = vadd.f32 %v2536, %v3255
    %v3419 = vadd.f32 %v2537, %v3257
    %v3420 = vadd.f32 %v2538, %v3259
    %v3421 = vadd.f32 %v2539, %v3261
    %v3422 = vadd.f32 %v2540, %v3263
    %v3423 = vadd.f32 %v2541, %v3265
    %v3424 = vadd.f32 %v2542, %v3267
    %v3425 = vadd.f32 %v2543, %v3269
    %v3426 = vadd.f32 %v2544, %v3271
    %v3427 = vadd.f32 %v2545, %v3273
    %v3428 = vadd.f32 %v2546, %v3275
    %v3429 = vadd.f32 %v2547, %v3277
    %v3430 = vadd.f32 %v2548, %v3279
    %v3431 = vadd.f32 %v2549, %v3281
    %v3432 = vadd.f32 %v2550, %v3283
    %v3433 = vadd.f32 %v2551, %v3285
    %v3434 = vadd.f32 %v2552, %v3287
    %v3435 = vadd.f32 %v2553, %v3289
    %v3436 = vadd.f32 %v2554, %v3291
    %v3437 = vadd.f32 %v2555, %v3293
    %v3438 = vadd.f32 %v2556, %v3295
    %v3439 = vadd.f32 %v2557, %v3297
    %v3440 = vadd.f32 %v2558, %v3299
    %v3441 = vadd.f32 %v2559, %v3301
    %v3442 = vadd.f32 %v2560, %v3303
    %v3443 = vadd.f32 %v2561, %v3305
    %v3444 = vadd.f32 %v2562, %v3307
    %v3445 = vadd.f32 %v2563, %v3309
    %v3446 = vadd.f32 %v2564, %v3311
    %v3447 = vadd.f32 %v2565, %v3313
    %v3448 = vadd.f32 %v2566, %v3315
    %v3449 = vadd.f32 %v2567, %v3317
    %v3450 = vadd.f32 %v2568, %v3319
    %v3451 = vadd.f32 %v2569, %v3321
    %v3452 = vadd.f32 %v2570, %v3323
    %v3453 = vadd.f32 %v2571, %v3325
    %v3454 = vadd.f32 %v2572, %v3327
    %v3455 = vadd.f32 %v2573, %v3329
    %v3456 = vld [vmem:[%s2] sm:$0xff]
    %3458 = vrot.lane.b32.xlu0 %v3456, 64
    %v3459 = vpop.permute.xlu0 %3458
    %vm3461 = vcmask 64512
    %v3463 = vsel %vm3461, %v3393, 0
    %v3466 = vsel %vm3461, %v3394, 0
    %v3469 = vsel %vm3461, %v3395, 0
    %v3472 = vsel %vm3461, %v3396, 0
    %v3475 = vsel %vm3461, %v3397, 0
    %v3478 = vsel %vm3461, %v3398, 0
    %v3481 = vsel %vm3461, %v3399, 0
    %v3484 = vsel %vm3461, %v3400, 0
    %v3487 = vsel %vm3461, %v3401, 0
    %v3490 = vsel %vm3461, %v3402, 0
    %v3493 = vsel %vm3461, %v3403, 0
    %v3496 = vsel %vm3461, %v3404, 0
    %v3499 = vsel %vm3461, %v3405, 0
    %v3502 = vsel %vm3461, %v3406, 0
    %v3505 = vsel %vm3461, %v3407, 0
    %v3508 = vsel %vm3461, %v3408, 0
    %v3511 = vsel %vm3461, %v3409, 0
    %v3514 = vsel %vm3461, %v3410, 0
    %v3517 = vsel %vm3461, %v3411, 0
    %v3520 = vsel %vm3461, %v3412, 0
    %v3523 = vsel %vm3461, %v3413, 0
    %v3526 = vsel %vm3461, %v3414, 0
    %v3529 = vsel %vm3461, %v3415, 0
    %v3532 = vsel %vm3461, %v3416, 0
    %v3535 = vsel %vm3461, %v3417, 0
    %v3538 = vsel %vm3461, %v3418, 0
    %v3541 = vsel %vm3461, %v3419, 0
    %v3544 = vsel %vm3461, %v3420, 0
    %v3547 = vsel %vm3461, %v3421, 0
    %v3550 = vsel %vm3461, %v3422, 0
    %v3553 = vsel %vm3461, %v3423, 0
    %v3556 = vsel %vm3461, %v3424, 0
    %v3559 = vsel %vm3461, %v3425, 0
    %v3562 = vsel %vm3461, %v3426, 0
    %v3565 = vsel %vm3461, %v3427, 0
    %v3568 = vsel %vm3461, %v3428, 0
    %v3571 = vsel %vm3461, %v3429, 0
    %v3574 = vsel %vm3461, %v3430, 0
    %v3577 = vsel %vm3461, %v3431, 0
    %v3580 = vsel %vm3461, %v3432, 0
    %v3583 = vsel %vm3461, %v3433, 0
    %v3586 = vsel %vm3461, %v3434, 0
    %v3589 = vsel %vm3461, %v3435, 0
    %v3592 = vsel %vm3461, %v3436, 0
    %v3595 = vsel %vm3461, %v3437, 0
    %v3598 = vsel %vm3461, %v3438, 0
    %v3601 = vsel %vm3461, %v3439, 0
    %v3604 = vsel %vm3461, %v3440, 0
    %v3607 = vsel %vm3461, %v3441, 0
    %v3610 = vsel %vm3461, %v3442, 0
    %v3613 = vsel %vm3461, %v3443, 0
    %v3616 = vsel %vm3461, %v3444, 0
    %v3619 = vsel %vm3461, %v3445, 0
    %v3622 = vsel %vm3461, %v3446, 0
    %v3625 = vsel %vm3461, %v3447, 0
    %v3628 = vsel %vm3461, %v3448, 0
    %v3631 = vsel %vm3461, %v3449, 0
    %v3634 = vsel %vm3461, %v3450, 0
    %v3637 = vsel %vm3461, %v3451, 0
    %v3640 = vsel %vm3461, %v3452, 0
    %v3643 = vsel %vm3461, %v3453, 0
    %v3646 = vsel %vm3461, %v3454, 0
    %v3649 = vsel %vm3461, %v3455, 0
    %3651 = vmatprep.subr.mxu0 0.0
    %3652 = vmatpush1.msra.mxu0 %v3459
    %3653 = vmatprep.subr.mxu0 0.0
    %3654 = vmatpush1.msra.mxu0 0.0
    %3655 = vmatprep.subr.mxu0 0.0
    %3656 = vmatpush1.msra.mxu0 0.0
    %3657 = vmatprep.subr.mxu0 0.0
    %3658 = vmatpush1.msra.mxu0 0.0
    %3659 = vmatprep.subr.mxu0 0.0
    %3660 = vmatpush1.msra.mxu0 0.0
    %3661 = vmatprep.subr.mxu0 0.0
    %3662 = vmatpush1.msra.mxu0 0.0
    %3663 = vmatprep.subr.mxu0 0.0
    %3664 = vmatpush1.msra.mxu0 0.0
    %3665 = vmatprep.subr.mxu0 0.0
    %3666 = vmatpush1.msra.mxu0 0.0
    %3667 = vmatprep.subr.mxu0 0.0
    %3668 = vmatpush1.msra.mxu0 0.0
    %3669 = vmatprep.subr.mxu0 0.0
    %3670 = vmatpush1.msra.mxu0 0.0
    %3671 = vmatprep.subr.mxu0 0.0
    %3672 = vmatpush1.msra.mxu0 0.0
    %3673 = vmatprep.subr.mxu0 0.0
    %3674 = vmatpush1.msra.mxu0 0.0
    %3675 = vmatprep.subr.mxu0 0.0
    %3676 = vmatpush1.msra.mxu0 0.0
    %3677 = vmatprep.subr.mxu0 0.0
    %3678 = vmatpush1.msra.mxu0 0.0
    %3679 = vmatprep.subr.mxu0 0.0
    %3680 = vmatpush1.msra.mxu0 0.0
    %3681 = vmatprep.subr.mxu0 0.0
    %3682 = vmatpush1.msra.mxu0 0.0
    %3683 = vmatprep.subr.mxu0 0.0
    %3684 = vmatpush1.msra.mxu0 0.0
    %3685 = vmatprep.subr.mxu0 0.0
    %3686 = vmatpush1.msra.mxu0 0.0
    %3687 = vmatprep.subr.mxu0 0.0
    %3688 = vmatpush1.msra.mxu0 0.0
    %3689 = vmatprep.subr.mxu0 0.0
    %3690 = vmatpush1.msra.mxu0 0.0
    %3691 = vmatprep.subr.mxu0 0.0
    %3692 = vmatpush1.msra.mxu0 0.0
    %3693 = vmatprep.subr.mxu0 0.0
    %3694 = vmatpush1.msra.mxu0 0.0
    %3695 = vmatprep.subr.mxu0 0.0
    %3696 = vmatpush1.msra.mxu0 0.0
    %3697 = vmatprep.subr.mxu0 0.0
    %3698 = vmatpush1.msra.mxu0 0.0
    %3699 = vmatprep.subr.mxu0 0.0
    %3700 = vmatpush1.msra.mxu0 0.0
    %3701 = vmatprep.subr.mxu0 0.0
    %3702 = vmatpush1.msra.mxu0 0.0
    %3703 = vmatprep.subr.mxu0 0.0
    %3704 = vmatpush1.msra.mxu0 0.0
    %3705 = vmatprep.subr.mxu0 0.0
    %3706 = vmatpush1.msra.mxu0 0.0
    %3707 = vmatprep.subr.mxu0 0.0
    %3708 = vmatpush1.msra.mxu0 0.0
    %3709 = vmatprep.subr.mxu0 0.0
    %3710 = vmatpush1.msra.mxu0 0.0
    %3711 = vmatprep.subr.mxu0 0.0
    %3712 = vmatpush1.msra.mxu0 0.0
    %3713 = vmatprep.subr.mxu0 0.0
    %3714 = vmatpush1.msra.mxu0 0.0
    %3715 = vmatprep.mubr.f32.mxu0 0.0
    %3716 = vmatmul.mubr.f32.gmra.mrb[0].mxu0 %v3463
    %v3717 = vpop.f32.mrb[0].mxu0
    %v3718 = vadd.f32 0.0, %v3717
    %v3719 = vpop.f32.mrb[0].mxu0
    %3720 = vmatprep.mubr.f32.mxu0 0.0
    %3721 = vmatmul.mubr.f32.gmra.mrb[0].mxu0 %v3466
    %v3722 = vpop.f32.mrb[0].mxu0
    %v3723 = vadd.f32 0.0, %v3722
    %v3724 = vpop.f32.mrb[0].mxu0
    %3725 = vmatprep.mubr.f32.mxu0 0.0
    %3726 = vmatmul.mubr.f32.gmra.mrb[0].mxu0 %v3469
    %v3727 = vpop.f32.mrb[0].mxu0
    %v3728 = vadd.f32 0.0, %v3727
    %v3729 = vpop.f32.mrb[0].mxu0
    %3730 = vmatprep.mubr.f32.mxu0 0.0
    %3731 = vmatmul.mubr.f32.gmra.mrb[0].mxu0 %v3472
    %v3732 = vpop.f32.mrb[0].mxu0
    %v3733 = vadd.f32 0.0, %v3732
    %v3734 = vpop.f32.mrb[0].mxu0
    %3735 = vmatprep.mubr.f32.mxu0 0.0
    %3736 = vmatmul.mubr.f32.gmra.mrb[0].mxu0 %v3475
    %v3737 = vpop.f32.mrb[0].mxu0
    %v3738 = vadd.f32 0.0, %v3737
    %v3739 = vpop.f32.mrb[0].mxu0
    %3740 = vmatprep.mubr.f32.mxu0 0.0
    %3741 = vmatmul.mubr.f32.gmra.mrb[0].mxu0 %v3478
    %v3742 = vpop.f32.mrb[0].mxu0
    %v3743 = vadd.f32 0.0, %v3742
    %v3744 = vpop.f32.mrb[0].mxu0
    %3745 = vmatprep.mubr.f32.mxu0 0.0
    %3746 = vmatmul.mubr.f32.gmra.mrb[0].mxu0 %v3481
    %v3747 = vpop.f32.mrb[0].mxu0
    %v3748 = vadd.f32 0.0, %v3747
    %v3749 = vpop.f32.mrb[0].mxu0
    %3750 = vmatprep.mubr.f32.mxu0 0.0
    %3751 = vmatmul.mubr.f32.gmra.mrb[0].mxu0 %v3484
    %v3752 = vpop.f32.mrb[0].mxu0
    %v3753 = vadd.f32 0.0, %v3752
    %v3754 = vpop.f32.mrb[0].mxu0
    %3755 = vmatprep.mubr.f32.mxu0 0.0
    %3756 = vmatmul.mubr.f32.gmra.mrb[0].mxu0 %v3487
    %v3757 = vpop.f32.mrb[0].mxu0
    %v3758 = vadd.f32 0.0, %v3757
    %v3759 = vpop.f32.mrb[0].mxu0
    %3760 = vmatprep.mubr.f32.mxu0 0.0
    %3761 = vmatmul.mubr.f32.gmra.mrb[0].mxu0 %v3490
    %v3762 = vpop.f32.mrb[0].mxu0
    %v3763 = vadd.f32 0.0, %v3762
    %v3764 = vpop.f32.mrb[0].mxu0
    %3765 = vmatprep.mubr.f32.mxu0 0.0
    %3766 = vmatmul.mubr.f32.gmra.mrb[0].mxu0 %v3493
    %v3767 = vpop.f32.mrb[0].mxu0
    %v3768 = vadd.f32 0.0, %v3767
    %v3769 = vpop.f32.mrb[0].mxu0
    %3770 = vmatprep.mubr.f32.mxu0 0.0
    %3771 = vmatmul.mubr.f32.gmra.mrb[0].mxu0 %v3496
    %v3772 = vpop.f32.mrb[0].mxu0
    %v3773 = vadd.f32 0.0, %v3772
    %v3774 = vpop.f32.mrb[0].mxu0
    %3775 = vmatprep.mubr.f32.mxu0 0.0
    %3776 = vmatmul.mubr.f32.gmra.mrb[0].mxu0 %v3499
    %v3777 = vpop.f32.mrb[0].mxu0
    %v3778 = vadd.f32 0.0, %v3777
    %v3779 = vpop.f32.mrb[0].mxu0
    %3780 = vmatprep.mubr.f32.mxu0 0.0
    %3781 = vmatmul.mubr.f32.gmra.mrb[0].mxu0 %v3502
    %v3782 = vpop.f32.mrb[0].mxu0
    %v3783 = vadd.f32 0.0, %v3782
    %v3784 = vpop.f32.mrb[0].mxu0
    %3785 = vmatprep.mubr.f32.mxu0 0.0
    %3786 = vmatmul.mubr.f32.gmra.mrb[0].mxu0 %v3505
    %v3787 = vpop.f32.mrb[0].mxu0
    %v3788 = vadd.f32 0.0, %v3787
    %v3789 = vpop.f32.mrb[0].mxu0
    %3790 = vmatprep.mubr.f32.mxu0 0.0
    %3791 = vmatmul.mubr.f32.gmra.mrb[0].mxu0 %v3508
    %v3792 = vpop.f32.mrb[0].mxu0
    %v3793 = vadd.f32 0.0, %v3792
    %v3794 = vpop.f32.mrb[0].mxu0
    %3795 = vmatprep.mubr.f32.mxu0 0.0
    %3796 = vmatmul.mubr.f32.gmra.mrb[0].mxu0 %v3511
    %v3797 = vpop.f32.mrb[0].mxu0
    %v3798 = vadd.f32 0.0, %v3797
    %v3799 = vpop.f32.mrb[0].mxu0
    %3800 = vmatprep.mubr.f32.mxu0 0.0
    %3801 = vmatmul.mubr.f32.gmra.mrb[0].mxu0 %v3514
    %v3802 = vpop.f32.mrb[0].mxu0
    %v3803 = vadd.f32 0.0, %v3802
    %v3804 = vpop.f32.mrb[0].mxu0
    %3805 = vmatprep.mubr.f32.mxu0 0.0
    %3806 = vmatmul.mubr.f32.gmra.mrb[0].mxu0 %v3517
    %v3807 = vpop.f32.mrb[0].mxu0
    %v3808 = vadd.f32 0.0, %v3807
    %v3809 = vpop.f32.mrb[0].mxu0
    %3810 = vmatprep.mubr.f32.mxu0 0.0
    %3811 = vmatmul.mubr.f32.gmra.mrb[0].mxu0 %v3520
    %v3812 = vpop.f32.mrb[0].mxu0
    %v3813 = vadd.f32 0.0, %v3812
    %v3814 = vpop.f32.mrb[0].mxu0
    %3815 = vmatprep.mubr.f32.mxu0 0.0
    %3816 = vmatmul.mubr.f32.gmra.mrb[0].mxu0 %v3523
    %v3817 = vpop.f32.mrb[0].mxu0
    %v3818 = vadd.f32 0.0, %v3817
    %v3819 = vpop.f32.mrb[0].mxu0
    %3820 = vmatprep.mubr.f32.mxu0 0.0
    %3821 = vmatmul.mubr.f32.gmra.mrb[0].mxu0 %v3526
    %v3822 = vpop.f32.mrb[0].mxu0
    %v3823 = vadd.f32 0.0, %v3822
    %v3824 = vpop.f32.mrb[0].mxu0
    %3825 = vmatprep.mubr.f32.mxu0 0.0
    %3826 = vmatmul.mubr.f32.gmra.mrb[0].mxu0 %v3529
    %v3827 = vpop.f32.mrb[0].mxu0
    %v3828 = vadd.f32 0.0, %v3827
    %v3829 = vpop.f32.mrb[0].mxu0
    %3830 = vmatprep.mubr.f32.mxu0 0.0
    %3831 = vmatmul.mubr.f32.gmra.mrb[0].mxu0 %v3532
    %v3832 = vpop.f32.mrb[0].mxu0
    %v3833 = vadd.f32 0.0, %v3832
    %v3834 = vpop.f32.mrb[0].mxu0
    %3835 = vmatprep.mubr.f32.mxu0 0.0
    %3836 = vmatmul.mubr.f32.gmra.mrb[0].mxu0 %v3535
    %v3837 = vpop.f32.mrb[0].mxu0
    %v3838 = vadd.f32 0.0, %v3837
    %v3839 = vpop.f32.mrb[0].mxu0
    %3840 = vmatprep.mubr.f32.mxu0 0.0
    %3841 = vmatmul.mubr.f32.gmra.mrb[0].mxu0 %v3538
    %v3842 = vpop.f32.mrb[0].mxu0
    %v3843 = vadd.f32 0.0, %v3842
    %v3844 = vpop.f32.mrb[0].mxu0
    %3845 = vmatprep.mubr.f32.mxu0 0.0
    %3846 = vmatmul.mubr.f32.gmra.mrb[0].mxu0 %v3541
    %v3847 = vpop.f32.mrb[0].mxu0
    %v3848 = vadd.f32 0.0, %v3847
    %v3849 = vpop.f32.mrb[0].mxu0
    %3850 = vmatprep.mubr.f32.mxu0 0.0
    %3851 = vmatmul.mubr.f32.gmra.mrb[0].mxu0 %v3544
    %v3852 = vpop.f32.mrb[0].mxu0
    %v3853 = vadd.f32 0.0, %v3852
    %v3854 = vpop.f32.mrb[0].mxu0
    %3855 = vmatprep.mubr.f32.mxu0 0.0
    %3856 = vmatmul.mubr.f32.gmra.mrb[0].mxu0 %v3547
    %v3857 = vpop.f32.mrb[0].mxu0
    %v3858 = vadd.f32 0.0, %v3857
    %v3859 = vpop.f32.mrb[0].mxu0
    %3860 = vmatprep.mubr.f32.mxu0 0.0
    %3861 = vmatmul.mubr.f32.gmra.mrb[0].mxu0 %v3550
    %v3862 = vpop.f32.mrb[0].mxu0
    %v3863 = vadd.f32 0.0, %v3862
    %v3864 = vpop.f32.mrb[0].mxu0
    %3865 = vmatprep.mubr.f32.mxu0 0.0
    %3866 = vmatmul.mubr.f32.gmra.mrb[0].mxu0 %v3553
    %v3867 = vpop.f32.mrb[0].mxu0
    %v3868 = vadd.f32 0.0, %v3867
    %v3869 = vpop.f32.mrb[0].mxu0
    %3870 = vmatprep.mubr.f32.mxu0 0.0
    %3871 = vmatmul.mubr.f32.gmra.mrb[0].mxu0 %v3556
    %v3872 = vpop.f32.mrb[0].mxu0
    %v3873 = vadd.f32 0.0, %v3872
    %v3874 = vpop.f32.mrb[0].mxu0
    %3875 = vmatprep.mubr.f32.mxu0 0.0
    %3876 = vmatmul.mubr.f32.gmra.mrb[0].mxu0 %v3559
    %v3877 = vpop.f32.mrb[0].mxu0
    %v3878 = vadd.f32 0.0, %v3877
    %v3879 = vpop.f32.mrb[0].mxu0
    %3880 = vmatprep.mubr.f32.mxu0 0.0
    %3881 = vmatmul.mubr.f32.gmra.mrb[0].mxu0 %v3562
    %v3882 = vpop.f32.mrb[0].mxu0
    %v3883 = vadd.f32 0.0, %v3882
    %v3884 = vpop.f32.mrb[0].mxu0
    %3885 = vmatprep.mubr.f32.mxu0 0.0
    %3886 = vmatmul.mubr.f32.gmra.mrb[0].mxu0 %v3565
    %v3887 = vpop.f32.mrb[0].mxu0
    %v3888 = vadd.f32 0.0, %v3887
    %v3889 = vpop.f32.mrb[0].mxu0
    %3890 = vmatprep.mubr.f32.mxu0 0.0
    %3891 = vmatmul.mubr.f32.gmra.mrb[0].mxu0 %v3568
    %v3892 = vpop.f32.mrb[0].mxu0
    %v3893 = vadd.f32 0.0, %v3892
    %v3894 = vpop.f32.mrb[0].mxu0
    %3895 = vmatprep.mubr.f32.mxu0 0.0
    %3896 = vmatmul.mubr.f32.gmra.mrb[0].mxu0 %v3571
    %v3897 = vpop.f32.mrb[0].mxu0
    %v3898 = vadd.f32 0.0, %v3897
    %v3899 = vpop.f32.mrb[0].mxu0
    %3900 = vmatprep.mubr.f32.mxu0 0.0
    %3901 = vmatmul.mubr.f32.gmra.mrb[0].mxu0 %v3574
    %v3902 = vpop.f32.mrb[0].mxu0
    %v3903 = vadd.f32 0.0, %v3902
    %v3904 = vpop.f32.mrb[0].mxu0
    %3905 = vmatprep.mubr.f32.mxu0 0.0
    %3906 = vmatmul.mubr.f32.gmra.mrb[0].mxu0 %v3577
    %v3907 = vpop.f32.mrb[0].mxu0
    %v3908 = vadd.f32 0.0, %v3907
    %v3909 = vpop.f32.mrb[0].mxu0
    %3910 = vmatprep.mubr.f32.mxu0 0.0
    %3911 = vmatmul.mubr.f32.gmra.mrb[0].mxu0 %v3580
    %v3912 = vpop.f32.mrb[0].mxu0
    %v3913 = vadd.f32 0.0, %v3912
    %v3914 = vpop.f32.mrb[0].mxu0
    %3915 = vmatprep.mubr.f32.mxu0 0.0
    %3916 = vmatmul.mubr.f32.gmra.mrb[0].mxu0 %v3583
    %v3917 = vpop.f32.mrb[0].mxu0
    %v3918 = vadd.f32 0.0, %v3917
    %v3919 = vpop.f32.mrb[0].mxu0
    %3920 = vmatprep.mubr.f32.mxu0 0.0
    %3921 = vmatmul.mubr.f32.gmra.mrb[0].mxu0 %v3586
    %v3922 = vpop.f32.mrb[0].mxu0
    %v3923 = vadd.f32 0.0, %v3922
    %v3924 = vpop.f32.mrb[0].mxu0
    %3925 = vmatprep.mubr.f32.mxu0 0.0
    %3926 = vmatmul.mubr.f32.gmra.mrb[0].mxu0 %v3589
    %v3927 = vpop.f32.mrb[0].mxu0
    %v3928 = vadd.f32 0.0, %v3927
    %v3929 = vpop.f32.mrb[0].mxu0
    %3930 = vmatprep.mubr.f32.mxu0 0.0
    %3931 = vmatmul.mubr.f32.gmra.mrb[0].mxu0 %v3592
    %v3932 = vpop.f32.mrb[0].mxu0
    %v3933 = vadd.f32 0.0, %v3932
    %v3934 = vpop.f32.mrb[0].mxu0
    %3935 = vmatprep.mubr.f32.mxu0 0.0
    %3936 = vmatmul.mubr.f32.gmra.mrb[0].mxu0 %v3595
    %v3937 = vpop.f32.mrb[0].mxu0
    %v3938 = vadd.f32 0.0, %v3937
    %v3939 = vpop.f32.mrb[0].mxu0
    %3940 = vmatprep.mubr.f32.mxu0 0.0
    %3941 = vmatmul.mubr.f32.gmra.mrb[0].mxu0 %v3598
    %v3942 = vpop.f32.mrb[0].mxu0
    %v3943 = vadd.f32 0.0, %v3942
    %v3944 = vpop.f32.mrb[0].mxu0
    %3945 = vmatprep.mubr.f32.mxu0 0.0
    %3946 = vmatmul.mubr.f32.gmra.mrb[0].mxu0 %v3601
    %v3947 = vpop.f32.mrb[0].mxu0
    %v3948 = vadd.f32 0.0, %v3947
    %v3949 = vpop.f32.mrb[0].mxu0
    %3950 = vmatprep.mubr.f32.mxu0 0.0
    %3951 = vmatmul.mubr.f32.gmra.mrb[0].mxu0 %v3604
    %v3952 = vpop.f32.mrb[0].mxu0
    %v3953 = vadd.f32 0.0, %v3952
    %v3954 = vpop.f32.mrb[0].mxu0
    %3955 = vmatprep.mubr.f32.mxu0 0.0
    %3956 = vmatmul.mubr.f32.gmra.mrb[0].mxu0 %v3607
    %v3957 = vpop.f32.mrb[0].mxu0
    %v3958 = vadd.f32 0.0, %v3957
    %v3959 = vpop.f32.mrb[0].mxu0
    %3960 = vmatprep.mubr.f32.mxu0 0.0
    %3961 = vmatmul.mubr.f32.gmra.mrb[0].mxu0 %v3610
    %v3962 = vpop.f32.mrb[0].mxu0
    %v3963 = vadd.f32 0.0, %v3962
    %v3964 = vpop.f32.mrb[0].mxu0
    %3965 = vmatprep.mubr.f32.mxu0 0.0
    %3966 = vmatmul.mubr.f32.gmra.mrb[0].mxu0 %v3613
    %v3967 = vpop.f32.mrb[0].mxu0
    %v3968 = vadd.f32 0.0, %v3967
    %v3969 = vpop.f32.mrb[0].mxu0
    %3970 = vmatprep.mubr.f32.mxu0 0.0
    %3971 = vmatmul.mubr.f32.gmra.mrb[0].mxu0 %v3616
    %v3972 = vpop.f32.mrb[0].mxu0
    %v3973 = vadd.f32 0.0, %v3972
    %v3974 = vpop.f32.mrb[0].mxu0
    %3975 = vmatprep.mubr.f32.mxu0 0.0
    %3976 = vmatmul.mubr.f32.gmra.mrb[0].mxu0 %v3619
    %v3977 = vpop.f32.mrb[0].mxu0
    %v3978 = vadd.f32 0.0, %v3977
    %v3979 = vpop.f32.mrb[0].mxu0
    %3980 = vmatprep.mubr.f32.mxu0 0.0
    %3981 = vmatmul.mubr.f32.gmra.mrb[0].mxu0 %v3622
    %v3982 = vpop.f32.mrb[0].mxu0
    %v3983 = vadd.f32 0.0, %v3982
    %v3984 = vpop.f32.mrb[0].mxu0
    %3985 = vmatprep.mubr.f32.mxu0 0.0
    %3986 = vmatmul.mubr.f32.gmra.mrb[0].mxu0 %v3625
    %v3987 = vpop.f32.mrb[0].mxu0
    %v3988 = vadd.f32 0.0, %v3987
    %v3989 = vpop.f32.mrb[0].mxu0
    %3990 = vmatprep.mubr.f32.mxu0 0.0
    %3991 = vmatmul.mubr.f32.gmra.mrb[0].mxu0 %v3628
    %v3992 = vpop.f32.mrb[0].mxu0
    %v3993 = vadd.f32 0.0, %v3992
    %v3994 = vpop.f32.mrb[0].mxu0
    %3995 = vmatprep.mubr.f32.mxu0 0.0
    %3996 = vmatmul.mubr.f32.gmra.mrb[0].mxu0 %v3631
    %v3997 = vpop.f32.mrb[0].mxu0
    %v3998 = vadd.f32 0.0, %v3997
    %v3999 = vpop.f32.mrb[0].mxu0
    %4000 = vmatprep.mubr.f32.mxu0 0.0
    %4001 = vmatmul.mubr.f32.gmra.mrb[0].mxu0 %v3634
    %v4002 = vpop.f32.mrb[0].mxu0
    %v4003 = vadd.f32 0.0, %v4002
    %v4004 = vpop.f32.mrb[0].mxu0
    %4005 = vmatprep.mubr.f32.mxu0 0.0
    %4006 = vmatmul.mubr.f32.gmra.mrb[0].mxu0 %v3637
    %v4007 = vpop.f32.mrb[0].mxu0
    %v4008 = vadd.f32 0.0, %v4007
    %v4009 = vpop.f32.mrb[0].mxu0
    %4010 = vmatprep.mubr.f32.mxu0 0.0
    %4011 = vmatmul.mubr.f32.gmra.mrb[0].mxu0 %v3640
    %v4012 = vpop.f32.mrb[0].mxu0
    %v4013 = vadd.f32 0.0, %v4012
    %v4014 = vpop.f32.mrb[0].mxu0
    %4015 = vmatprep.mubr.f32.mxu0 0.0
    %4016 = vmatmul.mubr.f32.gmra.mrb[0].mxu0 %v3643
    %v4017 = vpop.f32.mrb[0].mxu0
    %v4018 = vadd.f32 0.0, %v4017
    %v4019 = vpop.f32.mrb[0].mxu0
    %4020 = vmatprep.mubr.f32.mxu0 0.0
    %4021 = vmatmul.mubr.f32.gmra.mrb[0].mxu0 %v3646
    %v4022 = vpop.f32.mrb[0].mxu0
    %v4023 = vadd.f32 0.0, %v4022
    %v4024 = vpop.f32.mrb[0].mxu0
    %4025 = vmatprep.mubr.f32.mxu0 0.0
    %4026 = vmatmul.mubr.f32.gmra.mrb[0].mxu0 %v3649
    %v4027 = vpop.f32.mrb[0].mxu0
    %v4028 = vadd.f32 0.0, %v4027
    %v4029 = vpop.f32.mrb[0].mxu0
    %4030 = vdwg.mxu0
    %4031 = vrot.lane.b32.xlu0 %v88, 80
    %v4032 = vpop.permute.xlu0 %4031
    %v4034 = vadd.f32 %v3718, %v4032
    %v4035 = vadd.f32 %v3723, %v4032
    %v4036 = vadd.f32 %v3728, %v4032
    %v4037 = vadd.f32 %v3733, %v4032
    %v4038 = vadd.f32 %v3738, %v4032
    %v4039 = vadd.f32 %v3743, %v4032
    %v4040 = vadd.f32 %v3748, %v4032
    %v4041 = vadd.f32 %v3753, %v4032
    %v4042 = vadd.f32 %v3758, %v4032
    %v4043 = vadd.f32 %v3763, %v4032
    %v4044 = vadd.f32 %v3768, %v4032
    %v4045 = vadd.f32 %v3773, %v4032
    %v4046 = vadd.f32 %v3778, %v4032
    %v4047 = vadd.f32 %v3783, %v4032
    %v4048 = vadd.f32 %v3788, %v4032
    %v4049 = vadd.f32 %v3793, %v4032
    %v4050 = vadd.f32 %v3798, %v4032
    %v4051 = vadd.f32 %v3803, %v4032
    %v4052 = vadd.f32 %v3808, %v4032
    %v4053 = vadd.f32 %v3813, %v4032
    %v4054 = vadd.f32 %v3818, %v4032
    %v4055 = vadd.f32 %v3823, %v4032
    %v4056 = vadd.f32 %v3828, %v4032
    %v4057 = vadd.f32 %v3833, %v4032
    %v4058 = vadd.f32 %v3838, %v4032
    %v4059 = vadd.f32 %v3843, %v4032
    %v4060 = vadd.f32 %v3848, %v4032
    %v4061 = vadd.f32 %v3853, %v4032
    %v4062 = vadd.f32 %v3858, %v4032
    %v4063 = vadd.f32 %v3863, %v4032
    %v4064 = vadd.f32 %v3868, %v4032
    %v4065 = vadd.f32 %v3873, %v4032
    %v4066 = vadd.f32 %v3878, %v4032
    %v4067 = vadd.f32 %v3883, %v4032
    %v4068 = vadd.f32 %v3888, %v4032
    %v4069 = vadd.f32 %v3893, %v4032
    %v4070 = vadd.f32 %v3898, %v4032
    %v4071 = vadd.f32 %v3903, %v4032
    %v4072 = vadd.f32 %v3908, %v4032
    %v4073 = vadd.f32 %v3913, %v4032
    %v4074 = vadd.f32 %v3918, %v4032
    %v4075 = vadd.f32 %v3923, %v4032
    %v4076 = vadd.f32 %v3928, %v4032
    %v4077 = vadd.f32 %v3933, %v4032
    %v4078 = vadd.f32 %v3938, %v4032
    %v4079 = vadd.f32 %v3943, %v4032
    %v4080 = vadd.f32 %v3948, %v4032
    %v4081 = vadd.f32 %v3953, %v4032
    %v4082 = vadd.f32 %v3958, %v4032
    %v4083 = vadd.f32 %v3963, %v4032
    %v4084 = vadd.f32 %v3968, %v4032
    %v4085 = vadd.f32 %v3973, %v4032
    %v4086 = vadd.f32 %v3978, %v4032
    %v4087 = vadd.f32 %v3983, %v4032
    %v4088 = vadd.f32 %v3988, %v4032
    %v4089 = vadd.f32 %v3993, %v4032
    %v4090 = vadd.f32 %v3998, %v4032
    %v4091 = vadd.f32 %v4003, %v4032
    %v4092 = vadd.f32 %v4008, %v4032
    %v4093 = vadd.f32 %v4013, %v4032
    %v4094 = vadd.f32 %v4018, %v4032
    %v4095 = vadd.f32 %v4023, %v4032
    %v4096 = vadd.f32 %v4028, %v4032
    %vm4097 = vcmp.gt.f32.partialorder %v4034, 0.0
    %vm4098 = vcmp.gt.f32.partialorder %v4035, 0.0
    %vm4099 = vcmp.gt.f32.partialorder %v4036, 0.0
    %vm4100 = vcmp.gt.f32.partialorder %v4037, 0.0
    %vm4101 = vcmp.gt.f32.partialorder %v4038, 0.0
    %vm4102 = vcmp.gt.f32.partialorder %v4039, 0.0
    %vm4103 = vcmp.gt.f32.partialorder %v4040, 0.0
    %vm4104 = vcmp.gt.f32.partialorder %v4041, 0.0
    %vm4105 = vcmp.gt.f32.partialorder %v4042, 0.0
    %vm4106 = vcmp.gt.f32.partialorder %v4043, 0.0
    %vm4107 = vcmp.gt.f32.partialorder %v4044, 0.0
    %vm4108 = vcmp.gt.f32.partialorder %v4045, 0.0
    %vm4109 = vcmp.gt.f32.partialorder %v4046, 0.0
    %vm4110 = vcmp.gt.f32.partialorder %v4047, 0.0
    %vm4111 = vcmp.gt.f32.partialorder %v4048, 0.0
    %vm4112 = vcmp.gt.f32.partialorder %v4049, 0.0
    %vm4113 = vcmp.gt.f32.partialorder %v4050, 0.0
    %vm4114 = vcmp.gt.f32.partialorder %v4051, 0.0
    %vm4115 = vcmp.gt.f32.partialorder %v4052, 0.0
    %vm4116 = vcmp.gt.f32.partialorder %v4053, 0.0
    %vm4117 = vcmp.gt.f32.partialorder %v4054, 0.0
    %vm4118 = vcmp.gt.f32.partialorder %v4055, 0.0
    %vm4119 = vcmp.gt.f32.partialorder %v4056, 0.0
    %vm4120 = vcmp.gt.f32.partialorder %v4057, 0.0
    %vm4121 = vcmp.gt.f32.partialorder %v4058, 0.0
    %vm4122 = vcmp.gt.f32.partialorder %v4059, 0.0
    %vm4123 = vcmp.gt.f32.partialorder %v4060, 0.0
    %vm4124 = vcmp.gt.f32.partialorder %v4061, 0.0
    %vm4125 = vcmp.gt.f32.partialorder %v4062, 0.0
    %vm4126 = vcmp.gt.f32.partialorder %v4063, 0.0
    %vm4127 = vcmp.gt.f32.partialorder %v4064, 0.0
    %vm4128 = vcmp.gt.f32.partialorder %v4065, 0.0
    %vm4129 = vcmp.gt.f32.partialorder %v4066, 0.0
    %vm4130 = vcmp.gt.f32.partialorder %v4067, 0.0
    %vm4131 = vcmp.gt.f32.partialorder %v4068, 0.0
    %vm4132 = vcmp.gt.f32.partialorder %v4069, 0.0
    %vm4133 = vcmp.gt.f32.partialorder %v4070, 0.0
    %vm4134 = vcmp.gt.f32.partialorder %v4071, 0.0
    %vm4135 = vcmp.gt.f32.partialorder %v4072, 0.0
    %vm4136 = vcmp.gt.f32.partialorder %v4073, 0.0
    %vm4137 = vcmp.gt.f32.partialorder %v4074, 0.0
    %vm4138 = vcmp.gt.f32.partialorder %v4075, 0.0
    %vm4139 = vcmp.gt.f32.partialorder %v4076, 0.0
    %vm4140 = vcmp.gt.f32.partialorder %v4077, 0.0
    %vm4141 = vcmp.gt.f32.partialorder %v4078, 0.0
    %vm4142 = vcmp.gt.f32.partialorder %v4079, 0.0
    %vm4143 = vcmp.gt.f32.partialorder %v4080, 0.0
    %vm4144 = vcmp.gt.f32.partialorder %v4081, 0.0
    %vm4145 = vcmp.gt.f32.partialorder %v4082, 0.0
    %vm4146 = vcmp.gt.f32.partialorder %v4083, 0.0
    %vm4147 = vcmp.gt.f32.partialorder %v4084, 0.0
    %vm4148 = vcmp.gt.f32.partialorder %v4085, 0.0
    %vm4149 = vcmp.gt.f32.partialorder %v4086, 0.0
    %vm4150 = vcmp.gt.f32.partialorder %v4087, 0.0
    %vm4151 = vcmp.gt.f32.partialorder %v4088, 0.0
    %vm4152 = vcmp.gt.f32.partialorder %v4089, 0.0
    %vm4153 = vcmp.gt.f32.partialorder %v4090, 0.0
    %vm4154 = vcmp.gt.f32.partialorder %v4091, 0.0
    %vm4155 = vcmp.gt.f32.partialorder %v4092, 0.0
    %vm4156 = vcmp.gt.f32.partialorder %v4093, 0.0
    %vm4157 = vcmp.gt.f32.partialorder %v4094, 0.0
    %vm4158 = vcmp.gt.f32.partialorder %v4095, 0.0
    %vm4159 = vcmp.gt.f32.partialorder %v4096, 0.0
    %v4160 = vmul.f32 %v4034, 0.01
    %v4161 = vmul.f32 %v4035, 0.01
    %v4162 = vmul.f32 %v4036, 0.01
    %v4163 = vmul.f32 %v4037, 0.01
    %v4164 = vmul.f32 %v4038, 0.01
    %v4165 = vmul.f32 %v4039, 0.01
    %v4166 = vmul.f32 %v4040, 0.01
    %v4167 = vmul.f32 %v4041, 0.01
    %v4168 = vmul.f32 %v4042, 0.01
    %v4169 = vmul.f32 %v4043, 0.01
    %v4170 = vmul.f32 %v4044, 0.01
    %v4171 = vmul.f32 %v4045, 0.01
    %v4172 = vmul.f32 %v4046, 0.01
    %v4173 = vmul.f32 %v4047, 0.01
    %v4174 = vmul.f32 %v4048, 0.01
    %v4175 = vmul.f32 %v4049, 0.01
    %v4176 = vmul.f32 %v4050, 0.01
    %v4177 = vmul.f32 %v4051, 0.01
    %v4178 = vmul.f32 %v4052, 0.01
    %v4179 = vmul.f32 %v4053, 0.01
    %v4180 = vmul.f32 %v4054, 0.01
    %v4181 = vmul.f32 %v4055, 0.01
    %v4182 = vmul.f32 %v4056, 0.01
    %v4183 = vmul.f32 %v4057, 0.01
    %v4184 = vmul.f32 %v4058, 0.01
    %v4185 = vmul.f32 %v4059, 0.01
    %v4186 = vmul.f32 %v4060, 0.01
    %v4187 = vmul.f32 %v4061, 0.01
    %v4188 = vmul.f32 %v4062, 0.01
    %v4189 = vmul.f32 %v4063, 0.01
    %v4190 = vmul.f32 %v4064, 0.01
    %v4191 = vmul.f32 %v4065, 0.01
    %v4192 = vmul.f32 %v4066, 0.01
    %v4193 = vmul.f32 %v4067, 0.01
    %v4194 = vmul.f32 %v4068, 0.01
    %v4195 = vmul.f32 %v4069, 0.01
    %v4196 = vmul.f32 %v4070, 0.01
    %v4197 = vmul.f32 %v4071, 0.01
    %v4198 = vmul.f32 %v4072, 0.01
    %v4199 = vmul.f32 %v4073, 0.01
    %v4200 = vmul.f32 %v4074, 0.01
    %v4201 = vmul.f32 %v4075, 0.01
    %v4202 = vmul.f32 %v4076, 0.01
    %v4203 = vmul.f32 %v4077, 0.01
    %v4204 = vmul.f32 %v4078, 0.01
    %v4205 = vmul.f32 %v4079, 0.01
    %v4206 = vmul.f32 %v4080, 0.01
    %v4207 = vmul.f32 %v4081, 0.01
    %v4208 = vmul.f32 %v4082, 0.01
    %v4209 = vmul.f32 %v4083, 0.01
    %v4210 = vmul.f32 %v4084, 0.01
    %v4211 = vmul.f32 %v4085, 0.01
    %v4212 = vmul.f32 %v4086, 0.01
    %v4213 = vmul.f32 %v4087, 0.01
    %v4214 = vmul.f32 %v4088, 0.01
    %v4215 = vmul.f32 %v4089, 0.01
    %v4216 = vmul.f32 %v4090, 0.01
    %v4217 = vmul.f32 %v4091, 0.01
    %v4218 = vmul.f32 %v4092, 0.01
    %v4219 = vmul.f32 %v4093, 0.01
    %v4220 = vmul.f32 %v4094, 0.01
    %v4221 = vmul.f32 %v4095, 0.01
    %v4222 = vmul.f32 %v4096, 0.01
    %v4223 = vsel %vm4097, %v4034, %v4160
    %v4224 = vsel %vm4098, %v4035, %v4161
    %v4225 = vsel %vm4099, %v4036, %v4162
    %v4226 = vsel %vm4100, %v4037, %v4163
    %v4227 = vsel %vm4101, %v4038, %v4164
    %v4228 = vsel %vm4102, %v4039, %v4165
    %v4229 = vsel %vm4103, %v4040, %v4166
    %v4230 = vsel %vm4104, %v4041, %v4167
    %v4231 = vsel %vm4105, %v4042, %v4168
    %v4232 = vsel %vm4106, %v4043, %v4169
    %v4233 = vsel %vm4107, %v4044, %v4170
    %v4234 = vsel %vm4108, %v4045, %v4171
    %v4235 = vsel %vm4109, %v4046, %v4172
    %v4236 = vsel %vm4110, %v4047, %v4173
    %v4237 = vsel %vm4111, %v4048, %v4174
    %v4238 = vsel %vm4112, %v4049, %v4175
    %v4239 = vsel %vm4113, %v4050, %v4176
    %v4240 = vsel %vm4114, %v4051, %v4177
    %v4241 = vsel %vm4115, %v4052, %v4178
    %v4242 = vsel %vm4116, %v4053, %v4179
    %v4243 = vsel %vm4117, %v4054, %v4180
    %v4244 = vsel %vm4118, %v4055, %v4181
    %v4245 = vsel %vm4119, %v4056, %v4182
    %v4246 = vsel %vm4120, %v4057, %v4183
    %v4247 = vsel %vm4121, %v4058, %v4184
    %v4248 = vsel %vm4122, %v4059, %v4185
    %v4249 = vsel %vm4123, %v4060, %v4186
    %v4250 = vsel %vm4124, %v4061, %v4187
    %v4251 = vsel %vm4125, %v4062, %v4188
    %v4252 = vsel %vm4126, %v4063, %v4189
    %v4253 = vsel %vm4127, %v4064, %v4190
    %v4254 = vsel %vm4128, %v4065, %v4191
    %v4255 = vsel %vm4129, %v4066, %v4192
    %v4256 = vsel %vm4130, %v4067, %v4193
    %v4257 = vsel %vm4131, %v4068, %v4194
    %v4258 = vsel %vm4132, %v4069, %v4195
    %v4259 = vsel %vm4133, %v4070, %v4196
    %v4260 = vsel %vm4134, %v4071, %v4197
    %v4261 = vsel %vm4135, %v4072, %v4198
    %v4262 = vsel %vm4136, %v4073, %v4199
    %v4263 = vsel %vm4137, %v4074, %v4200
    %v4264 = vsel %vm4138, %v4075, %v4201
    %v4265 = vsel %vm4139, %v4076, %v4202
    %v4266 = vsel %vm4140, %v4077, %v4203
    %v4267 = vsel %vm4141, %v4078, %v4204
    %v4268 = vsel %vm4142, %v4079, %v4205
    %v4269 = vsel %vm4143, %v4080, %v4206
    %v4270 = vsel %vm4144, %v4081, %v4207
    %v4271 = vsel %vm4145, %v4082, %v4208
    %v4272 = vsel %vm4146, %v4083, %v4209
    %v4273 = vsel %vm4147, %v4084, %v4210
    %v4274 = vsel %vm4148, %v4085, %v4211
    %v4275 = vsel %vm4149, %v4086, %v4212
    %v4276 = vsel %vm4150, %v4087, %v4213
    %v4277 = vsel %vm4151, %v4088, %v4214
    %v4278 = vsel %vm4152, %v4089, %v4215
    %v4279 = vsel %vm4153, %v4090, %v4216
    %v4280 = vsel %vm4154, %v4091, %v4217
    %v4281 = vsel %vm4155, %v4092, %v4218
    %v4282 = vsel %vm4156, %v4093, %v4219
    %v4283 = vsel %vm4157, %v4094, %v4220
    %v4284 = vsel %vm4158, %v4095, %v4221
    %v4285 = vsel %vm4159, %v4096, %v4222
    %4286 = vrot.lane.b32.xlu0 %v82, 16
    %v4287 = vpop.permute.xlu0 %4286
    %4288 = vrot.lane.b32.xlu0 %v83, 16
    %v4289 = vpop.permute.xlu0 %4288
    %4355 = vrot.lane.b32.xlu0 %v3718, 112
    %v4356 = vpop.permute.xlu0 %4355
    %4357 = vrot.lane.b32.xlu0 %v3723, 112
    %v4358 = vpop.permute.xlu0 %4357
    %4359 = vrot.lane.b32.xlu0 %v3728, 112
    %v4360 = vpop.permute.xlu0 %4359
    %4361 = vrot.lane.b32.xlu0 %v3733, 112
    %v4362 = vpop.permute.xlu0 %4361
    %4363 = vrot.lane.b32.xlu0 %v3738, 112
    %v4364 = vpop.permute.xlu0 %4363
    %4365 = vrot.lane.b32.xlu0 %v3743, 112
    %v4366 = vpop.permute.xlu0 %4365
    %4367 = vrot.lane.b32.xlu0 %v3748, 112
    %v4368 = vpop.permute.xlu0 %4367
    %4369 = vrot.lane.b32.xlu0 %v3753, 112
    %v4370 = vpop.permute.xlu0 %4369
    %4371 = vrot.lane.b32.xlu0 %v3758, 112
    %v4372 = vpop.permute.xlu0 %4371
    %4373 = vrot.lane.b32.xlu0 %v3763, 112
    %v4374 = vpop.permute.xlu0 %4373
    %4375 = vrot.lane.b32.xlu0 %v3768, 112
    %v4376 = vpop.permute.xlu0 %4375
    %4377 = vrot.lane.b32.xlu0 %v3773, 112
    %v4378 = vpop.permute.xlu0 %4377
    %4379 = vrot.lane.b32.xlu0 %v3778, 112
    %v4380 = vpop.permute.xlu0 %4379
    %4381 = vrot.lane.b32.xlu0 %v3783, 112
    %v4382 = vpop.permute.xlu0 %4381
    %4383 = vrot.lane.b32.xlu0 %v3788, 112
    %v4384 = vpop.permute.xlu0 %4383
    %4385 = vrot.lane.b32.xlu0 %v3793, 112
    %v4386 = vpop.permute.xlu0 %4385
    %4387 = vrot.lane.b32.xlu0 %v3798, 112
    %v4388 = vpop.permute.xlu0 %4387
    %4389 = vrot.lane.b32.xlu0 %v3803, 112
    %v4390 = vpop.permute.xlu0 %4389
    %4391 = vrot.lane.b32.xlu0 %v3808, 112
    %v4392 = vpop.permute.xlu0 %4391
    %4393 = vrot.lane.b32.xlu0 %v3813, 112
    %v4394 = vpop.permute.xlu0 %4393
    %4395 = vrot.lane.b32.xlu0 %v3818, 112
    %v4396 = vpop.permute.xlu0 %4395
    %4397 = vrot.lane.b32.xlu0 %v3823, 112
    %v4398 = vpop.permute.xlu0 %4397
    %4399 = vrot.lane.b32.xlu0 %v3828, 112
    %v4400 = vpop.permute.xlu0 %4399
    %4401 = vrot.lane.b32.xlu0 %v3833, 112
    %v4402 = vpop.permute.xlu0 %4401
    %4403 = vrot.lane.b32.xlu0 %v3838, 112
    %v4404 = vpop.permute.xlu0 %4403
    %4405 = vrot.lane.b32.xlu0 %v3843, 112
    %v4406 = vpop.permute.xlu0 %4405
    %4407 = vrot.lane.b32.xlu0 %v3848, 112
    %v4408 = vpop.permute.xlu0 %4407
    %4409 = vrot.lane.b32.xlu0 %v3853, 112
    %v4410 = vpop.permute.xlu0 %4409
    %4411 = vrot.lane.b32.xlu0 %v3858, 112
    %v4412 = vpop.permute.xlu0 %4411
    %4413 = vrot.lane.b32.xlu0 %v3863, 112
    %v4414 = vpop.permute.xlu0 %4413
    %4415 = vrot.lane.b32.xlu0 %v3868, 112
    %v4416 = vpop.permute.xlu0 %4415
    %4417 = vrot.lane.b32.xlu0 %v3873, 112
    %v4418 = vpop.permute.xlu0 %4417
    %4419 = vrot.lane.b32.xlu0 %v3878, 112
    %v4420 = vpop.permute.xlu0 %4419
    %4421 = vrot.lane.b32.xlu0 %v3883, 112
    %v4422 = vpop.permute.xlu0 %4421
    %4423 = vrot.lane.b32.xlu0 %v3888, 112
    %v4424 = vpop.permute.xlu0 %4423
    %4425 = vrot.lane.b32.xlu0 %v3893, 112
    %v4426 = vpop.permute.xlu0 %4425
    %4427 = vrot.lane.b32.xlu0 %v3898, 112
    %v4428 = vpop.permute.xlu0 %4427
    %4429 = vrot.lane.b32.xlu0 %v3903, 112
    %v4430 = vpop.permute.xlu0 %4429
    %4431 = vrot.lane.b32.xlu0 %v3908, 112
    %v4432 = vpop.permute.xlu0 %4431
    %4433 = vrot.lane.b32.xlu0 %v3913, 112
    %v4434 = vpop.permute.xlu0 %4433
    %4435 = vrot.lane.b32.xlu0 %v3918, 112
    %v4436 = vpop.permute.xlu0 %4435
    %4437 = vrot.lane.b32.xlu0 %v3923, 112
    %v4438 = vpop.permute.xlu0 %4437
    %4439 = vrot.lane.b32.xlu0 %v3928, 112
    %v4440 = vpop.permute.xlu0 %4439
    %4441 = vrot.lane.b32.xlu0 %v3933, 112
    %v4442 = vpop.permute.xlu0 %4441
    %4443 = vrot.lane.b32.xlu0 %v3938, 112
    %v4444 = vpop.permute.xlu0 %4443
    %4445 = vrot.lane.b32.xlu0 %v3943, 112
    %v4446 = vpop.permute.xlu0 %4445
    %4447 = vrot.lane.b32.xlu0 %v3948, 112
    %v4448 = vpop.permute.xlu0 %4447
    %4449 = vrot.lane.b32.xlu0 %v3953, 112
    %v4450 = vpop.permute.xlu0 %4449
    %4451 = vrot.lane.b32.xlu0 %v3958, 112
    %v4452 = vpop.permute.xlu0 %4451
    %4453 = vrot.lane.b32.xlu0 %v3963, 112
    %v4454 = vpop.permute.xlu0 %4453
    %4455 = vrot.lane.b32.xlu0 %v3968, 112
    %v4456 = vpop.permute.xlu0 %4455
    %4457 = vrot.lane.b32.xlu0 %v3973, 112
    %v4458 = vpop.permute.xlu0 %4457
    %4459 = vrot.lane.b32.xlu0 %v3978, 112
    %v4460 = vpop.permute.xlu0 %4459
    %4461 = vrot.lane.b32.xlu0 %v3983, 112
    %v4462 = vpop.permute.xlu0 %4461
    %4463 = vrot.lane.b32.xlu0 %v3988, 112
    %v4464 = vpop.permute.xlu0 %4463
    %4465 = vrot.lane.b32.xlu0 %v3993, 112
    %v4466 = vpop.permute.xlu0 %4465
    %4467 = vrot.lane.b32.xlu0 %v3998, 112
    %v4468 = vpop.permute.xlu0 %4467
    %4469 = vrot.lane.b32.xlu0 %v4003, 112
    %v4470 = vpop.permute.xlu0 %4469
    %4471 = vrot.lane.b32.xlu0 %v4008, 112
    %v4472 = vpop.permute.xlu0 %4471
    %4473 = vrot.lane.b32.xlu0 %v4013, 112
    %v4474 = vpop.permute.xlu0 %4473
    %4475 = vrot.lane.b32.xlu0 %v4018, 112
    %v4476 = vpop.permute.xlu0 %4475
    %4477 = vrot.lane.b32.xlu0 %v4023, 112
    %v4478 = vpop.permute.xlu0 %4477
    %4479 = vrot.lane.b32.xlu0 %v4028, 112
    %v4480 = vpop.permute.xlu0 %4479
    %v4545 = vsel %vm90, %v4223, 0
    %v4548 = vsel %vm90, %v4224, 0
    %v4551 = vsel %vm90, %v4225, 0
    %v4554 = vsel %vm90, %v4226, 0
    %v4557 = vsel %vm90, %v4227, 0
    %v4560 = vsel %vm90, %v4228, 0
    %v4563 = vsel %vm90, %v4229, 0
    %v4566 = vsel %vm90, %v4230, 0
    %v4569 = vsel %vm90, %v4231, 0
    %v4572 = vsel %vm90, %v4232, 0
    %v4575 = vsel %vm90, %v4233, 0
    %v4578 = vsel %vm90, %v4234, 0
    %v4581 = vsel %vm90, %v4235, 0
    %v4584 = vsel %vm90, %v4236, 0
    %v4587 = vsel %vm90, %v4237, 0
    %v4590 = vsel %vm90, %v4238, 0
    %v4593 = vsel %vm90, %v4239, 0
    %v4596 = vsel %vm90, %v4240, 0
    %v4599 = vsel %vm90, %v4241, 0
    %v4602 = vsel %vm90, %v4242, 0
    %v4605 = vsel %vm90, %v4243, 0
    %v4608 = vsel %vm90, %v4244, 0
    %v4611 = vsel %vm90, %v4245, 0
    %v4614 = vsel %vm90, %v4246, 0
    %v4617 = vsel %vm90, %v4247, 0
    %v4620 = vsel %vm90, %v4248, 0
    %v4623 = vsel %vm90, %v4249, 0
    %v4626 = vsel %vm90, %v4250, 0
    %v4629 = vsel %vm90, %v4251, 0
    %v4632 = vsel %vm90, %v4252, 0
    %v4635 = vsel %vm90, %v4253, 0
    %v4638 = vsel %vm90, %v4254, 0
    %v4641 = vsel %vm90, %v4255, 0
    %v4644 = vsel %vm90, %v4256, 0
    %v4647 = vsel %vm90, %v4257, 0
    %v4650 = vsel %vm90, %v4258, 0
    %v4653 = vsel %vm90, %v4259, 0
    %v4656 = vsel %vm90, %v4260, 0
    %v4659 = vsel %vm90, %v4261, 0
    %v4662 = vsel %vm90, %v4262, 0
    %v4665 = vsel %vm90, %v4263, 0
    %v4668 = vsel %vm90, %v4264, 0
    %v4671 = vsel %vm90, %v4265, 0
    %v4674 = vsel %vm90, %v4266, 0
    %v4677 = vsel %vm90, %v4267, 0
    %v4680 = vsel %vm90, %v4268, 0
    %v4683 = vsel %vm90, %v4269, 0
    %v4686 = vsel %vm90, %v4270, 0
    %v4689 = vsel %vm90, %v4271, 0
    %v4692 = vsel %vm90, %v4272, 0
    %v4695 = vsel %vm90, %v4273, 0
    %v4698 = vsel %vm90, %v4274, 0
    %v4701 = vsel %vm90, %v4275, 0
    %v4704 = vsel %vm90, %v4276, 0
    %v4707 = vsel %vm90, %v4277, 0
    %v4710 = vsel %vm90, %v4278, 0
    %v4713 = vsel %vm90, %v4279, 0
    %v4716 = vsel %vm90, %v4280, 0
    %v4719 = vsel %vm90, %v4281, 0
    %v4722 = vsel %vm90, %v4282, 0
    %v4725 = vsel %vm90, %v4283, 0
    %v4728 = vsel %vm90, %v4284, 0
    %v4731 = vsel %vm90, %v4285, 0
    %4733 = vmatprep.subr.mxu0 0.0
    %4734 = vmatpush1.msra.mxu0 %v4287
    %4735 = vmatprep.subr.mxu0 0.0
    %4736 = vmatpush1.msra.mxu0 %v4289
    %4737 = vmatprep.subr.mxu0 0.0
    %4738 = vmatpush1.msra.mxu0 0.0
    %4739 = vmatprep.subr.mxu0 0.0
    %4740 = vmatpush1.msra.mxu0 0.0
    %4741 = vmatprep.subr.mxu0 0.0
    %4742 = vmatpush1.msra.mxu0 0.0
    %4743 = vmatprep.subr.mxu0 0.0
    %4744 = vmatpush1.msra.mxu0 0.0
    %4745 = vmatprep.subr.mxu0 0.0
    %4746 = vmatpush1.msra.mxu0 0.0
    %4747 = vmatprep.subr.mxu0 0.0
    %4748 = vmatpush1.msra.mxu0 0.0
    %4749 = vmatprep.subr.mxu0 0.0
    %4750 = vmatpush1.msra.mxu0 0.0
    %4751 = vmatprep.subr.mxu0 0.0
    %4752 = vmatpush1.msra.mxu0 0.0
    %4753 = vmatprep.subr.mxu0 0.0
    %4754 = vmatpush1.msra.mxu0 0.0
    %4755 = vmatprep.subr.mxu0 0.0
    %4756 = vmatpush1.msra.mxu0 0.0
    %4757 = vmatprep.subr.mxu0 0.0
    %4758 = vmatpush1.msra.mxu0 0.0
    %4759 = vmatprep.subr.mxu0 0.0
    %4760 = vmatpush1.msra.mxu0 0.0
    %4761 = vmatprep.subr.mxu0 0.0
    %4762 = vmatpush1.msra.mxu0 0.0
    %4763 = vmatprep.subr.mxu0 0.0
    %4764 = vmatpush1.msra.mxu0 0.0
    %4765 = vmatprep.subr.mxu0 0.0
    %4766 = vmatpush1.msra.mxu0 0.0
    %4767 = vmatprep.subr.mxu0 0.0
    %4768 = vmatpush1.msra.mxu0 0.0
    %4769 = vmatprep.subr.mxu0 0.0
    %4770 = vmatpush1.msra.mxu0 0.0
    %4771 = vmatprep.subr.mxu0 0.0
    %4772 = vmatpush1.msra.mxu0 0.0
    %4773 = vmatprep.subr.mxu0 0.0
    %4774 = vmatpush1.msra.mxu0 0.0
    %4775 = vmatprep.subr.mxu0 0.0
    %4776 = vmatpush1.msra.mxu0 0.0
    %4777 = vmatprep.subr.mxu0 0.0
    %4778 = vmatpush1.msra.mxu0 0.0
    %4779 = vmatprep.subr.mxu0 0.0
    %4780 = vmatpush1.msra.mxu0 0.0
    %4781 = vmatprep.subr.mxu0 0.0
    %4782 = vmatpush1.msra.mxu0 0.0
    %4783 = vmatprep.subr.mxu0 0.0
    %4784 = vmatpush1.msra.mxu0 0.0
    %4785 = vmatprep.subr.mxu0 0.0
    %4786 = vmatpush1.msra.mxu0 0.0
    %4787 = vmatprep.subr.mxu0 0.0
    %4788 = vmatpush1.msra.mxu0 0.0
    %4789 = vmatprep.subr.mxu0 0.0
    %4790 = vmatpush1.msra.mxu0 0.0
    %4791 = vmatprep.subr.mxu0 0.0
    %4792 = vmatpush1.msra.mxu0 0.0
    %4793 = vmatprep.subr.mxu0 0.0
    %4794 = vmatpush1.msra.mxu0 0.0
    %4795 = vmatprep.subr.mxu0 0.0
    %4796 = vmatpush1.msra.mxu0 0.0
    %4797 = vmatprep.mubr.f32.mxu0 0.0
    %4798 = vmatmul.mubr.f32.gmra.mrb[0].mxu0 %v4545
    %v4799 = vpop.f32.mrb[0].mxu0
    %v4800 = vadd.f32 %v4356, %v4799
    %v4801 = vpop.f32.mrb[0].mxu0
    %4802 = vmatprep.mubr.f32.mxu0 0.0
    %4803 = vmatmul.mubr.f32.gmra.mrb[0].mxu0 %v4548
    %v4804 = vpop.f32.mrb[0].mxu0
    %v4805 = vadd.f32 %v4358, %v4804
    %v4806 = vpop.f32.mrb[0].mxu0
    %4807 = vmatprep.mubr.f32.mxu0 0.0
    %4808 = vmatmul.mubr.f32.gmra.mrb[0].mxu0 %v4551
    %v4809 = vpop.f32.mrb[0].mxu0
    %v4810 = vadd.f32 %v4360, %v4809
    %v4811 = vpop.f32.mrb[0].mxu0
    %4812 = vmatprep.mubr.f32.mxu0 0.0
    %4813 = vmatmul.mubr.f32.gmra.mrb[0].mxu0 %v4554
    %v4814 = vpop.f32.mrb[0].mxu0
    %v4815 = vadd.f32 %v4362, %v4814
    %v4816 = vpop.f32.mrb[0].mxu0
    %4817 = vmatprep.mubr.f32.mxu0 0.0
    %4818 = vmatmul.mubr.f32.gmra.mrb[0].mxu0 %v4557
    %v4819 = vpop.f32.mrb[0].mxu0
    %v4820 = vadd.f32 %v4364, %v4819
    %v4821 = vpop.f32.mrb[0].mxu0
    %4822 = vmatprep.mubr.f32.mxu0 0.0
    %4823 = vmatmul.mubr.f32.gmra.mrb[0].mxu0 %v4560
    %v4824 = vpop.f32.mrb[0].mxu0
    %v4825 = vadd.f32 %v4366, %v4824
    %v4826 = vpop.f32.mrb[0].mxu0
    %4827 = vmatprep.mubr.f32.mxu0 0.0
    %4828 = vmatmul.mubr.f32.gmra.mrb[0].mxu0 %v4563
    %v4829 = vpop.f32.mrb[0].mxu0
    %v4830 = vadd.f32 %v4368, %v4829
    %v4831 = vpop.f32.mrb[0].mxu0
    %4832 = vmatprep.mubr.f32.mxu0 0.0
    %4833 = vmatmul.mubr.f32.gmra.mrb[0].mxu0 %v4566
    %v4834 = vpop.f32.mrb[0].mxu0
    %v4835 = vadd.f32 %v4370, %v4834
    %v4836 = vpop.f32.mrb[0].mxu0
    %4837 = vmatprep.mubr.f32.mxu0 0.0
    %4838 = vmatmul.mubr.f32.gmra.mrb[0].mxu0 %v4569
    %v4839 = vpop.f32.mrb[0].mxu0
    %v4840 = vadd.f32 %v4372, %v4839
    %v4841 = vpop.f32.mrb[0].mxu0
    %4842 = vmatprep.mubr.f32.mxu0 0.0
    %4843 = vmatmul.mubr.f32.gmra.mrb[0].mxu0 %v4572
    %v4844 = vpop.f32.mrb[0].mxu0
    %v4845 = vadd.f32 %v4374, %v4844
    %v4846 = vpop.f32.mrb[0].mxu0
    %4847 = vmatprep.mubr.f32.mxu0 0.0
    %4848 = vmatmul.mubr.f32.gmra.mrb[0].mxu0 %v4575
    %v4849 = vpop.f32.mrb[0].mxu0
    %v4850 = vadd.f32 %v4376, %v4849
    %v4851 = vpop.f32.mrb[0].mxu0
    %4852 = vmatprep.mubr.f32.mxu0 0.0
    %4853 = vmatmul.mubr.f32.gmra.mrb[0].mxu0 %v4578
    %v4854 = vpop.f32.mrb[0].mxu0
    %v4855 = vadd.f32 %v4378, %v4854
    %v4856 = vpop.f32.mrb[0].mxu0
    %4857 = vmatprep.mubr.f32.mxu0 0.0
    %4858 = vmatmul.mubr.f32.gmra.mrb[0].mxu0 %v4581
    %v4859 = vpop.f32.mrb[0].mxu0
    %v4860 = vadd.f32 %v4380, %v4859
    %v4861 = vpop.f32.mrb[0].mxu0
    %4862 = vmatprep.mubr.f32.mxu0 0.0
    %4863 = vmatmul.mubr.f32.gmra.mrb[0].mxu0 %v4584
    %v4864 = vpop.f32.mrb[0].mxu0
    %v4865 = vadd.f32 %v4382, %v4864
    %v4866 = vpop.f32.mrb[0].mxu0
    %4867 = vmatprep.mubr.f32.mxu0 0.0
    %4868 = vmatmul.mubr.f32.gmra.mrb[0].mxu0 %v4587
    %v4869 = vpop.f32.mrb[0].mxu0
    %v4870 = vadd.f32 %v4384, %v4869
    %v4871 = vpop.f32.mrb[0].mxu0
    %4872 = vmatprep.mubr.f32.mxu0 0.0
    %4873 = vmatmul.mubr.f32.gmra.mrb[0].mxu0 %v4590
    %v4874 = vpop.f32.mrb[0].mxu0
    %v4875 = vadd.f32 %v4386, %v4874
    %v4876 = vpop.f32.mrb[0].mxu0
    %4877 = vmatprep.mubr.f32.mxu0 0.0
    %4878 = vmatmul.mubr.f32.gmra.mrb[0].mxu0 %v4593
    %v4879 = vpop.f32.mrb[0].mxu0
    %v4880 = vadd.f32 %v4388, %v4879
    %v4881 = vpop.f32.mrb[0].mxu0
    %4882 = vmatprep.mubr.f32.mxu0 0.0
    %4883 = vmatmul.mubr.f32.gmra.mrb[0].mxu0 %v4596
    %v4884 = vpop.f32.mrb[0].mxu0
    %v4885 = vadd.f32 %v4390, %v4884
    %v4886 = vpop.f32.mrb[0].mxu0
    %4887 = vmatprep.mubr.f32.mxu0 0.0
    %4888 = vmatmul.mubr.f32.gmra.mrb[0].mxu0 %v4599
    %v4889 = vpop.f32.mrb[0].mxu0
    %v4890 = vadd.f32 %v4392, %v4889
    %v4891 = vpop.f32.mrb[0].mxu0
    %4892 = vmatprep.mubr.f32.mxu0 0.0
    %4893 = vmatmul.mubr.f32.gmra.mrb[0].mxu0 %v4602
    %v4894 = vpop.f32.mrb[0].mxu0
    %v4895 = vadd.f32 %v4394, %v4894
    %v4896 = vpop.f32.mrb[0].mxu0
    %4897 = vmatprep.mubr.f32.mxu0 0.0
    %4898 = vmatmul.mubr.f32.gmra.mrb[0].mxu0 %v4605
    %v4899 = vpop.f32.mrb[0].mxu0
    %v4900 = vadd.f32 %v4396, %v4899
    %v4901 = vpop.f32.mrb[0].mxu0
    %4902 = vmatprep.mubr.f32.mxu0 0.0
    %4903 = vmatmul.mubr.f32.gmra.mrb[0].mxu0 %v4608
    %v4904 = vpop.f32.mrb[0].mxu0
    %v4905 = vadd.f32 %v4398, %v4904
    %v4906 = vpop.f32.mrb[0].mxu0
    %4907 = vmatprep.mubr.f32.mxu0 0.0
    %4908 = vmatmul.mubr.f32.gmra.mrb[0].mxu0 %v4611
    %v4909 = vpop.f32.mrb[0].mxu0
    %v4910 = vadd.f32 %v4400, %v4909
    %v4911 = vpop.f32.mrb[0].mxu0
    %4912 = vmatprep.mubr.f32.mxu0 0.0
    %4913 = vmatmul.mubr.f32.gmra.mrb[0].mxu0 %v4614
    %v4914 = vpop.f32.mrb[0].mxu0
    %v4915 = vadd.f32 %v4402, %v4914
    %v4916 = vpop.f32.mrb[0].mxu0
    %4917 = vmatprep.mubr.f32.mxu0 0.0
    %4918 = vmatmul.mubr.f32.gmra.mrb[0].mxu0 %v4617
    %v4919 = vpop.f32.mrb[0].mxu0
    %v4920 = vadd.f32 %v4404, %v4919
    %v4921 = vpop.f32.mrb[0].mxu0
    %4922 = vmatprep.mubr.f32.mxu0 0.0
    %4923 = vmatmul.mubr.f32.gmra.mrb[0].mxu0 %v4620
    %v4924 = vpop.f32.mrb[0].mxu0
    %v4925 = vadd.f32 %v4406, %v4924
    %v4926 = vpop.f32.mrb[0].mxu0
    %4927 = vmatprep.mubr.f32.mxu0 0.0
    %4928 = vmatmul.mubr.f32.gmra.mrb[0].mxu0 %v4623
    %v4929 = vpop.f32.mrb[0].mxu0
    %v4930 = vadd.f32 %v4408, %v4929
    %v4931 = vpop.f32.mrb[0].mxu0
    %4932 = vmatprep.mubr.f32.mxu0 0.0
    %4933 = vmatmul.mubr.f32.gmra.mrb[0].mxu0 %v4626
    %v4934 = vpop.f32.mrb[0].mxu0
    %v4935 = vadd.f32 %v4410, %v4934
    %v4936 = vpop.f32.mrb[0].mxu0
    %4937 = vmatprep.mubr.f32.mxu0 0.0
    %4938 = vmatmul.mubr.f32.gmra.mrb[0].mxu0 %v4629
    %v4939 = vpop.f32.mrb[0].mxu0
    %v4940 = vadd.f32 %v4412, %v4939
    %v4941 = vpop.f32.mrb[0].mxu0
    %4942 = vmatprep.mubr.f32.mxu0 0.0
    %4943 = vmatmul.mubr.f32.gmra.mrb[0].mxu0 %v4632
    %v4944 = vpop.f32.mrb[0].mxu0
    %v4945 = vadd.f32 %v4414, %v4944
    %v4946 = vpop.f32.mrb[0].mxu0
    %4947 = vmatprep.mubr.f32.mxu0 0.0
    %4948 = vmatmul.mubr.f32.gmra.mrb[0].mxu0 %v4635
    %v4949 = vpop.f32.mrb[0].mxu0
    %v4950 = vadd.f32 %v4416, %v4949
    %v4951 = vpop.f32.mrb[0].mxu0
    %4952 = vmatprep.mubr.f32.mxu0 0.0
    %4953 = vmatmul.mubr.f32.gmra.mrb[0].mxu0 %v4638
    %v4954 = vpop.f32.mrb[0].mxu0
    %v4955 = vadd.f32 %v4418, %v4954
    %v4956 = vpop.f32.mrb[0].mxu0
    %4957 = vmatprep.mubr.f32.mxu0 0.0
    %4958 = vmatmul.mubr.f32.gmra.mrb[0].mxu0 %v4641
    %v4959 = vpop.f32.mrb[0].mxu0
    %v4960 = vadd.f32 %v4420, %v4959
    %v4961 = vpop.f32.mrb[0].mxu0
    %4962 = vmatprep.mubr.f32.mxu0 0.0
    %4963 = vmatmul.mubr.f32.gmra.mrb[0].mxu0 %v4644
    %v4964 = vpop.f32.mrb[0].mxu0
    %v4965 = vadd.f32 %v4422, %v4964
    %v4966 = vpop.f32.mrb[0].mxu0
    %4967 = vmatprep.mubr.f32.mxu0 0.0
    %4968 = vmatmul.mubr.f32.gmra.mrb[0].mxu0 %v4647
    %v4969 = vpop.f32.mrb[0].mxu0
    %v4970 = vadd.f32 %v4424, %v4969
    %v4971 = vpop.f32.mrb[0].mxu0
    %4972 = vmatprep.mubr.f32.mxu0 0.0
    %4973 = vmatmul.mubr.f32.gmra.mrb[0].mxu0 %v4650
    %v4974 = vpop.f32.mrb[0].mxu0
    %v4975 = vadd.f32 %v4426, %v4974
    %v4976 = vpop.f32.mrb[0].mxu0
    %4977 = vmatprep.mubr.f32.mxu0 0.0
    %4978 = vmatmul.mubr.f32.gmra.mrb[0].mxu0 %v4653
    %v4979 = vpop.f32.mrb[0].mxu0
    %v4980 = vadd.f32 %v4428, %v4979
    %v4981 = vpop.f32.mrb[0].mxu0
    %4982 = vmatprep.mubr.f32.mxu0 0.0
    %4983 = vmatmul.mubr.f32.gmra.mrb[0].mxu0 %v4656
    %v4984 = vpop.f32.mrb[0].mxu0
    %v4985 = vadd.f32 %v4430, %v4984
    %v4986 = vpop.f32.mrb[0].mxu0
    %4987 = vmatprep.mubr.f32.mxu0 0.0
    %4988 = vmatmul.mubr.f32.gmra.mrb[0].mxu0 %v4659
    %v4989 = vpop.f32.mrb[0].mxu0
    %v4990 = vadd.f32 %v4432, %v4989
    %v4991 = vpop.f32.mrb[0].mxu0
    %4992 = vmatprep.mubr.f32.mxu0 0.0
    %4993 = vmatmul.mubr.f32.gmra.mrb[0].mxu0 %v4662
    %v4994 = vpop.f32.mrb[0].mxu0
    %v4995 = vadd.f32 %v4434, %v4994
    %v4996 = vpop.f32.mrb[0].mxu0
    %4997 = vmatprep.mubr.f32.mxu0 0.0
    %4998 = vmatmul.mubr.f32.gmra.mrb[0].mxu0 %v4665
    %v4999 = vpop.f32.mrb[0].mxu0
    %v5000 = vadd.f32 %v4436, %v4999
    %v5001 = vpop.f32.mrb[0].mxu0
    %5002 = vmatprep.mubr.f32.mxu0 0.0
    %5003 = vmatmul.mubr.f32.gmra.mrb[0].mxu0 %v4668
    %v5004 = vpop.f32.mrb[0].mxu0
    %v5005 = vadd.f32 %v4438, %v5004
    %v5006 = vpop.f32.mrb[0].mxu0
    %5007 = vmatprep.mubr.f32.mxu0 0.0
    %5008 = vmatmul.mubr.f32.gmra.mrb[0].mxu0 %v4671
    %v5009 = vpop.f32.mrb[0].mxu0
    %v5010 = vadd.f32 %v4440, %v5009
    %v5011 = vpop.f32.mrb[0].mxu0
    %5012 = vmatprep.mubr.f32.mxu0 0.0
    %5013 = vmatmul.mubr.f32.gmra.mrb[0].mxu0 %v4674
    %v5014 = vpop.f32.mrb[0].mxu0
    %v5015 = vadd.f32 %v4442, %v5014
    %v5016 = vpop.f32.mrb[0].mxu0
    %5017 = vmatprep.mubr.f32.mxu0 0.0
    %5018 = vmatmul.mubr.f32.gmra.mrb[0].mxu0 %v4677
    %v5019 = vpop.f32.mrb[0].mxu0
    %v5020 = vadd.f32 %v4444, %v5019
    %v5021 = vpop.f32.mrb[0].mxu0
    %5022 = vmatprep.mubr.f32.mxu0 0.0
    %5023 = vmatmul.mubr.f32.gmra.mrb[0].mxu0 %v4680
    %v5024 = vpop.f32.mrb[0].mxu0
    %v5025 = vadd.f32 %v4446, %v5024
    %v5026 = vpop.f32.mrb[0].mxu0
    %5027 = vmatprep.mubr.f32.mxu0 0.0
    %5028 = vmatmul.mubr.f32.gmra.mrb[0].mxu0 %v4683
    %v5029 = vpop.f32.mrb[0].mxu0
    %v5030 = vadd.f32 %v4448, %v5029
    %v5031 = vpop.f32.mrb[0].mxu0
    %5032 = vmatprep.mubr.f32.mxu0 0.0
    %5033 = vmatmul.mubr.f32.gmra.mrb[0].mxu0 %v4686
    %v5034 = vpop.f32.mrb[0].mxu0
    %v5035 = vadd.f32 %v4450, %v5034
    %v5036 = vpop.f32.mrb[0].mxu0
    %5037 = vmatprep.mubr.f32.mxu0 0.0
    %5038 = vmatmul.mubr.f32.gmra.mrb[0].mxu0 %v4689
    %v5039 = vpop.f32.mrb[0].mxu0
    %v5040 = vadd.f32 %v4452, %v5039
    %v5041 = vpop.f32.mrb[0].mxu0
    %5042 = vmatprep.mubr.f32.mxu0 0.0
    %5043 = vmatmul.mubr.f32.gmra.mrb[0].mxu0 %v4692
    %v5044 = vpop.f32.mrb[0].mxu0
    %v5045 = vadd.f32 %v4454, %v5044
    %v5046 = vpop.f32.mrb[0].mxu0
    %5047 = vmatprep.mubr.f32.mxu0 0.0
    %5048 = vmatmul.mubr.f32.gmra.mrb[0].mxu0 %v4695
    %v5049 = vpop.f32.mrb[0].mxu0
    %v5050 = vadd.f32 %v4456, %v5049
    %v5051 = vpop.f32.mrb[0].mxu0
    %5052 = vmatprep.mubr.f32.mxu0 0.0
    %5053 = vmatmul.mubr.f32.gmra.mrb[0].mxu0 %v4698
    %v5054 = vpop.f32.mrb[0].mxu0
    %v5055 = vadd.f32 %v4458, %v5054
    %v5056 = vpop.f32.mrb[0].mxu0
    %5057 = vmatprep.mubr.f32.mxu0 0.0
    %5058 = vmatmul.mubr.f32.gmra.mrb[0].mxu0 %v4701
    %v5059 = vpop.f32.mrb[0].mxu0
    %v5060 = vadd.f32 %v4460, %v5059
    %v5061 = vpop.f32.mrb[0].mxu0
    %5062 = vmatprep.mubr.f32.mxu0 0.0
    %5063 = vmatmul.mubr.f32.gmra.mrb[0].mxu0 %v4704
    %v5064 = vpop.f32.mrb[0].mxu0
    %v5065 = vadd.f32 %v4462, %v5064
    %v5066 = vpop.f32.mrb[0].mxu0
    %5067 = vmatprep.mubr.f32.mxu0 0.0
    %5068 = vmatmul.mubr.f32.gmra.mrb[0].mxu0 %v4707
    %v5069 = vpop.f32.mrb[0].mxu0
    %v5070 = vadd.f32 %v4464, %v5069
    %v5071 = vpop.f32.mrb[0].mxu0
    %5072 = vmatprep.mubr.f32.mxu0 0.0
    %5073 = vmatmul.mubr.f32.gmra.mrb[0].mxu0 %v4710
    %v5074 = vpop.f32.mrb[0].mxu0
    %v5075 = vadd.f32 %v4466, %v5074
    %v5076 = vpop.f32.mrb[0].mxu0
    %5077 = vmatprep.mubr.f32.mxu0 0.0
    %5078 = vmatmul.mubr.f32.gmra.mrb[0].mxu0 %v4713
    %v5079 = vpop.f32.mrb[0].mxu0
    %v5080 = vadd.f32 %v4468, %v5079
    %v5081 = vpop.f32.mrb[0].mxu0
    %5082 = vmatprep.mubr.f32.mxu0 0.0
    %5083 = vmatmul.mubr.f32.gmra.mrb[0].mxu0 %v4716
    %v5084 = vpop.f32.mrb[0].mxu0
    %v5085 = vadd.f32 %v4470, %v5084
    %v5086 = vpop.f32.mrb[0].mxu0
    %5087 = vmatprep.mubr.f32.mxu0 0.0
    %5088 = vmatmul.mubr.f32.gmra.mrb[0].mxu0 %v4719
    %v5089 = vpop.f32.mrb[0].mxu0
    %v5090 = vadd.f32 %v4472, %v5089
    %v5091 = vpop.f32.mrb[0].mxu0
    %5092 = vmatprep.mubr.f32.mxu0 0.0
    %5093 = vmatmul.mubr.f32.gmra.mrb[0].mxu0 %v4722
    %v5094 = vpop.f32.mrb[0].mxu0
    %v5095 = vadd.f32 %v4474, %v5094
    %v5096 = vpop.f32.mrb[0].mxu0
    %5097 = vmatprep.mubr.f32.mxu0 0.0
    %5098 = vmatmul.mubr.f32.gmra.mrb[0].mxu0 %v4725
    %v5099 = vpop.f32.mrb[0].mxu0
    %v5100 = vadd.f32 %v4476, %v5099
    %v5101 = vpop.f32.mrb[0].mxu0
    %5102 = vmatprep.mubr.f32.mxu0 0.0
    %5103 = vmatmul.mubr.f32.gmra.mrb[0].mxu0 %v4728
    %v5104 = vpop.f32.mrb[0].mxu0
    %v5105 = vadd.f32 %v4478, %v5104
    %v5106 = vpop.f32.mrb[0].mxu0
    %5107 = vmatprep.mubr.f32.mxu0 0.0
    %5108 = vmatmul.mubr.f32.gmra.mrb[0].mxu0 %v4731
    %v5109 = vpop.f32.mrb[0].mxu0
    %v5110 = vadd.f32 %v4480, %v5109
    %v5111 = vpop.f32.mrb[0].mxu0
    %5112 = vdwg.mxu0
    %5113 = vrot.lane.b32.xlu0 %v88, 64
    %v5114 = vpop.permute.xlu0 %5113
    %v5116 = vadd.f32 %v4800, %v5114
    %v5117 = vadd.f32 %v4805, %v5114
    %v5118 = vadd.f32 %v4810, %v5114
    %v5119 = vadd.f32 %v4815, %v5114
    %v5120 = vadd.f32 %v4820, %v5114
    %v5121 = vadd.f32 %v4825, %v5114
    %v5122 = vadd.f32 %v4830, %v5114
    %v5123 = vadd.f32 %v4835, %v5114
    %v5124 = vadd.f32 %v4840, %v5114
    %v5125 = vadd.f32 %v4845, %v5114
    %v5126 = vadd.f32 %v4850, %v5114
    %v5127 = vadd.f32 %v4855, %v5114
    %v5128 = vadd.f32 %v4860, %v5114
    %v5129 = vadd.f32 %v4865, %v5114
    %v5130 = vadd.f32 %v4870, %v5114
    %v5131 = vadd.f32 %v4875, %v5114
    %v5132 = vadd.f32 %v4880, %v5114
    %v5133 = vadd.f32 %v4885, %v5114
    %v5134 = vadd.f32 %v4890, %v5114
    %v5135 = vadd.f32 %v4895, %v5114
    %v5136 = vadd.f32 %v4900, %v5114
    %v5137 = vadd.f32 %v4905, %v5114
    %v5138 = vadd.f32 %v4910, %v5114
    %v5139 = vadd.f32 %v4915, %v5114
    %v5140 = vadd.f32 %v4920, %v5114
    %v5141 = vadd.f32 %v4925, %v5114
    %v5142 = vadd.f32 %v4930, %v5114
    %v5143 = vadd.f32 %v4935, %v5114
    %v5144 = vadd.f32 %v4940, %v5114
    %v5145 = vadd.f32 %v4945, %v5114
    %v5146 = vadd.f32 %v4950, %v5114
    %v5147 = vadd.f32 %v4955, %v5114
    %v5148 = vadd.f32 %v4960, %v5114
    %v5149 = vadd.f32 %v4965, %v5114
    %v5150 = vadd.f32 %v4970, %v5114
    %v5151 = vadd.f32 %v4975, %v5114
    %v5152 = vadd.f32 %v4980, %v5114
    %v5153 = vadd.f32 %v4985, %v5114
    %v5154 = vadd.f32 %v4990, %v5114
    %v5155 = vadd.f32 %v4995, %v5114
    %v5156 = vadd.f32 %v5000, %v5114
    %v5157 = vadd.f32 %v5005, %v5114
    %v5158 = vadd.f32 %v5010, %v5114
    %v5159 = vadd.f32 %v5015, %v5114
    %v5160 = vadd.f32 %v5020, %v5114
    %v5161 = vadd.f32 %v5025, %v5114
    %v5162 = vadd.f32 %v5030, %v5114
    %v5163 = vadd.f32 %v5035, %v5114
    %v5164 = vadd.f32 %v5040, %v5114
    %v5165 = vadd.f32 %v5045, %v5114
    %v5166 = vadd.f32 %v5050, %v5114
    %v5167 = vadd.f32 %v5055, %v5114
    %v5168 = vadd.f32 %v5060, %v5114
    %v5169 = vadd.f32 %v5065, %v5114
    %v5170 = vadd.f32 %v5070, %v5114
    %v5171 = vadd.f32 %v5075, %v5114
    %v5172 = vadd.f32 %v5080, %v5114
    %v5173 = vadd.f32 %v5085, %v5114
    %v5174 = vadd.f32 %v5090, %v5114
    %v5175 = vadd.f32 %v5095, %v5114
    %v5176 = vadd.f32 %v5100, %v5114
    %v5177 = vadd.f32 %v5105, %v5114
    %v5178 = vadd.f32 %v5110, %v5114
    %vm5179 = vcmp.gt.f32.partialorder %v5116, 0.0
    %vm5180 = vcmp.gt.f32.partialorder %v5117, 0.0
    %vm5181 = vcmp.gt.f32.partialorder %v5118, 0.0
    %vm5182 = vcmp.gt.f32.partialorder %v5119, 0.0
    %vm5183 = vcmp.gt.f32.partialorder %v5120, 0.0
    %vm5184 = vcmp.gt.f32.partialorder %v5121, 0.0
    %vm5185 = vcmp.gt.f32.partialorder %v5122, 0.0
    %vm5186 = vcmp.gt.f32.partialorder %v5123, 0.0
    %vm5187 = vcmp.gt.f32.partialorder %v5124, 0.0
    %vm5188 = vcmp.gt.f32.partialorder %v5125, 0.0
    %vm5189 = vcmp.gt.f32.partialorder %v5126, 0.0
    %vm5190 = vcmp.gt.f32.partialorder %v5127, 0.0
    %vm5191 = vcmp.gt.f32.partialorder %v5128, 0.0
    %vm5192 = vcmp.gt.f32.partialorder %v5129, 0.0
    %vm5193 = vcmp.gt.f32.partialorder %v5130, 0.0
    %vm5194 = vcmp.gt.f32.partialorder %v5131, 0.0
    %vm5195 = vcmp.gt.f32.partialorder %v5132, 0.0
    %vm5196 = vcmp.gt.f32.partialorder %v5133, 0.0
    %vm5197 = vcmp.gt.f32.partialorder %v5134, 0.0
    %vm5198 = vcmp.gt.f32.partialorder %v5135, 0.0
    %vm5199 = vcmp.gt.f32.partialorder %v5136, 0.0
    %vm5200 = vcmp.gt.f32.partialorder %v5137, 0.0
    %vm5201 = vcmp.gt.f32.partialorder %v5138, 0.0
    %vm5202 = vcmp.gt.f32.partialorder %v5139, 0.0
    %vm5203 = vcmp.gt.f32.partialorder %v5140, 0.0
    %vm5204 = vcmp.gt.f32.partialorder %v5141, 0.0
    %vm5205 = vcmp.gt.f32.partialorder %v5142, 0.0
    %vm5206 = vcmp.gt.f32.partialorder %v5143, 0.0
    %vm5207 = vcmp.gt.f32.partialorder %v5144, 0.0
    %vm5208 = vcmp.gt.f32.partialorder %v5145, 0.0
    %vm5209 = vcmp.gt.f32.partialorder %v5146, 0.0
    %vm5210 = vcmp.gt.f32.partialorder %v5147, 0.0
    %vm5211 = vcmp.gt.f32.partialorder %v5148, 0.0
    %vm5212 = vcmp.gt.f32.partialorder %v5149, 0.0
    %vm5213 = vcmp.gt.f32.partialorder %v5150, 0.0
    %vm5214 = vcmp.gt.f32.partialorder %v5151, 0.0
    %vm5215 = vcmp.gt.f32.partialorder %v5152, 0.0
    %vm5216 = vcmp.gt.f32.partialorder %v5153, 0.0
    %vm5217 = vcmp.gt.f32.partialorder %v5154, 0.0
    %vm5218 = vcmp.gt.f32.partialorder %v5155, 0.0
    %vm5219 = vcmp.gt.f32.partialorder %v5156, 0.0
    %vm5220 = vcmp.gt.f32.partialorder %v5157, 0.0
    %vm5221 = vcmp.gt.f32.partialorder %v5158, 0.0
    %vm5222 = vcmp.gt.f32.partialorder %v5159, 0.0
    %vm5223 = vcmp.gt.f32.partialorder %v5160, 0.0
    %vm5224 = vcmp.gt.f32.partialorder %v5161, 0.0
    %vm5225 = vcmp.gt.f32.partialorder %v5162, 0.0
    %vm5226 = vcmp.gt.f32.partialorder %v5163, 0.0
    %vm5227 = vcmp.gt.f32.partialorder %v5164, 0.0
    %vm5228 = vcmp.gt.f32.partialorder %v5165, 0.0
    %vm5229 = vcmp.gt.f32.partialorder %v5166, 0.0
    %vm5230 = vcmp.gt.f32.partialorder %v5167, 0.0
    %vm5231 = vcmp.gt.f32.partialorder %v5168, 0.0
    %vm5232 = vcmp.gt.f32.partialorder %v5169, 0.0
    %vm5233 = vcmp.gt.f32.partialorder %v5170, 0.0
    %vm5234 = vcmp.gt.f32.partialorder %v5171, 0.0
    %vm5235 = vcmp.gt.f32.partialorder %v5172, 0.0
    %vm5236 = vcmp.gt.f32.partialorder %v5173, 0.0
    %vm5237 = vcmp.gt.f32.partialorder %v5174, 0.0
    %vm5238 = vcmp.gt.f32.partialorder %v5175, 0.0
    %vm5239 = vcmp.gt.f32.partialorder %v5176, 0.0
    %vm5240 = vcmp.gt.f32.partialorder %v5177, 0.0
    %vm5241 = vcmp.gt.f32.partialorder %v5178, 0.0
    %v5242 = vmul.f32 %v5116, 0.01
    %v5243 = vmul.f32 %v5117, 0.01
    %v5244 = vmul.f32 %v5118, 0.01
    %v5245 = vmul.f32 %v5119, 0.01
    %v5246 = vmul.f32 %v5120, 0.01
    %v5247 = vmul.f32 %v5121, 0.01
    %v5248 = vmul.f32 %v5122, 0.01
    %v5249 = vmul.f32 %v5123, 0.01
    %v5250 = vmul.f32 %v5124, 0.01
    %v5251 = vmul.f32 %v5125, 0.01
    %v5252 = vmul.f32 %v5126, 0.01
    %v5253 = vmul.f32 %v5127, 0.01
    %v5254 = vmul.f32 %v5128, 0.01
    %v5255 = vmul.f32 %v5129, 0.01
    %v5256 = vmul.f32 %v5130, 0.01
    %v5257 = vmul.f32 %v5131, 0.01
    %v5258 = vmul.f32 %v5132, 0.01
    %v5259 = vmul.f32 %v5133, 0.01
    %v5260 = vmul.f32 %v5134, 0.01
    %v5261 = vmul.f32 %v5135, 0.01
    %v5262 = vmul.f32 %v5136, 0.01
    %v5263 = vmul.f32 %v5137, 0.01
    %v5264 = vmul.f32 %v5138, 0.01
    %v5265 = vmul.f32 %v5139, 0.01
    %v5266 = vmul.f32 %v5140, 0.01
    %v5267 = vmul.f32 %v5141, 0.01
    %v5268 = vmul.f32 %v5142, 0.01
    %v5269 = vmul.f32 %v5143, 0.01
    %v5270 = vmul.f32 %v5144, 0.01
    %v5271 = vmul.f32 %v5145, 0.01
    %v5272 = vmul.f32 %v5146, 0.01
    %v5273 = vmul.f32 %v5147, 0.01
    %v5274 = vmul.f32 %v5148, 0.01
    %v5275 = vmul.f32 %v5149, 0.01
    %v5276 = vmul.f32 %v5150, 0.01
    %v5277 = vmul.f32 %v5151, 0.01
    %v5278 = vmul.f32 %v5152, 0.01
    %v5279 = vmul.f32 %v5153, 0.01
    %v5280 = vmul.f32 %v5154, 0.01
    %v5281 = vmul.f32 %v5155, 0.01
    %v5282 = vmul.f32 %v5156, 0.01
    %v5283 = vmul.f32 %v5157, 0.01
    %v5284 = vmul.f32 %v5158, 0.01
    %v5285 = vmul.f32 %v5159, 0.01
    %v5286 = vmul.f32 %v5160, 0.01
    %v5287 = vmul.f32 %v5161, 0.01
    %v5288 = vmul.f32 %v5162, 0.01
    %v5289 = vmul.f32 %v5163, 0.01
    %v5290 = vmul.f32 %v5164, 0.01
    %v5291 = vmul.f32 %v5165, 0.01
    %v5292 = vmul.f32 %v5166, 0.01
    %v5293 = vmul.f32 %v5167, 0.01
    %v5294 = vmul.f32 %v5168, 0.01
    %v5295 = vmul.f32 %v5169, 0.01
    %v5296 = vmul.f32 %v5170, 0.01
    %v5297 = vmul.f32 %v5171, 0.01
    %v5298 = vmul.f32 %v5172, 0.01
    %v5299 = vmul.f32 %v5173, 0.01
    %v5300 = vmul.f32 %v5174, 0.01
    %v5301 = vmul.f32 %v5175, 0.01
    %v5302 = vmul.f32 %v5176, 0.01
    %v5303 = vmul.f32 %v5177, 0.01
    %v5304 = vmul.f32 %v5178, 0.01
    %v5305 = vsel %vm5179, %v5116, %v5242
    %v5306 = vsel %vm5180, %v5117, %v5243
    %v5307 = vsel %vm5181, %v5118, %v5244
    %v5308 = vsel %vm5182, %v5119, %v5245
    %v5309 = vsel %vm5183, %v5120, %v5246
    %v5310 = vsel %vm5184, %v5121, %v5247
    %v5311 = vsel %vm5185, %v5122, %v5248
    %v5312 = vsel %vm5186, %v5123, %v5249
    %v5313 = vsel %vm5187, %v5124, %v5250
    %v5314 = vsel %vm5188, %v5125, %v5251
    %v5315 = vsel %vm5189, %v5126, %v5252
    %v5316 = vsel %vm5190, %v5127, %v5253
    %v5317 = vsel %vm5191, %v5128, %v5254
    %v5318 = vsel %vm5192, %v5129, %v5255
    %v5319 = vsel %vm5193, %v5130, %v5256
    %v5320 = vsel %vm5194, %v5131, %v5257
    %v5321 = vsel %vm5195, %v5132, %v5258
    %v5322 = vsel %vm5196, %v5133, %v5259
    %v5323 = vsel %vm5197, %v5134, %v5260
    %v5324 = vsel %vm5198, %v5135, %v5261
    %v5325 = vsel %vm5199, %v5136, %v5262
    %v5326 = vsel %vm5200, %v5137, %v5263
    %v5327 = vsel %vm5201, %v5138, %v5264
    %v5328 = vsel %vm5202, %v5139, %v5265
    %v5329 = vsel %vm5203, %v5140, %v5266
    %v5330 = vsel %vm5204, %v5141, %v5267
    %v5331 = vsel %vm5205, %v5142, %v5268
    %v5332 = vsel %vm5206, %v5143, %v5269
    %v5333 = vsel %vm5207, %v5144, %v5270
    %v5334 = vsel %vm5208, %v5145, %v5271
    %v5335 = vsel %vm5209, %v5146, %v5272
    %v5336 = vsel %vm5210, %v5147, %v5273
    %v5337 = vsel %vm5211, %v5148, %v5274
    %v5338 = vsel %vm5212, %v5149, %v5275
    %v5339 = vsel %vm5213, %v5150, %v5276
    %v5340 = vsel %vm5214, %v5151, %v5277
    %v5341 = vsel %vm5215, %v5152, %v5278
    %v5342 = vsel %vm5216, %v5153, %v5279
    %v5343 = vsel %vm5217, %v5154, %v5280
    %v5344 = vsel %vm5218, %v5155, %v5281
    %v5345 = vsel %vm5219, %v5156, %v5282
    %v5346 = vsel %vm5220, %v5157, %v5283
    %v5347 = vsel %vm5221, %v5158, %v5284
    %v5348 = vsel %vm5222, %v5159, %v5285
    %v5349 = vsel %vm5223, %v5160, %v5286
    %v5350 = vsel %vm5224, %v5161, %v5287
    %v5351 = vsel %vm5225, %v5162, %v5288
    %v5352 = vsel %vm5226, %v5163, %v5289
    %v5353 = vsel %vm5227, %v5164, %v5290
    %v5354 = vsel %vm5228, %v5165, %v5291
    %v5355 = vsel %vm5229, %v5166, %v5292
    %v5356 = vsel %vm5230, %v5167, %v5293
    %v5357 = vsel %vm5231, %v5168, %v5294
    %v5358 = vsel %vm5232, %v5169, %v5295
    %v5359 = vsel %vm5233, %v5170, %v5296
    %v5360 = vsel %vm5234, %v5171, %v5297
    %v5361 = vsel %vm5235, %v5172, %v5298
    %v5362 = vsel %vm5236, %v5173, %v5299
    %v5363 = vsel %vm5237, %v5174, %v5300
    %v5364 = vsel %vm5238, %v5175, %v5301
    %v5365 = vsel %vm5239, %v5176, %v5302
    %v5366 = vsel %vm5240, %v5177, %v5303
    %v5367 = vsel %vm5241, %v5178, %v5304
    %v5368 = vld [vmem:[%s2 + $0x8] sm:$0xff]
    %v5369 = vld [vmem:[%s2 + $0x18] sm:$0xff]
    %5370 = vrot.lane.b32.xlu0 %v3718, 96
    %v5371 = vpop.permute.xlu0 %5370
    %5372 = vrot.lane.b32.xlu0 %v3723, 96
    %v5373 = vpop.permute.xlu0 %5372
    %5374 = vrot.lane.b32.xlu0 %v3728, 96
    %v5375 = vpop.permute.xlu0 %5374
    %5376 = vrot.lane.b32.xlu0 %v3733, 96
    %v5377 = vpop.permute.xlu0 %5376
    %5378 = vrot.lane.b32.xlu0 %v3738, 96
    %v5379 = vpop.permute.xlu0 %5378
    %5380 = vrot.lane.b32.xlu0 %v3743, 96
    %v5381 = vpop.permute.xlu0 %5380
    %5382 = vrot.lane.b32.xlu0 %v3748, 96
    %v5383 = vpop.permute.xlu0 %5382
    %5384 = vrot.lane.b32.xlu0 %v3753, 96
    %v5385 = vpop.permute.xlu0 %5384
    %5386 = vrot.lane.b32.xlu0 %v3758, 96
    %v5387 = vpop.permute.xlu0 %5386
    %5388 = vrot.lane.b32.xlu0 %v3763, 96
    %v5389 = vpop.permute.xlu0 %5388
    %5390 = vrot.lane.b32.xlu0 %v3768, 96
    %v5391 = vpop.permute.xlu0 %5390
    %5392 = vrot.lane.b32.xlu0 %v3773, 96
    %v5393 = vpop.permute.xlu0 %5392
    %5394 = vrot.lane.b32.xlu0 %v3778, 96
    %v5395 = vpop.permute.xlu0 %5394
    %5396 = vrot.lane.b32.xlu0 %v3783, 96
    %v5397 = vpop.permute.xlu0 %5396
    %5398 = vrot.lane.b32.xlu0 %v3788, 96
    %v5399 = vpop.permute.xlu0 %5398
    %5400 = vrot.lane.b32.xlu0 %v3793, 96
    %v5401 = vpop.permute.xlu0 %5400
    %5402 = vrot.lane.b32.xlu0 %v3798, 96
    %v5403 = vpop.permute.xlu0 %5402
    %5404 = vrot.lane.b32.xlu0 %v3803, 96
    %v5405 = vpop.permute.xlu0 %5404
    %5406 = vrot.lane.b32.xlu0 %v3808, 96
    %v5407 = vpop.permute.xlu0 %5406
    %5408 = vrot.lane.b32.xlu0 %v3813, 96
    %v5409 = vpop.permute.xlu0 %5408
    %5410 = vrot.lane.b32.xlu0 %v3818, 96
    %v5411 = vpop.permute.xlu0 %5410
    %5412 = vrot.lane.b32.xlu0 %v3823, 96
    %v5413 = vpop.permute.xlu0 %5412
    %5414 = vrot.lane.b32.xlu0 %v3828, 96
    %v5415 = vpop.permute.xlu0 %5414
    %5416 = vrot.lane.b32.xlu0 %v3833, 96
    %v5417 = vpop.permute.xlu0 %5416
    %5418 = vrot.lane.b32.xlu0 %v3838, 96
    %v5419 = vpop.permute.xlu0 %5418
    %5420 = vrot.lane.b32.xlu0 %v3843, 96
    %v5421 = vpop.permute.xlu0 %5420
    %5422 = vrot.lane.b32.xlu0 %v3848, 96
    %v5423 = vpop.permute.xlu0 %5422
    %5424 = vrot.lane.b32.xlu0 %v3853, 96
    %v5425 = vpop.permute.xlu0 %5424
    %5426 = vrot.lane.b32.xlu0 %v3858, 96
    %v5427 = vpop.permute.xlu0 %5426
    %5428 = vrot.lane.b32.xlu0 %v3863, 96
    %v5429 = vpop.permute.xlu0 %5428
    %5430 = vrot.lane.b32.xlu0 %v3868, 96
    %v5431 = vpop.permute.xlu0 %5430
    %5432 = vrot.lane.b32.xlu0 %v3873, 96
    %v5433 = vpop.permute.xlu0 %5432
    %5434 = vrot.lane.b32.xlu0 %v3878, 96
    %v5435 = vpop.permute.xlu0 %5434
    %5436 = vrot.lane.b32.xlu0 %v3883, 96
    %v5437 = vpop.permute.xlu0 %5436
    %5438 = vrot.lane.b32.xlu0 %v3888, 96
    %v5439 = vpop.permute.xlu0 %5438
    %5440 = vrot.lane.b32.xlu0 %v3893, 96
    %v5441 = vpop.permute.xlu0 %5440
    %5442 = vrot.lane.b32.xlu0 %v3898, 96
    %v5443 = vpop.permute.xlu0 %5442
    %5444 = vrot.lane.b32.xlu0 %v3903, 96
    %v5445 = vpop.permute.xlu0 %5444
    %5446 = vrot.lane.b32.xlu0 %v3908, 96
    %v5447 = vpop.permute.xlu0 %5446
    %5448 = vrot.lane.b32.xlu0 %v3913, 96
    %v5449 = vpop.permute.xlu0 %5448
    %5450 = vrot.lane.b32.xlu0 %v3918, 96
    %v5451 = vpop.permute.xlu0 %5450
    %5452 = vrot.lane.b32.xlu0 %v3923, 96
    %v5453 = vpop.permute.xlu0 %5452
    %5454 = vrot.lane.b32.xlu0 %v3928, 96
    %v5455 = vpop.permute.xlu0 %5454
    %5456 = vrot.lane.b32.xlu0 %v3933, 96
    %v5457 = vpop.permute.xlu0 %5456
    %5458 = vrot.lane.b32.xlu0 %v3938, 96
    %v5459 = vpop.permute.xlu0 %5458
    %5460 = vrot.lane.b32.xlu0 %v3943, 96
    %v5461 = vpop.permute.xlu0 %5460
    %5462 = vrot.lane.b32.xlu0 %v3948, 96
    %v5463 = vpop.permute.xlu0 %5462
    %5464 = vrot.lane.b32.xlu0 %v3953, 96
    %v5465 = vpop.permute.xlu0 %5464
    %5466 = vrot.lane.b32.xlu0 %v3958, 96
    %v5467 = vpop.permute.xlu0 %5466
    %5468 = vrot.lane.b32.xlu0 %v3963, 96
    %v5469 = vpop.permute.xlu0 %5468
    %5470 = vrot.lane.b32.xlu0 %v3968, 96
    %v5471 = vpop.permute.xlu0 %5470
    %5472 = vrot.lane.b32.xlu0 %v3973, 96
    %v5473 = vpop.permute.xlu0 %5472
    %5474 = vrot.lane.b32.xlu0 %v3978, 96
    %v5475 = vpop.permute.xlu0 %5474
    %5476 = vrot.lane.b32.xlu0 %v3983, 96
    %v5477 = vpop.permute.xlu0 %5476
    %5478 = vrot.lane.b32.xlu0 %v3988, 96
    %v5479 = vpop.permute.xlu0 %5478
    %5480 = vrot.lane.b32.xlu0 %v3993, 96
    %v5481 = vpop.permute.xlu0 %5480
    %5482 = vrot.lane.b32.xlu0 %v3998, 96
    %v5483 = vpop.permute.xlu0 %5482
    %5484 = vrot.lane.b32.xlu0 %v4003, 96
    %v5485 = vpop.permute.xlu0 %5484
    %5486 = vrot.lane.b32.xlu0 %v4008, 96
    %v5487 = vpop.permute.xlu0 %5486
    %5488 = vrot.lane.b32.xlu0 %v4013, 96
    %v5489 = vpop.permute.xlu0 %5488
    %5490 = vrot.lane.b32.xlu0 %v4018, 96
    %v5491 = vpop.permute.xlu0 %5490
    %5492 = vrot.lane.b32.xlu0 %v4023, 96
    %v5493 = vpop.permute.xlu0 %5492
    %5494 = vrot.lane.b32.xlu0 %v4028, 96
    %v5495 = vpop.permute.xlu0 %5494
    %v5560 = vsel %vm90, %v5305, 0
    %v5563 = vsel %vm90, %v5306, 0
    %v5566 = vsel %vm90, %v5307, 0
    %v5569 = vsel %vm90, %v5308, 0
    %v5572 = vsel %vm90, %v5309, 0
    %v5575 = vsel %vm90, %v5310, 0
    %v5578 = vsel %vm90, %v5311, 0
    %v5581 = vsel %vm90, %v5312, 0
    %v5584 = vsel %vm90, %v5313, 0
    %v5587 = vsel %vm90, %v5314, 0
    %v5590 = vsel %vm90, %v5315, 0
    %v5593 = vsel %vm90, %v5316, 0
    %v5596 = vsel %vm90, %v5317, 0
    %v5599 = vsel %vm90, %v5318, 0
    %v5602 = vsel %vm90, %v5319, 0
    %v5605 = vsel %vm90, %v5320, 0
    %v5608 = vsel %vm90, %v5321, 0
    %v5611 = vsel %vm90, %v5322, 0
    %v5614 = vsel %vm90, %v5323, 0
    %v5617 = vsel %vm90, %v5324, 0
    %v5620 = vsel %vm90, %v5325, 0
    %v5623 = vsel %vm90, %v5326, 0
    %v5626 = vsel %vm90, %v5327, 0
    %v5629 = vsel %vm90, %v5328, 0
    %v5632 = vsel %vm90, %v5329, 0
    %v5635 = vsel %vm90, %v5330, 0
    %v5638 = vsel %vm90, %v5331, 0
    %v5641 = vsel %vm90, %v5332, 0
    %v5644 = vsel %vm90, %v5333, 0
    %v5647 = vsel %vm90, %v5334, 0
    %v5650 = vsel %vm90, %v5335, 0
    %v5653 = vsel %vm90, %v5336, 0
    %v5656 = vsel %vm90, %v5337, 0
    %v5659 = vsel %vm90, %v5338, 0
    %v5662 = vsel %vm90, %v5339, 0
    %v5665 = vsel %vm90, %v5340, 0
    %v5668 = vsel %vm90, %v5341, 0
    %v5671 = vsel %vm90, %v5342, 0
    %v5674 = vsel %vm90, %v5343, 0
    %v5677 = vsel %vm90, %v5344, 0
    %v5680 = vsel %vm90, %v5345, 0
    %v5683 = vsel %vm90, %v5346, 0
    %v5686 = vsel %vm90, %v5347, 0
    %v5689 = vsel %vm90, %v5348, 0
    %v5692 = vsel %vm90, %v5349, 0
    %v5695 = vsel %vm90, %v5350, 0
    %v5698 = vsel %vm90, %v5351, 0
    %v5701 = vsel %vm90, %v5352, 0
    %v5704 = vsel %vm90, %v5353, 0
    %v5707 = vsel %vm90, %v5354, 0
    %v5710 = vsel %vm90, %v5355, 0
    %v5713 = vsel %vm90, %v5356, 0
    %v5716 = vsel %vm90, %v5357, 0
    %v5719 = vsel %vm90, %v5358, 0
    %v5722 = vsel %vm90, %v5359, 0
    %v5725 = vsel %vm90, %v5360, 0
    %v5728 = vsel %vm90, %v5361, 0
    %v5731 = vsel %vm90, %v5362, 0
    %v5734 = vsel %vm90, %v5363, 0
    %v5737 = vsel %vm90, %v5364, 0
    %v5740 = vsel %vm90, %v5365, 0
    %v5743 = vsel %vm90, %v5366, 0
    %v5746 = vsel %vm90, %v5367, 0
    %5748 = vmatprep.subr.mxu0 0.0
    %5749 = vmatpush1.msra.mxu0 %v5368
    %5750 = vmatprep.subr.mxu0 0.0
    %5751 = vmatpush1.msra.mxu0 %v5369
    %5752 = vmatprep.subr.mxu0 0.0
    %5753 = vmatpush1.msra.mxu0 0.0
    %5754 = vmatprep.subr.mxu0 0.0
    %5755 = vmatpush1.msra.mxu0 0.0
    %5756 = vmatprep.subr.mxu0 0.0
    %5757 = vmatpush1.msra.mxu0 0.0
    %5758 = vmatprep.subr.mxu0 0.0
    %5759 = vmatpush1.msra.mxu0 0.0
    %5760 = vmatprep.subr.mxu0 0.0
    %5761 = vmatpush1.msra.mxu0 0.0
    %5762 = vmatprep.subr.mxu0 0.0
    %5763 = vmatpush1.msra.mxu0 0.0
    %5764 = vmatprep.subr.mxu0 0.0
    %5765 = vmatpush1.msra.mxu0 0.0
    %5766 = vmatprep.subr.mxu0 0.0
    %5767 = vmatpush1.msra.mxu0 0.0
    %5768 = vmatprep.subr.mxu0 0.0
    %5769 = vmatpush1.msra.mxu0 0.0
    %5770 = vmatprep.subr.mxu0 0.0
    %5771 = vmatpush1.msra.mxu0 0.0
    %5772 = vmatprep.subr.mxu0 0.0
    %5773 = vmatpush1.msra.mxu0 0.0
    %5774 = vmatprep.subr.mxu0 0.0
    %5775 = vmatpush1.msra.mxu0 0.0
    %5776 = vmatprep.subr.mxu0 0.0
    %5777 = vmatpush1.msra.mxu0 0.0
    %5778 = vmatprep.subr.mxu0 0.0
    %5779 = vmatpush1.msra.mxu0 0.0
    %5780 = vmatprep.subr.mxu0 0.0
    %5781 = vmatpush1.msra.mxu0 0.0
    %5782 = vmatprep.subr.mxu0 0.0
    %5783 = vmatpush1.msra.mxu0 0.0
    %5784 = vmatprep.subr.mxu0 0.0
    %5785 = vmatpush1.msra.mxu0 0.0
    %5786 = vmatprep.subr.mxu0 0.0
    %5787 = vmatpush1.msra.mxu0 0.0
    %5788 = vmatprep.subr.mxu0 0.0
    %5789 = vmatpush1.msra.mxu0 0.0
    %5790 = vmatprep.subr.mxu0 0.0
    %5791 = vmatpush1.msra.mxu0 0.0
    %5792 = vmatprep.subr.mxu0 0.0
    %5793 = vmatpush1.msra.mxu0 0.0
    %5794 = vmatprep.subr.mxu0 0.0
    %5795 = vmatpush1.msra.mxu0 0.0
    %5796 = vmatprep.subr.mxu0 0.0
    %5797 = vmatpush1.msra.mxu0 0.0
    %5798 = vmatprep.subr.mxu0 0.0
    %5799 = vmatpush1.msra.mxu0 0.0
    %5800 = vmatprep.subr.mxu0 0.0
    %5801 = vmatpush1.msra.mxu0 0.0
    %5802 = vmatprep.subr.mxu0 0.0
    %5803 = vmatpush1.msra.mxu0 0.0
    %5804 = vmatprep.subr.mxu0 0.0
    %5805 = vmatpush1.msra.mxu0 0.0
    %5806 = vmatprep.subr.mxu0 0.0
    %5807 = vmatpush1.msra.mxu0 0.0
    %5808 = vmatprep.subr.mxu0 0.0
    %5809 = vmatpush1.msra.mxu0 0.0
    %5810 = vmatprep.subr.mxu0 0.0
    %5811 = vmatpush1.msra.mxu0 0.0
    %5812 = vmatprep.mubr.f32.mxu0 0.0
    %5813 = vmatmul.mubr.f32.gmra.mrb[0].mxu0 %v5560
    %v5814 = vpop.f32.mrb[0].mxu0
    %v5815 = vadd.f32 %v5371, %v5814
    %v5816 = vpop.f32.mrb[0].mxu0
    %5817 = vmatprep.mubr.f32.mxu0 0.0
    %5818 = vmatmul.mubr.f32.gmra.mrb[0].mxu0 %v5563
    %v5819 = vpop.f32.mrb[0].mxu0
    %v5820 = vadd.f32 %v5373, %v5819
    %v5821 = vpop.f32.mrb[0].mxu0
    %5822 = vmatprep.mubr.f32.mxu0 0.0
    %5823 = vmatmul.mubr.f32.gmra.mrb[0].mxu0 %v5566
    %v5824 = vpop.f32.mrb[0].mxu0
    %v5825 = vadd.f32 %v5375, %v5824
    %v5826 = vpop.f32.mrb[0].mxu0
    %5827 = vmatprep.mubr.f32.mxu0 0.0
    %5828 = vmatmul.mubr.f32.gmra.mrb[0].mxu0 %v5569
    %v5829 = vpop.f32.mrb[0].mxu0
    %v5830 = vadd.f32 %v5377, %v5829
    %v5831 = vpop.f32.mrb[0].mxu0
    %5832 = vmatprep.mubr.f32.mxu0 0.0
    %5833 = vmatmul.mubr.f32.gmra.mrb[0].mxu0 %v5572
    %v5834 = vpop.f32.mrb[0].mxu0
    %v5835 = vadd.f32 %v5379, %v5834
    %v5836 = vpop.f32.mrb[0].mxu0
    %5837 = vmatprep.mubr.f32.mxu0 0.0
    %5838 = vmatmul.mubr.f32.gmra.mrb[0].mxu0 %v5575
    %v5839 = vpop.f32.mrb[0].mxu0
    %v5840 = vadd.f32 %v5381, %v5839
    %v5841 = vpop.f32.mrb[0].mxu0
    %5842 = vmatprep.mubr.f32.mxu0 0.0
    %5843 = vmatmul.mubr.f32.gmra.mrb[0].mxu0 %v5578
    %v5844 = vpop.f32.mrb[0].mxu0
    %v5845 = vadd.f32 %v5383, %v5844
    %v5846 = vpop.f32.mrb[0].mxu0
    %5847 = vmatprep.mubr.f32.mxu0 0.0
    %5848 = vmatmul.mubr.f32.gmra.mrb[0].mxu0 %v5581
    %v5849 = vpop.f32.mrb[0].mxu0
    %v5850 = vadd.f32 %v5385, %v5849
    %v5851 = vpop.f32.mrb[0].mxu0
    %5852 = vmatprep.mubr.f32.mxu0 0.0
    %5853 = vmatmul.mubr.f32.gmra.mrb[0].mxu0 %v5584
    %v5854 = vpop.f32.mrb[0].mxu0
    %v5855 = vadd.f32 %v5387, %v5854
    %v5856 = vpop.f32.mrb[0].mxu0
    %5857 = vmatprep.mubr.f32.mxu0 0.0
    %5858 = vmatmul.mubr.f32.gmra.mrb[0].mxu0 %v5587
    %v5859 = vpop.f32.mrb[0].mxu0
    %v5860 = vadd.f32 %v5389, %v5859
    %v5861 = vpop.f32.mrb[0].mxu0
    %5862 = vmatprep.mubr.f32.mxu0 0.0
    %5863 = vmatmul.mubr.f32.gmra.mrb[0].mxu0 %v5590
    %v5864 = vpop.f32.mrb[0].mxu0
    %v5865 = vadd.f32 %v5391, %v5864
    %v5866 = vpop.f32.mrb[0].mxu0
    %5867 = vmatprep.mubr.f32.mxu0 0.0
    %5868 = vmatmul.mubr.f32.gmra.mrb[0].mxu0 %v5593
    %v5869 = vpop.f32.mrb[0].mxu0
    %v5870 = vadd.f32 %v5393, %v5869
    %v5871 = vpop.f32.mrb[0].mxu0
    %5872 = vmatprep.mubr.f32.mxu0 0.0
    %5873 = vmatmul.mubr.f32.gmra.mrb[0].mxu0 %v5596
    %v5874 = vpop.f32.mrb[0].mxu0
    %v5875 = vadd.f32 %v5395, %v5874
    %v5876 = vpop.f32.mrb[0].mxu0
    %5877 = vmatprep.mubr.f32.mxu0 0.0
    %5878 = vmatmul.mubr.f32.gmra.mrb[0].mxu0 %v5599
    %v5879 = vpop.f32.mrb[0].mxu0
    %v5880 = vadd.f32 %v5397, %v5879
    %v5881 = vpop.f32.mrb[0].mxu0
    %5882 = vmatprep.mubr.f32.mxu0 0.0
    %5883 = vmatmul.mubr.f32.gmra.mrb[0].mxu0 %v5602
    %v5884 = vpop.f32.mrb[0].mxu0
    %v5885 = vadd.f32 %v5399, %v5884
    %v5886 = vpop.f32.mrb[0].mxu0
    %5887 = vmatprep.mubr.f32.mxu0 0.0
    %5888 = vmatmul.mubr.f32.gmra.mrb[0].mxu0 %v5605
    %v5889 = vpop.f32.mrb[0].mxu0
    %v5890 = vadd.f32 %v5401, %v5889
    %v5891 = vpop.f32.mrb[0].mxu0
    %5892 = vmatprep.mubr.f32.mxu0 0.0
    %5893 = vmatmul.mubr.f32.gmra.mrb[0].mxu0 %v5608
    %v5894 = vpop.f32.mrb[0].mxu0
    %v5895 = vadd.f32 %v5403, %v5894
    %v5896 = vpop.f32.mrb[0].mxu0
    %5897 = vmatprep.mubr.f32.mxu0 0.0
    %5898 = vmatmul.mubr.f32.gmra.mrb[0].mxu0 %v5611
    %v5899 = vpop.f32.mrb[0].mxu0
    %v5900 = vadd.f32 %v5405, %v5899
    %v5901 = vpop.f32.mrb[0].mxu0
    %5902 = vmatprep.mubr.f32.mxu0 0.0
    %5903 = vmatmul.mubr.f32.gmra.mrb[0].mxu0 %v5614
    %v5904 = vpop.f32.mrb[0].mxu0
    %v5905 = vadd.f32 %v5407, %v5904
    %v5906 = vpop.f32.mrb[0].mxu0
    %5907 = vmatprep.mubr.f32.mxu0 0.0
    %5908 = vmatmul.mubr.f32.gmra.mrb[0].mxu0 %v5617
    %v5909 = vpop.f32.mrb[0].mxu0
    %v5910 = vadd.f32 %v5409, %v5909
    %v5911 = vpop.f32.mrb[0].mxu0
    %5912 = vmatprep.mubr.f32.mxu0 0.0
    %5913 = vmatmul.mubr.f32.gmra.mrb[0].mxu0 %v5620
    %v5914 = vpop.f32.mrb[0].mxu0
    %v5915 = vadd.f32 %v5411, %v5914
    %v5916 = vpop.f32.mrb[0].mxu0
    %5917 = vmatprep.mubr.f32.mxu0 0.0
    %5918 = vmatmul.mubr.f32.gmra.mrb[0].mxu0 %v5623
    %v5919 = vpop.f32.mrb[0].mxu0
    %v5920 = vadd.f32 %v5413, %v5919
    %v5921 = vpop.f32.mrb[0].mxu0
    %5922 = vmatprep.mubr.f32.mxu0 0.0
    %5923 = vmatmul.mubr.f32.gmra.mrb[0].mxu0 %v5626
    %v5924 = vpop.f32.mrb[0].mxu0
    %v5925 = vadd.f32 %v5415, %v5924
    %v5926 = vpop.f32.mrb[0].mxu0
    %5927 = vmatprep.mubr.f32.mxu0 0.0
    %5928 = vmatmul.mubr.f32.gmra.mrb[0].mxu0 %v5629
    %v5929 = vpop.f32.mrb[0].mxu0
    %v5930 = vadd.f32 %v5417, %v5929
    %v5931 = vpop.f32.mrb[0].mxu0
    %5932 = vmatprep.mubr.f32.mxu0 0.0
    %5933 = vmatmul.mubr.f32.gmra.mrb[0].mxu0 %v5632
    %v5934 = vpop.f32.mrb[0].mxu0
    %v5935 = vadd.f32 %v5419, %v5934
    %v5936 = vpop.f32.mrb[0].mxu0
    %5937 = vmatprep.mubr.f32.mxu0 0.0
    %5938 = vmatmul.mubr.f32.gmra.mrb[0].mxu0 %v5635
    %v5939 = vpop.f32.mrb[0].mxu0
    %v5940 = vadd.f32 %v5421, %v5939
    %v5941 = vpop.f32.mrb[0].mxu0
    %5942 = vmatprep.mubr.f32.mxu0 0.0
    %5943 = vmatmul.mubr.f32.gmra.mrb[0].mxu0 %v5638
    %v5944 = vpop.f32.mrb[0].mxu0
    %v5945 = vadd.f32 %v5423, %v5944
    %v5946 = vpop.f32.mrb[0].mxu0
    %5947 = vmatprep.mubr.f32.mxu0 0.0
    %5948 = vmatmul.mubr.f32.gmra.mrb[0].mxu0 %v5641
    %v5949 = vpop.f32.mrb[0].mxu0
    %v5950 = vadd.f32 %v5425, %v5949
    %v5951 = vpop.f32.mrb[0].mxu0
    %5952 = vmatprep.mubr.f32.mxu0 0.0
    %5953 = vmatmul.mubr.f32.gmra.mrb[0].mxu0 %v5644
    %v5954 = vpop.f32.mrb[0].mxu0
    %v5955 = vadd.f32 %v5427, %v5954
    %v5956 = vpop.f32.mrb[0].mxu0
    %5957 = vmatprep.mubr.f32.mxu0 0.0
    %5958 = vmatmul.mubr.f32.gmra.mrb[0].mxu0 %v5647
    %v5959 = vpop.f32.mrb[0].mxu0
    %v5960 = vadd.f32 %v5429, %v5959
    %v5961 = vpop.f32.mrb[0].mxu0
    %5962 = vmatprep.mubr.f32.mxu0 0.0
    %5963 = vmatmul.mubr.f32.gmra.mrb[0].mxu0 %v5650
    %v5964 = vpop.f32.mrb[0].mxu0
    %v5965 = vadd.f32 %v5431, %v5964
    %v5966 = vpop.f32.mrb[0].mxu0
    %5967 = vmatprep.mubr.f32.mxu0 0.0
    %5968 = vmatmul.mubr.f32.gmra.mrb[0].mxu0 %v5653
    %v5969 = vpop.f32.mrb[0].mxu0
    %v5970 = vadd.f32 %v5433, %v5969
    %v5971 = vpop.f32.mrb[0].mxu0
    %5972 = vmatprep.mubr.f32.mxu0 0.0
    %5973 = vmatmul.mubr.f32.gmra.mrb[0].mxu0 %v5656
    %v5974 = vpop.f32.mrb[0].mxu0
    %v5975 = vadd.f32 %v5435, %v5974
    %v5976 = vpop.f32.mrb[0].mxu0
    %5977 = vmatprep.mubr.f32.mxu0 0.0
    %5978 = vmatmul.mubr.f32.gmra.mrb[0].mxu0 %v5659
    %v5979 = vpop.f32.mrb[0].mxu0
    %v5980 = vadd.f32 %v5437, %v5979
    %v5981 = vpop.f32.mrb[0].mxu0
    %5982 = vmatprep.mubr.f32.mxu0 0.0
    %5983 = vmatmul.mubr.f32.gmra.mrb[0].mxu0 %v5662
    %v5984 = vpop.f32.mrb[0].mxu0
    %v5985 = vadd.f32 %v5439, %v5984
    %v5986 = vpop.f32.mrb[0].mxu0
    %5987 = vmatprep.mubr.f32.mxu0 0.0
    %5988 = vmatmul.mubr.f32.gmra.mrb[0].mxu0 %v5665
    %v5989 = vpop.f32.mrb[0].mxu0
    %v5990 = vadd.f32 %v5441, %v5989
    %v5991 = vpop.f32.mrb[0].mxu0
    %5992 = vmatprep.mubr.f32.mxu0 0.0
    %5993 = vmatmul.mubr.f32.gmra.mrb[0].mxu0 %v5668
    %v5994 = vpop.f32.mrb[0].mxu0
    %v5995 = vadd.f32 %v5443, %v5994
    %v5996 = vpop.f32.mrb[0].mxu0
    %5997 = vmatprep.mubr.f32.mxu0 0.0
    %5998 = vmatmul.mubr.f32.gmra.mrb[0].mxu0 %v5671
    %v5999 = vpop.f32.mrb[0].mxu0
    %v6000 = vadd.f32 %v5445, %v5999
    %v6001 = vpop.f32.mrb[0].mxu0
    %6002 = vmatprep.mubr.f32.mxu0 0.0
    %6003 = vmatmul.mubr.f32.gmra.mrb[0].mxu0 %v5674
    %v6004 = vpop.f32.mrb[0].mxu0
    %v6005 = vadd.f32 %v5447, %v6004
    %v6006 = vpop.f32.mrb[0].mxu0
    %6007 = vmatprep.mubr.f32.mxu0 0.0
    %6008 = vmatmul.mubr.f32.gmra.mrb[0].mxu0 %v5677
    %v6009 = vpop.f32.mrb[0].mxu0
    %v6010 = vadd.f32 %v5449, %v6009
    %v6011 = vpop.f32.mrb[0].mxu0
    %6012 = vmatprep.mubr.f32.mxu0 0.0
    %6013 = vmatmul.mubr.f32.gmra.mrb[0].mxu0 %v5680
    %v6014 = vpop.f32.mrb[0].mxu0
    %v6015 = vadd.f32 %v5451, %v6014
    %v6016 = vpop.f32.mrb[0].mxu0
    %6017 = vmatprep.mubr.f32.mxu0 0.0
    %6018 = vmatmul.mubr.f32.gmra.mrb[0].mxu0 %v5683
    %v6019 = vpop.f32.mrb[0].mxu0
    %v6020 = vadd.f32 %v5453, %v6019
    %v6021 = vpop.f32.mrb[0].mxu0
    %6022 = vmatprep.mubr.f32.mxu0 0.0
    %6023 = vmatmul.mubr.f32.gmra.mrb[0].mxu0 %v5686
    %v6024 = vpop.f32.mrb[0].mxu0
    %v6025 = vadd.f32 %v5455, %v6024
    %v6026 = vpop.f32.mrb[0].mxu0
    %6027 = vmatprep.mubr.f32.mxu0 0.0
    %6028 = vmatmul.mubr.f32.gmra.mrb[0].mxu0 %v5689
    %v6029 = vpop.f32.mrb[0].mxu0
    %v6030 = vadd.f32 %v5457, %v6029
    %v6031 = vpop.f32.mrb[0].mxu0
    %6032 = vmatprep.mubr.f32.mxu0 0.0
    %6033 = vmatmul.mubr.f32.gmra.mrb[0].mxu0 %v5692
    %v6034 = vpop.f32.mrb[0].mxu0
    %v6035 = vadd.f32 %v5459, %v6034
    %v6036 = vpop.f32.mrb[0].mxu0
    %6037 = vmatprep.mubr.f32.mxu0 0.0
    %6038 = vmatmul.mubr.f32.gmra.mrb[0].mxu0 %v5695
    %v6039 = vpop.f32.mrb[0].mxu0
    %v6040 = vadd.f32 %v5461, %v6039
    %v6041 = vpop.f32.mrb[0].mxu0
    %6042 = vmatprep.mubr.f32.mxu0 0.0
    %6043 = vmatmul.mubr.f32.gmra.mrb[0].mxu0 %v5698
    %v6044 = vpop.f32.mrb[0].mxu0
    %v6045 = vadd.f32 %v5463, %v6044
    %v6046 = vpop.f32.mrb[0].mxu0
    %6047 = vmatprep.mubr.f32.mxu0 0.0
    %6048 = vmatmul.mubr.f32.gmra.mrb[0].mxu0 %v5701
    %v6049 = vpop.f32.mrb[0].mxu0
    %v6050 = vadd.f32 %v5465, %v6049
    %v6051 = vpop.f32.mrb[0].mxu0
    %6052 = vmatprep.mubr.f32.mxu0 0.0
    %6053 = vmatmul.mubr.f32.gmra.mrb[0].mxu0 %v5704
    %v6054 = vpop.f32.mrb[0].mxu0
    %v6055 = vadd.f32 %v5467, %v6054
    %v6056 = vpop.f32.mrb[0].mxu0
    %6057 = vmatprep.mubr.f32.mxu0 0.0
    %6058 = vmatmul.mubr.f32.gmra.mrb[0].mxu0 %v5707
    %v6059 = vpop.f32.mrb[0].mxu0
    %v6060 = vadd.f32 %v5469, %v6059
    %v6061 = vpop.f32.mrb[0].mxu0
    %6062 = vmatprep.mubr.f32.mxu0 0.0
    %6063 = vmatmul.mubr.f32.gmra.mrb[0].mxu0 %v5710
    %v6064 = vpop.f32.mrb[0].mxu0
    %v6065 = vadd.f32 %v5471, %v6064
    %v6066 = vpop.f32.mrb[0].mxu0
    %6067 = vmatprep.mubr.f32.mxu0 0.0
    %6068 = vmatmul.mubr.f32.gmra.mrb[0].mxu0 %v5713
    %v6069 = vpop.f32.mrb[0].mxu0
    %v6070 = vadd.f32 %v5473, %v6069
    %v6071 = vpop.f32.mrb[0].mxu0
    %6072 = vmatprep.mubr.f32.mxu0 0.0
    %6073 = vmatmul.mubr.f32.gmra.mrb[0].mxu0 %v5716
    %v6074 = vpop.f32.mrb[0].mxu0
    %v6075 = vadd.f32 %v5475, %v6074
    %v6076 = vpop.f32.mrb[0].mxu0
    %6077 = vmatprep.mubr.f32.mxu0 0.0
    %6078 = vmatmul.mubr.f32.gmra.mrb[0].mxu0 %v5719
    %v6079 = vpop.f32.mrb[0].mxu0
    %v6080 = vadd.f32 %v5477, %v6079
    %v6081 = vpop.f32.mrb[0].mxu0
    %6082 = vmatprep.mubr.f32.mxu0 0.0
    %6083 = vmatmul.mubr.f32.gmra.mrb[0].mxu0 %v5722
    %v6084 = vpop.f32.mrb[0].mxu0
    %v6085 = vadd.f32 %v5479, %v6084
    %v6086 = vpop.f32.mrb[0].mxu0
    %6087 = vmatprep.mubr.f32.mxu0 0.0
    %6088 = vmatmul.mubr.f32.gmra.mrb[0].mxu0 %v5725
    %v6089 = vpop.f32.mrb[0].mxu0
    %v6090 = vadd.f32 %v5481, %v6089
    %v6091 = vpop.f32.mrb[0].mxu0
    %6092 = vmatprep.mubr.f32.mxu0 0.0
    %6093 = vmatmul.mubr.f32.gmra.mrb[0].mxu0 %v5728
    %v6094 = vpop.f32.mrb[0].mxu0
    %v6095 = vadd.f32 %v5483, %v6094
    %v6096 = vpop.f32.mrb[0].mxu0
    %6097 = vmatprep.mubr.f32.mxu0 0.0
    %6098 = vmatmul.mubr.f32.gmra.mrb[0].mxu0 %v5731
    %v6099 = vpop.f32.mrb[0].mxu0
    %v6100 = vadd.f32 %v5485, %v6099
    %v6101 = vpop.f32.mrb[0].mxu0
    %6102 = vmatprep.mubr.f32.mxu0 0.0
    %6103 = vmatmul.mubr.f32.gmra.mrb[0].mxu0 %v5734
    %v6104 = vpop.f32.mrb[0].mxu0
    %v6105 = vadd.f32 %v5487, %v6104
    %v6106 = vpop.f32.mrb[0].mxu0
    %6107 = vmatprep.mubr.f32.mxu0 0.0
    %6108 = vmatmul.mubr.f32.gmra.mrb[0].mxu0 %v5737
    %v6109 = vpop.f32.mrb[0].mxu0
    %v6110 = vadd.f32 %v5489, %v6109
    %v6111 = vpop.f32.mrb[0].mxu0
    %6112 = vmatprep.mubr.f32.mxu0 0.0
    %6113 = vmatmul.mubr.f32.gmra.mrb[0].mxu0 %v5740
    %v6114 = vpop.f32.mrb[0].mxu0
    %v6115 = vadd.f32 %v5491, %v6114
    %v6116 = vpop.f32.mrb[0].mxu0
    %6117 = vmatprep.mubr.f32.mxu0 0.0
    %6118 = vmatmul.mubr.f32.gmra.mrb[0].mxu0 %v5743
    %v6119 = vpop.f32.mrb[0].mxu0
    %v6120 = vadd.f32 %v5493, %v6119
    %v6121 = vpop.f32.mrb[0].mxu0
    %6122 = vmatprep.mubr.f32.mxu0 0.0
    %6123 = vmatmul.mubr.f32.gmra.mrb[0].mxu0 %v5746
    %v6124 = vpop.f32.mrb[0].mxu0
    %v6125 = vadd.f32 %v5495, %v6124
    %v6126 = vpop.f32.mrb[0].mxu0
    %6127 = vdwg.mxu0
    %6128 = vrot.lane.b32.xlu0 %v88, 48
    %v6129 = vpop.permute.xlu0 %6128
    %v6131 = vadd.f32 %v5815, %v6129
    %v6132 = vadd.f32 %v5820, %v6129
    %v6133 = vadd.f32 %v5825, %v6129
    %v6134 = vadd.f32 %v5830, %v6129
    %v6135 = vadd.f32 %v5835, %v6129
    %v6136 = vadd.f32 %v5840, %v6129
    %v6137 = vadd.f32 %v5845, %v6129
    %v6138 = vadd.f32 %v5850, %v6129
    %v6139 = vadd.f32 %v5855, %v6129
    %v6140 = vadd.f32 %v5860, %v6129
    %v6141 = vadd.f32 %v5865, %v6129
    %v6142 = vadd.f32 %v5870, %v6129
    %v6143 = vadd.f32 %v5875, %v6129
    %v6144 = vadd.f32 %v5880, %v6129
    %v6145 = vadd.f32 %v5885, %v6129
    %v6146 = vadd.f32 %v5890, %v6129
    %v6147 = vadd.f32 %v5895, %v6129
    %v6148 = vadd.f32 %v5900, %v6129
    %v6149 = vadd.f32 %v5905, %v6129
    %v6150 = vadd.f32 %v5910, %v6129
    %v6151 = vadd.f32 %v5915, %v6129
    %v6152 = vadd.f32 %v5920, %v6129
    %v6153 = vadd.f32 %v5925, %v6129
    %v6154 = vadd.f32 %v5930, %v6129
    %v6155 = vadd.f32 %v5935, %v6129
    %v6156 = vadd.f32 %v5940, %v6129
    %v6157 = vadd.f32 %v5945, %v6129
    %v6158 = vadd.f32 %v5950, %v6129
    %v6159 = vadd.f32 %v5955, %v6129
    %v6160 = vadd.f32 %v5960, %v6129
    %v6161 = vadd.f32 %v5965, %v6129
    %v6162 = vadd.f32 %v5970, %v6129
    %v6163 = vadd.f32 %v5975, %v6129
    %v6164 = vadd.f32 %v5980, %v6129
    %v6165 = vadd.f32 %v5985, %v6129
    %v6166 = vadd.f32 %v5990, %v6129
    %v6167 = vadd.f32 %v5995, %v6129
    %v6168 = vadd.f32 %v6000, %v6129
    %v6169 = vadd.f32 %v6005, %v6129
    %v6170 = vadd.f32 %v6010, %v6129
    %v6171 = vadd.f32 %v6015, %v6129
    %v6172 = vadd.f32 %v6020, %v6129
    %v6173 = vadd.f32 %v6025, %v6129
    %v6174 = vadd.f32 %v6030, %v6129
    %v6175 = vadd.f32 %v6035, %v6129
    %v6176 = vadd.f32 %v6040, %v6129
    %v6177 = vadd.f32 %v6045, %v6129
    %v6178 = vadd.f32 %v6050, %v6129
    %v6179 = vadd.f32 %v6055, %v6129
    %v6180 = vadd.f32 %v6060, %v6129
    %v6181 = vadd.f32 %v6065, %v6129
    %v6182 = vadd.f32 %v6070, %v6129
    %v6183 = vadd.f32 %v6075, %v6129
    %v6184 = vadd.f32 %v6080, %v6129
    %v6185 = vadd.f32 %v6085, %v6129
    %v6186 = vadd.f32 %v6090, %v6129
    %v6187 = vadd.f32 %v6095, %v6129
    %v6188 = vadd.f32 %v6100, %v6129
    %v6189 = vadd.f32 %v6105, %v6129
    %v6190 = vadd.f32 %v6110, %v6129
    %v6191 = vadd.f32 %v6115, %v6129
    %v6192 = vadd.f32 %v6120, %v6129
    %v6193 = vadd.f32 %v6125, %v6129
    %v6194 = vsub.f32 0.0, %v6131
    %v6195 = vsub.f32 0.0, %v6132
    %v6196 = vsub.f32 0.0, %v6133
    %v6197 = vsub.f32 0.0, %v6134
    %v6198 = vsub.f32 0.0, %v6135
    %v6199 = vsub.f32 0.0, %v6136
    %v6200 = vsub.f32 0.0, %v6137
    %v6201 = vsub.f32 0.0, %v6138
    %v6202 = vsub.f32 0.0, %v6139
    %v6203 = vsub.f32 0.0, %v6140
    %v6204 = vsub.f32 0.0, %v6141
    %v6205 = vsub.f32 0.0, %v6142
    %v6206 = vsub.f32 0.0, %v6143
    %v6207 = vsub.f32 0.0, %v6144
    %v6208 = vsub.f32 0.0, %v6145
    %v6209 = vsub.f32 0.0, %v6146
    %v6210 = vsub.f32 0.0, %v6147
    %v6211 = vsub.f32 0.0, %v6148
    %v6212 = vsub.f32 0.0, %v6149
    %v6213 = vsub.f32 0.0, %v6150
    %v6214 = vsub.f32 0.0, %v6151
    %v6215 = vsub.f32 0.0, %v6152
    %v6216 = vsub.f32 0.0, %v6153
    %v6217 = vsub.f32 0.0, %v6154
    %v6218 = vsub.f32 0.0, %v6155
    %v6219 = vsub.f32 0.0, %v6156
    %v6220 = vsub.f32 0.0, %v6157
    %v6221 = vsub.f32 0.0, %v6158
    %v6222 = vsub.f32 0.0, %v6159
    %v6223 = vsub.f32 0.0, %v6160
    %v6224 = vsub.f32 0.0, %v6161
    %v6225 = vsub.f32 0.0, %v6162
    %v6226 = vsub.f32 0.0, %v6163
    %v6227 = vsub.f32 0.0, %v6164
    %v6228 = vsub.f32 0.0, %v6165
    %v6229 = vsub.f32 0.0, %v6166
    %v6230 = vsub.f32 0.0, %v6167
    %v6231 = vsub.f32 0.0, %v6168
    %v6232 = vsub.f32 0.0, %v6169
    %v6233 = vsub.f32 0.0, %v6170
    %v6234 = vsub.f32 0.0, %v6171
    %v6235 = vsub.f32 0.0, %v6172
    %v6236 = vsub.f32 0.0, %v6173
    %v6237 = vsub.f32 0.0, %v6174
    %v6238 = vsub.f32 0.0, %v6175
    %v6239 = vsub.f32 0.0, %v6176
    %v6240 = vsub.f32 0.0, %v6177
    %v6241 = vsub.f32 0.0, %v6178
    %v6242 = vsub.f32 0.0, %v6179
    %v6243 = vsub.f32 0.0, %v6180
    %v6244 = vsub.f32 0.0, %v6181
    %v6245 = vsub.f32 0.0, %v6182
    %v6246 = vsub.f32 0.0, %v6183
    %v6247 = vsub.f32 0.0, %v6184
    %v6248 = vsub.f32 0.0, %v6185
    %v6249 = vsub.f32 0.0, %v6186
    %v6250 = vsub.f32 0.0, %v6187
    %v6251 = vsub.f32 0.0, %v6188
    %v6252 = vsub.f32 0.0, %v6189
    %v6253 = vsub.f32 0.0, %v6190
    %v6254 = vsub.f32 0.0, %v6191
    %v6255 = vsub.f32 0.0, %v6192
    %v6256 = vsub.f32 0.0, %v6193
    %v6257 = vmul.f32 %v6194, 1.442695
    %v6258 = vpow.pop %v6257
    %v6259 = vmul.f32 %v6195, 1.442695
    %v6260 = vpow.pop %v6259
    %v6261 = vmul.f32 %v6196, 1.442695
    %v6262 = vpow.pop %v6261
    %v6263 = vmul.f32 %v6197, 1.442695
    %v6264 = vpow.pop %v6263
    %v6265 = vmul.f32 %v6198, 1.442695
    %v6266 = vpow.pop %v6265
    %v6267 = vmul.f32 %v6199, 1.442695
    %v6268 = vpow.pop %v6267
    %v6269 = vmul.f32 %v6200, 1.442695
    %v6270 = vpow.pop %v6269
    %v6271 = vmul.f32 %v6201, 1.442695
    %v6272 = vpow.pop %v6271
    %v6273 = vmul.f32 %v6202, 1.442695
    %v6274 = vpow.pop %v6273
    %v6275 = vmul.f32 %v6203, 1.442695
    %v6276 = vpow.pop %v6275
    %v6277 = vmul.f32 %v6204, 1.442695
    %v6278 = vpow.pop %v6277
    %v6279 = vmul.f32 %v6205, 1.442695
    %v6280 = vpow.pop %v6279
    %v6281 = vmul.f32 %v6206, 1.442695
    %v6282 = vpow.pop %v6281
    %v6283 = vmul.f32 %v6207, 1.442695
    %v6284 = vpow.pop %v6283
    %v6285 = vmul.f32 %v6208, 1.442695
    %v6286 = vpow.pop %v6285
    %v6287 = vmul.f32 %v6209, 1.442695
    %v6288 = vpow.pop %v6287
    %v6289 = vmul.f32 %v6210, 1.442695
    %v6290 = vpow.pop %v6289
    %v6291 = vmul.f32 %v6211, 1.442695
    %v6292 = vpow.pop %v6291
    %v6293 = vmul.f32 %v6212, 1.442695
    %v6294 = vpow.pop %v6293
    %v6295 = vmul.f32 %v6213, 1.442695
    %v6296 = vpow.pop %v6295
    %v6297 = vmul.f32 %v6214, 1.442695
    %v6298 = vpow.pop %v6297
    %v6299 = vmul.f32 %v6215, 1.442695
    %v6300 = vpow.pop %v6299
    %v6301 = vmul.f32 %v6216, 1.442695
    %v6302 = vpow.pop %v6301
    %v6303 = vmul.f32 %v6217, 1.442695
    %v6304 = vpow.pop %v6303
    %v6305 = vmul.f32 %v6218, 1.442695
    %v6306 = vpow.pop %v6305
    %v6307 = vmul.f32 %v6219, 1.442695
    %v6308 = vpow.pop %v6307
    %v6309 = vmul.f32 %v6220, 1.442695
    %v6310 = vpow.pop %v6309
    %v6311 = vmul.f32 %v6221, 1.442695
    %v6312 = vpow.pop %v6311
    %v6313 = vmul.f32 %v6222, 1.442695
    %v6314 = vpow.pop %v6313
    %v6315 = vmul.f32 %v6223, 1.442695
    %v6316 = vpow.pop %v6315
    %v6317 = vmul.f32 %v6224, 1.442695
    %v6318 = vpow.pop %v6317
    %v6319 = vmul.f32 %v6225, 1.442695
    %v6320 = vpow.pop %v6319
    %v6321 = vmul.f32 %v6226, 1.442695
    %v6322 = vpow.pop %v6321
    %v6323 = vmul.f32 %v6227, 1.442695
    %v6324 = vpow.pop %v6323
    %v6325 = vmul.f32 %v6228, 1.442695
    %v6326 = vpow.pop %v6325
    %v6327 = vmul.f32 %v6229, 1.442695
    %v6328 = vpow.pop %v6327
    %v6329 = vmul.f32 %v6230, 1.442695
    %v6330 = vpow.pop %v6329
    %v6331 = vmul.f32 %v6231, 1.442695
    %v6332 = vpow.pop %v6331
    %v6333 = vmul.f32 %v6232, 1.442695
    %v6334 = vpow.pop %v6333
    %v6335 = vmul.f32 %v6233, 1.442695
    %v6336 = vpow.pop %v6335
    %v6337 = vmul.f32 %v6234, 1.442695
    %v6338 = vpow.pop %v6337
    %v6339 = vmul.f32 %v6235, 1.442695
    %v6340 = vpow.pop %v6339
    %v6341 = vmul.f32 %v6236, 1.442695
    %v6342 = vpow.pop %v6341
    %v6343 = vmul.f32 %v6237, 1.442695
    %v6344 = vpow.pop %v6343
    %v6345 = vmul.f32 %v6238, 1.442695
    %v6346 = vpow.pop %v6345
    %v6347 = vmul.f32 %v6239, 1.442695
    %v6348 = vpow.pop %v6347
    %v6349 = vmul.f32 %v6240, 1.442695
    %v6350 = vpow.pop %v6349
    %v6351 = vmul.f32 %v6241, 1.442695
    %v6352 = vpow.pop %v6351
    %v6353 = vmul.f32 %v6242, 1.442695
    %v6354 = vpow.pop %v6353
    %v6355 = vmul.f32 %v6243, 1.442695
    %v6356 = vpow.pop %v6355
    %v6357 = vmul.f32 %v6244, 1.442695
    %v6358 = vpow.pop %v6357
    %v6359 = vmul.f32 %v6245, 1.442695
    %v6360 = vpow.pop %v6359
    %v6361 = vmul.f32 %v6246, 1.442695
    %v6362 = vpow.pop %v6361
    %v6363 = vmul.f32 %v6247, 1.442695
    %v6364 = vpow.pop %v6363
    %v6365 = vmul.f32 %v6248, 1.442695
    %v6366 = vpow.pop %v6365
    %v6367 = vmul.f32 %v6249, 1.442695
    %v6368 = vpow.pop %v6367
    %v6369 = vmul.f32 %v6250, 1.442695
    %v6370 = vpow.pop %v6369
    %v6371 = vmul.f32 %v6251, 1.442695
    %v6372 = vpow.pop %v6371
    %v6373 = vmul.f32 %v6252, 1.442695
    %v6374 = vpow.pop %v6373
    %v6375 = vmul.f32 %v6253, 1.442695
    %v6376 = vpow.pop %v6375
    %v6377 = vmul.f32 %v6254, 1.442695
    %v6378 = vpow.pop %v6377
    %v6379 = vmul.f32 %v6255, 1.442695
    %v6380 = vpow.pop %v6379
    %v6381 = vmul.f32 %v6256, 1.442695
    %v6382 = vpow.pop %v6381
    %v6383 = vadd.f32 %v6258, 1.0
    %v6384 = vadd.f32 %v6260, 1.0
    %v6385 = vadd.f32 %v6262, 1.0
    %v6386 = vadd.f32 %v6264, 1.0
    %v6387 = vadd.f32 %v6266, 1.0
    %v6388 = vadd.f32 %v6268, 1.0
    %v6389 = vadd.f32 %v6270, 1.0
    %v6390 = vadd.f32 %v6272, 1.0
    %v6391 = vadd.f32 %v6274, 1.0
    %v6392 = vadd.f32 %v6276, 1.0
    %v6393 = vadd.f32 %v6278, 1.0
    %v6394 = vadd.f32 %v6280, 1.0
    %v6395 = vadd.f32 %v6282, 1.0
    %v6396 = vadd.f32 %v6284, 1.0
    %v6397 = vadd.f32 %v6286, 1.0
    %v6398 = vadd.f32 %v6288, 1.0
    %v6399 = vadd.f32 %v6290, 1.0
    %v6400 = vadd.f32 %v6292, 1.0
    %v6401 = vadd.f32 %v6294, 1.0
    %v6402 = vadd.f32 %v6296, 1.0
    %v6403 = vadd.f32 %v6298, 1.0
    %v6404 = vadd.f32 %v6300, 1.0
    %v6405 = vadd.f32 %v6302, 1.0
    %v6406 = vadd.f32 %v6304, 1.0
    %v6407 = vadd.f32 %v6306, 1.0
    %v6408 = vadd.f32 %v6308, 1.0
    %v6409 = vadd.f32 %v6310, 1.0
    %v6410 = vadd.f32 %v6312, 1.0
    %v6411 = vadd.f32 %v6314, 1.0
    %v6412 = vadd.f32 %v6316, 1.0
    %v6413 = vadd.f32 %v6318, 1.0
    %v6414 = vadd.f32 %v6320, 1.0
    %v6415 = vadd.f32 %v6322, 1.0
    %v6416 = vadd.f32 %v6324, 1.0
    %v6417 = vadd.f32 %v6326, 1.0
    %v6418 = vadd.f32 %v6328, 1.0
    %v6419 = vadd.f32 %v6330, 1.0
    %v6420 = vadd.f32 %v6332, 1.0
    %v6421 = vadd.f32 %v6334, 1.0
    %v6422 = vadd.f32 %v6336, 1.0
    %v6423 = vadd.f32 %v6338, 1.0
    %v6424 = vadd.f32 %v6340, 1.0
    %v6425 = vadd.f32 %v6342, 1.0
    %v6426 = vadd.f32 %v6344, 1.0
    %v6427 = vadd.f32 %v6346, 1.0
    %v6428 = vadd.f32 %v6348, 1.0
    %v6429 = vadd.f32 %v6350, 1.0
    %v6430 = vadd.f32 %v6352, 1.0
    %v6431 = vadd.f32 %v6354, 1.0
    %v6432 = vadd.f32 %v6356, 1.0
    %v6433 = vadd.f32 %v6358, 1.0
    %v6434 = vadd.f32 %v6360, 1.0
    %v6435 = vadd.f32 %v6362, 1.0
    %v6436 = vadd.f32 %v6364, 1.0
    %v6437 = vadd.f32 %v6366, 1.0
    %v6438 = vadd.f32 %v6368, 1.0
    %v6439 = vadd.f32 %v6370, 1.0
    %v6440 = vadd.f32 %v6372, 1.0
    %v6441 = vadd.f32 %v6374, 1.0
    %v6442 = vadd.f32 %v6376, 1.0
    %v6443 = vadd.f32 %v6378, 1.0
    %v6444 = vadd.f32 %v6380, 1.0
    %v6445 = vadd.f32 %v6382, 1.0
    %v6446 = vrcp.pop %v6383
    %v6447 = vrcp.pop %v6384
    %v6448 = vrcp.pop %v6385
    %v6449 = vrcp.pop %v6386
    %v6450 = vrcp.pop %v6387
    %v6451 = vrcp.pop %v6388
    %v6452 = vrcp.pop %v6389
    %v6453 = vrcp.pop %v6390
    %v6454 = vrcp.pop %v6391
    %v6455 = vrcp.pop %v6392
    %v6456 = vrcp.pop %v6393
    %v6457 = vrcp.pop %v6394
    %v6458 = vrcp.pop %v6395
    %v6459 = vrcp.pop %v6396
    %v6460 = vrcp.pop %v6397
    %v6461 = vrcp.pop %v6398
    %v6462 = vrcp.pop %v6399
    %v6463 = vrcp.pop %v6400
    %v6464 = vrcp.pop %v6401
    %v6465 = vrcp.pop %v6402
    %v6466 = vrcp.pop %v6403
    %v6467 = vrcp.pop %v6404
    %v6468 = vrcp.pop %v6405
    %v6469 = vrcp.pop %v6406
    %v6470 = vrcp.pop %v6407
    %v6471 = vrcp.pop %v6408
    %v6472 = vrcp.pop %v6409
    %v6473 = vrcp.pop %v6410
    %v6474 = vrcp.pop %v6411
    %v6475 = vrcp.pop %v6412
    %v6476 = vrcp.pop %v6413
    %v6477 = vrcp.pop %v6414
    %v6478 = vrcp.pop %v6415
    %v6479 = vrcp.pop %v6416
    %v6480 = vrcp.pop %v6417
    %v6481 = vrcp.pop %v6418
    %v6482 = vrcp.pop %v6419
    %v6483 = vrcp.pop %v6420
    %v6484 = vrcp.pop %v6421
    %v6485 = vrcp.pop %v6422
    %v6486 = vrcp.pop %v6423
    %v6487 = vrcp.pop %v6424
    %v6488 = vrcp.pop %v6425
    %v6489 = vrcp.pop %v6426
    %v6490 = vrcp.pop %v6427
    %v6491 = vrcp.pop %v6428
    %v6492 = vrcp.pop %v6429
    %v6493 = vrcp.pop %v6430
    %v6494 = vrcp.pop %v6431
    %v6495 = vrcp.pop %v6432
    %v6496 = vrcp.pop %v6433
    %v6497 = vrcp.pop %v6434
    %v6498 = vrcp.pop %v6435
    %v6499 = vrcp.pop %v6436
    %v6500 = vrcp.pop %v6437
    %v6501 = vrcp.pop %v6438
    %v6502 = vrcp.pop %v6439
    %v6503 = vrcp.pop %v6440
    %v6504 = vrcp.pop %v6441
    %v6505 = vrcp.pop %v6442
    %v6506 = vrcp.pop %v6443
    %v6507 = vrcp.pop %v6444
    %v6508 = vrcp.pop %v6445
    %6572 = vrot.lane.b32.xlu0 %v2511, 16
    %v6573 = vpop.permute.xlu0 %6572
    %6574 = vrot.lane.b32.xlu0 %v2512, 16
    %v6575 = vpop.permute.xlu0 %6574
    %6576 = vrot.lane.b32.xlu0 %v2513, 16
    %v6577 = vpop.permute.xlu0 %6576
    %6578 = vrot.lane.b32.xlu0 %v2514, 16
    %v6579 = vpop.permute.xlu0 %6578
    %6580 = vrot.lane.b32.xlu0 %v2515, 16
    %v6581 = vpop.permute.xlu0 %6580
    %6582 = vrot.lane.b32.xlu0 %v2516, 16
    %v6583 = vpop.permute.xlu0 %6582
    %6584 = vrot.lane.b32.xlu0 %v2517, 16
    %v6585 = vpop.permute.xlu0 %6584
    %6586 = vrot.lane.b32.xlu0 %v2518, 16
    %v6587 = vpop.permute.xlu0 %6586
    %6588 = vrot.lane.b32.xlu0 %v2519, 16
    %v6589 = vpop.permute.xlu0 %6588
    %6590 = vrot.lane.b32.xlu0 %v2520, 16
    %v6591 = vpop.permute.xlu0 %6590
    %6592 = vrot.lane.b32.xlu0 %v2521, 16
    %v6593 = vpop.permute.xlu0 %6592
    %6594 = vrot.lane.b32.xlu0 %v2522, 16
    %v6595 = vpop.permute.xlu0 %6594
    %6596 = vrot.lane.b32.xlu0 %v2523, 16
    %v6597 = vpop.permute.xlu0 %6596
    %6598 = vrot.lane.b32.xlu0 %v2524, 16
    %v6599 = vpop.permute.xlu0 %6598
    %6600 = vrot.lane.b32.xlu0 %v2525, 16
    %v6601 = vpop.permute.xlu0 %6600
    %6602 = vrot.lane.b32.xlu0 %v2526, 16
    %v6603 = vpop.permute.xlu0 %6602
    %6604 = vrot.lane.b32.xlu0 %v2527, 16
    %v6605 = vpop.permute.xlu0 %6604
    %6606 = vrot.lane.b32.xlu0 %v2528, 16
    %v6607 = vpop.permute.xlu0 %6606
    %6608 = vrot.lane.b32.xlu0 %v2529, 16
    %v6609 = vpop.permute.xlu0 %6608
    %6610 = vrot.lane.b32.xlu0 %v2530, 16
    %v6611 = vpop.permute.xlu0 %6610
    %6612 = vrot.lane.b32.xlu0 %v2531, 16
    %v6613 = vpop.permute.xlu0 %6612
    %6614 = vrot.lane.b32.xlu0 %v2532, 16
    %v6615 = vpop.permute.xlu0 %6614
    %6616 = vrot.lane.b32.xlu0 %v2533, 16
    %v6617 = vpop.permute.xlu0 %6616
    %6618 = vrot.lane.b32.xlu0 %v2534, 16
    %v6619 = vpop.permute.xlu0 %6618
    %6620 = vrot.lane.b32.xlu0 %v2535, 16
    %v6621 = vpop.permute.xlu0 %6620
    %6622 = vrot.lane.b32.xlu0 %v2536, 16
    %v6623 = vpop.permute.xlu0 %6622
    %6624 = vrot.lane.b32.xlu0 %v2537, 16
    %v6625 = vpop.permute.xlu0 %6624
    %6626 = vrot.lane.b32.xlu0 %v2538, 16
    %v6627 = vpop.permute.xlu0 %6626
    %6628 = vrot.lane.b32.xlu0 %v2539, 16
    %v6629 = vpop.permute.xlu0 %6628
    %6630 = vrot.lane.b32.xlu0 %v2540, 16
    %v6631 = vpop.permute.xlu0 %6630
    %6632 = vrot.lane.b32.xlu0 %v2541, 16
    %v6633 = vpop.permute.xlu0 %6632
    %6634 = vrot.lane.b32.xlu0 %v2542, 16
    %v6635 = vpop.permute.xlu0 %6634
    %6636 = vrot.lane.b32.xlu0 %v2543, 16
    %v6637 = vpop.permute.xlu0 %6636
    %6638 = vrot.lane.b32.xlu0 %v2544, 16
    %v6639 = vpop.permute.xlu0 %6638
    %6640 = vrot.lane.b32.xlu0 %v2545, 16
    %v6641 = vpop.permute.xlu0 %6640
    %6642 = vrot.lane.b32.xlu0 %v2546, 16
    %v6643 = vpop.permute.xlu0 %6642
    %6644 = vrot.lane.b32.xlu0 %v2547, 16
    %v6645 = vpop.permute.xlu0 %6644
    %6646 = vrot.lane.b32.xlu0 %v2548, 16
    %v6647 = vpop.permute.xlu0 %6646
    %6648 = vrot.lane.b32.xlu0 %v2549, 16
    %v6649 = vpop.permute.xlu0 %6648
    %6650 = vrot.lane.b32.xlu0 %v2550, 16
    %v6651 = vpop.permute.xlu0 %6650
    %6652 = vrot.lane.b32.xlu0 %v2551, 16
    %v6653 = vpop.permute.xlu0 %6652
    %6654 = vrot.lane.b32.xlu0 %v2552, 16
    %v6655 = vpop.permute.xlu0 %6654
    %6656 = vrot.lane.b32.xlu0 %v2553, 16
    %v6657 = vpop.permute.xlu0 %6656
    %6658 = vrot.lane.b32.xlu0 %v2554, 16
    %v6659 = vpop.permute.xlu0 %6658
    %6660 = vrot.lane.b32.xlu0 %v2555, 16
    %v6661 = vpop.permute.xlu0 %6660
    %6662 = vrot.lane.b32.xlu0 %v2556, 16
    %v6663 = vpop.permute.xlu0 %6662
    %6664 = vrot.lane.b32.xlu0 %v2557, 16
    %v6665 = vpop.permute.xlu0 %6664
    %6666 = vrot.lane.b32.xlu0 %v2558, 16
    %v6667 = vpop.permute.xlu0 %6666
    %6668 = vrot.lane.b32.xlu0 %v2559, 16
    %v6669 = vpop.permute.xlu0 %6668
    %6670 = vrot.lane.b32.xlu0 %v2560, 16
    %v6671 = vpop.permute.xlu0 %6670
    %6672 = vrot.lane.b32.xlu0 %v2561, 16
    %v6673 = vpop.permute.xlu0 %6672
    %6674 = vrot.lane.b32.xlu0 %v2562, 16
    %v6675 = vpop.permute.xlu0 %6674
    %6676 = vrot.lane.b32.xlu0 %v2563, 16
    %v6677 = vpop.permute.xlu0 %6676
    %6678 = vrot.lane.b32.xlu0 %v2564, 16
    %v6679 = vpop.permute.xlu0 %6678
    %6680 = vrot.lane.b32.xlu0 %v2565, 16
    %v6681 = vpop.permute.xlu0 %6680
    %6682 = vrot.lane.b32.xlu0 %v2566, 16
    %v6683 = vpop.permute.xlu0 %6682
    %6684 = vrot.lane.b32.xlu0 %v2567, 16
    %v6685 = vpop.permute.xlu0 %6684
    %6686 = vrot.lane.b32.xlu0 %v2568, 16
    %v6687 = vpop.permute.xlu0 %6686
    %6688 = vrot.lane.b32.xlu0 %v2569, 16
    %v6689 = vpop.permute.xlu0 %6688
    %6690 = vrot.lane.b32.xlu0 %v2570, 16
    %v6691 = vpop.permute.xlu0 %6690
    %6692 = vrot.lane.b32.xlu0 %v2571, 16
    %v6693 = vpop.permute.xlu0 %6692
    %6694 = vrot.lane.b32.xlu0 %v2572, 16
    %v6695 = vpop.permute.xlu0 %6694
    %6696 = vrot.lane.b32.xlu0 %v2573, 16
    %v6697 = vpop.permute.xlu0 %6696
    %6761 = vrot.lane.b32.xlu0 %v3393, 32
    %v6762 = vpop.permute.xlu0 %6761
    %6763 = vrot.lane.b32.xlu0 %v3394, 32
    %v6764 = vpop.permute.xlu0 %6763
    %6765 = vrot.lane.b32.xlu0 %v3395, 32
    %v6766 = vpop.permute.xlu0 %6765
    %6767 = vrot.lane.b32.xlu0 %v3396, 32
    %v6768 = vpop.permute.xlu0 %6767
    %6769 = vrot.lane.b32.xlu0 %v3397, 32
    %v6770 = vpop.permute.xlu0 %6769
    %6771 = vrot.lane.b32.xlu0 %v3398, 32
    %v6772 = vpop.permute.xlu0 %6771
    %6773 = vrot.lane.b32.xlu0 %v3399, 32
    %v6774 = vpop.permute.xlu0 %6773
    %6775 = vrot.lane.b32.xlu0 %v3400, 32
    %v6776 = vpop.permute.xlu0 %6775
    %6777 = vrot.lane.b32.xlu0 %v3401, 32
    %v6778 = vpop.permute.xlu0 %6777
    %6779 = vrot.lane.b32.xlu0 %v3402, 32
    %v6780 = vpop.permute.xlu0 %6779
    %6781 = vrot.lane.b32.xlu0 %v3403, 32
    %v6782 = vpop.permute.xlu0 %6781
    %6783 = vrot.lane.b32.xlu0 %v3404, 32
    %v6784 = vpop.permute.xlu0 %6783
    %6785 = vrot.lane.b32.xlu0 %v3405, 32
    %v6786 = vpop.permute.xlu0 %6785
    %6787 = vrot.lane.b32.xlu0 %v3406, 32
    %v6788 = vpop.permute.xlu0 %6787
    %6789 = vrot.lane.b32.xlu0 %v3407, 32
    %v6790 = vpop.permute.xlu0 %6789
    %6791 = vrot.lane.b32.xlu0 %v3408, 32
    %v6792 = vpop.permute.xlu0 %6791
    %6793 = vrot.lane.b32.xlu0 %v3409, 32
    %v6794 = vpop.permute.xlu0 %6793
    %6795 = vrot.lane.b32.xlu0 %v3410, 32
    %v6796 = vpop.permute.xlu0 %6795
    %6797 = vrot.lane.b32.xlu0 %v3411, 32
    %v6798 = vpop.permute.xlu0 %6797
    %6799 = vrot.lane.b32.xlu0 %v3412, 32
    %v6800 = vpop.permute.xlu0 %6799
    %6801 = vrot.lane.b32.xlu0 %v3413, 32
    %v6802 = vpop.permute.xlu0 %6801
    %6803 = vrot.lane.b32.xlu0 %v3414, 32
    %v6804 = vpop.permute.xlu0 %6803
    %6805 = vrot.lane.b32.xlu0 %v3415, 32
    %v6806 = vpop.permute.xlu0 %6805
    %6807 = vrot.lane.b32.xlu0 %v3416, 32
    %v6808 = vpop.permute.xlu0 %6807
    %6809 = vrot.lane.b32.xlu0 %v3417, 32
    %v6810 = vpop.permute.xlu0 %6809
    %6811 = vrot.lane.b32.xlu0 %v3418, 32
    %v6812 = vpop.permute.xlu0 %6811
    %6813 = vrot.lane.b32.xlu0 %v3419, 32
    %v6814 = vpop.permute.xlu0 %6813
    %6815 = vrot.lane.b32.xlu0 %v3420, 32
    %v6816 = vpop.permute.xlu0 %6815
    %6817 = vrot.lane.b32.xlu0 %v3421, 32
    %v6818 = vpop.permute.xlu0 %6817
    %6819 = vrot.lane.b32.xlu0 %v3422, 32
    %v6820 = vpop.permute.xlu0 %6819
    %6821 = vrot.lane.b32.xlu0 %v3423, 32
    %v6822 = vpop.permute.xlu0 %6821
    %6823 = vrot.lane.b32.xlu0 %v3424, 32
    %v6824 = vpop.permute.xlu0 %6823
    %6825 = vrot.lane.b32.xlu0 %v3425, 32
    %v6826 = vpop.permute.xlu0 %6825
    %6827 = vrot.lane.b32.xlu0 %v3426, 32
    %v6828 = vpop.permute.xlu0 %6827
    %6829 = vrot.lane.b32.xlu0 %v3427, 32
    %v6830 = vpop.permute.xlu0 %6829
    %6831 = vrot.lane.b32.xlu0 %v3428, 32
    %v6832 = vpop.permute.xlu0 %6831
    %6833 = vrot.lane.b32.xlu0 %v3429, 32
    %v6834 = vpop.permute.xlu0 %6833
    %6835 = vrot.lane.b32.xlu0 %v3430, 32
    %v6836 = vpop.permute.xlu0 %6835
    %6837 = vrot.lane.b32.xlu0 %v3431, 32
    %v6838 = vpop.permute.xlu0 %6837
    %6839 = vrot.lane.b32.xlu0 %v3432, 32
    %v6840 = vpop.permute.xlu0 %6839
    %6841 = vrot.lane.b32.xlu0 %v3433, 32
    %v6842 = vpop.permute.xlu0 %6841
    %6843 = vrot.lane.b32.xlu0 %v3434, 32
    %v6844 = vpop.permute.xlu0 %6843
    %6845 = vrot.lane.b32.xlu0 %v3435, 32
    %v6846 = vpop.permute.xlu0 %6845
    %6847 = vrot.lane.b32.xlu0 %v3436, 32
    %v6848 = vpop.permute.xlu0 %6847
    %6849 = vrot.lane.b32.xlu0 %v3437, 32
    %v6850 = vpop.permute.xlu0 %6849
    %6851 = vrot.lane.b32.xlu0 %v3438, 32
    %v6852 = vpop.permute.xlu0 %6851
    %6853 = vrot.lane.b32.xlu0 %v3439, 32
    %v6854 = vpop.permute.xlu0 %6853
    %6855 = vrot.lane.b32.xlu0 %v3440, 32
    %v6856 = vpop.permute.xlu0 %6855
    %6857 = vrot.lane.b32.xlu0 %v3441, 32
    %v6858 = vpop.permute.xlu0 %6857
    %6859 = vrot.lane.b32.xlu0 %v3442, 32
    %v6860 = vpop.permute.xlu0 %6859
    %6861 = vrot.lane.b32.xlu0 %v3443, 32
    %v6862 = vpop.permute.xlu0 %6861
    %6863 = vrot.lane.b32.xlu0 %v3444, 32
    %v6864 = vpop.permute.xlu0 %6863
    %6865 = vrot.lane.b32.xlu0 %v3445, 32
    %v6866 = vpop.permute.xlu0 %6865
    %6867 = vrot.lane.b32.xlu0 %v3446, 32
    %v6868 = vpop.permute.xlu0 %6867
    %6869 = vrot.lane.b32.xlu0 %v3447, 32
    %v6870 = vpop.permute.xlu0 %6869
    %6871 = vrot.lane.b32.xlu0 %v3448, 32
    %v6872 = vpop.permute.xlu0 %6871
    %6873 = vrot.lane.b32.xlu0 %v3449, 32
    %v6874 = vpop.permute.xlu0 %6873
    %6875 = vrot.lane.b32.xlu0 %v3450, 32
    %v6876 = vpop.permute.xlu0 %6875
    %6877 = vrot.lane.b32.xlu0 %v3451, 32
    %v6878 = vpop.permute.xlu0 %6877
    %6879 = vrot.lane.b32.xlu0 %v3452, 32
    %v6880 = vpop.permute.xlu0 %6879
    %6881 = vrot.lane.b32.xlu0 %v3453, 32
    %v6882 = vpop.permute.xlu0 %6881
    %6883 = vrot.lane.b32.xlu0 %v3454, 32
    %v6884 = vpop.permute.xlu0 %6883
    %6885 = vrot.lane.b32.xlu0 %v3455, 32
    %v6886 = vpop.permute.xlu0 %6885
    %v6950 = vsel %vm90, %v6446, %v6573
    %v6951 = vsel %vm90, %v6447, %v6575
    %v6952 = vsel %vm90, %v6448, %v6577
    %v6953 = vsel %vm90, %v6449, %v6579
    %v6954 = vsel %vm90, %v6450, %v6581
    %v6955 = vsel %vm90, %v6451, %v6583
    %v6956 = vsel %vm90, %v6452, %v6585
    %v6957 = vsel %vm90, %v6453, %v6587
    %v6958 = vsel %vm90, %v6454, %v6589
    %v6959 = vsel %vm90, %v6455, %v6591
    %v6960 = vsel %vm90, %v6456, %v6593
    %v6961 = vsel %vm90, %v6457, %v6595
    %v6962 = vsel %vm90, %v6458, %v6597
    %v6963 = vsel %vm90, %v6459, %v6599
    %v6964 = vsel %vm90, %v6460, %v6601
    %v6965 = vsel %vm90, %v6461, %v6603
    %v6966 = vsel %vm90, %v6462, %v6605
    %v6967 = vsel %vm90, %v6463, %v6607
    %v6968 = vsel %vm90, %v6464, %v6609
    %v6969 = vsel %vm90, %v6465, %v6611
    %v6970 = vsel %vm90, %v6466, %v6613
    %v6971 = vsel %vm90, %v6467, %v6615
    %v6972 = vsel %vm90, %v6468, %v6617
    %v6973 = vsel %vm90, %v6469, %v6619
    %v6974 = vsel %vm90, %v6470, %v6621
    %v6975 = vsel %vm90, %v6471, %v6623
    %v6976 = vsel %vm90, %v6472, %v6625
    %v6977 = vsel %vm90, %v6473, %v6627
    %v6978 = vsel %vm90, %v6474, %v6629
    %v6979 = vsel %vm90, %v6475, %v6631
    %v6980 = vsel %vm90, %v6476, %v6633
    %v6981 = vsel %vm90, %v6477, %v6635
    %v6982 = vsel %vm90, %v6478, %v6637
    %v6983 = vsel %vm90, %v6479, %v6639
    %v6984 = vsel %vm90, %v6480, %v6641
    %v6985 = vsel %vm90, %v6481, %v6643
    %v6986 = vsel %vm90, %v6482, %v6645
    %v6987 = vsel %vm90, %v6483, %v6647
    %v6988 = vsel %vm90, %v6484, %v6649
    %v6989 = vsel %vm90, %v6485, %v6651
    %v6990 = vsel %vm90, %v6486, %v6653
    %v6991 = vsel %vm90, %v6487, %v6655
    %v6992 = vsel %vm90, %v6488, %v6657
    %v6993 = vsel %vm90, %v6489, %v6659
    %v6994 = vsel %vm90, %v6490, %v6661
    %v6995 = vsel %vm90, %v6491, %v6663
    %v6996 = vsel %vm90, %v6492, %v6665
    %v6997 = vsel %vm90, %v6493, %v6667
    %v6998 = vsel %vm90, %v6494, %v6669
    %v6999 = vsel %vm90, %v6495, %v6671
    %v7000 = vsel %vm90, %v6496, %v6673
    %v7001 = vsel %vm90, %v6497, %v6675
    %v7002 = vsel %vm90, %v6498, %v6677
    %v7003 = vsel %vm90, %v6499, %v6679
    %v7004 = vsel %vm90, %v6500, %v6681
    %v7005 = vsel %vm90, %v6501, %v6683
    %v7006 = vsel %vm90, %v6502, %v6685
    %v7007 = vsel %vm90, %v6503, %v6687
    %v7008 = vsel %vm90, %v6504, %v6689
    %v7009 = vsel %vm90, %v6505, %v6691
    %v7010 = vsel %vm90, %v6506, %v6693
    %v7011 = vsel %vm90, %v6507, %v6695
    %v7012 = vsel %vm90, %v6508, %v6697
    %vm7013 = vcmask 261120
    %v7014 = vsel %vm7013, %v6950, %v6762
    %v7015 = vsel %vm7013, %v6951, %v6764
    %v7016 = vsel %vm7013, %v6952, %v6766
    %v7017 = vsel %vm7013, %v6953, %v6768
    %v7018 = vsel %vm7013, %v6954, %v6770
    %v7019 = vsel %vm7013, %v6955, %v6772
    %v7020 = vsel %vm7013, %v6956, %v6774
    %v7021 = vsel %vm7013, %v6957, %v6776
    %v7022 = vsel %vm7013, %v6958, %v6778
    %v7023 = vsel %vm7013, %v6959, %v6780
    %v7024 = vsel %vm7013, %v6960, %v6782
    %v7025 = vsel %vm7013, %v6961, %v6784
    %v7026 = vsel %vm7013, %v6962, %v6786
    %v7027 = vsel %vm7013, %v6963, %v6788
    %v7028 = vsel %vm7013, %v6964, %v6790
    %v7029 = vsel %vm7013, %v6965, %v6792
    %v7030 = vsel %vm7013, %v6966, %v6794
    %v7031 = vsel %vm7013, %v6967, %v6796
    %v7032 = vsel %vm7013, %v6968, %v6798
    %v7033 = vsel %vm7013, %v6969, %v6800
    %v7034 = vsel %vm7013, %v6970, %v6802
    %v7035 = vsel %vm7013, %v6971, %v6804
    %v7036 = vsel %vm7013, %v6972, %v6806
    %v7037 = vsel %vm7013, %v6973, %v6808
    %v7038 = vsel %vm7013, %v6974, %v6810
    %v7039 = vsel %vm7013, %v6975, %v6812
    %v7040 = vsel %vm7013, %v6976, %v6814
    %v7041 = vsel %vm7013, %v6977, %v6816
    %v7042 = vsel %vm7013, %v6978, %v6818
    %v7043 = vsel %vm7013, %v6979, %v6820
    %v7044 = vsel %vm7013, %v6980, %v6822
    %v7045 = vsel %vm7013, %v6981, %v6824
    %v7046 = vsel %vm7013, %v6982, %v6826
    %v7047 = vsel %vm7013, %v6983, %v6828
    %v7048 = vsel %vm7013, %v6984, %v6830
    %v7049 = vsel %vm7013, %v6985, %v6832
    %v7050 = vsel %vm7013, %v6986, %v6834
    %v7051 = vsel %vm7013, %v6987, %v6836
    %v7052 = vsel %vm7013, %v6988, %v6838
    %v7053 = vsel %vm7013, %v6989, %v6840
    %v7054 = vsel %vm7013, %v6990, %v6842
    %v7055 = vsel %vm7013, %v6991, %v6844
    %v7056 = vsel %vm7013, %v6992, %v6846
    %v7057 = vsel %vm7013, %v6993, %v6848
    %v7058 = vsel %vm7013, %v6994, %v6850
    %v7059 = vsel %vm7013, %v6995, %v6852
    %v7060 = vsel %vm7013, %v6996, %v6854
    %v7061 = vsel %vm7013, %v6997, %v6856
    %v7062 = vsel %vm7013, %v6998, %v6858
    %v7063 = vsel %vm7013, %v6999, %v6860
    %v7064 = vsel %vm7013, %v7000, %v6862
    %v7065 = vsel %vm7013, %v7001, %v6864
    %v7066 = vsel %vm7013, %v7002, %v6866
    %v7067 = vsel %vm7013, %v7003, %v6868
    %v7068 = vsel %vm7013, %v7004, %v6870
    %v7069 = vsel %vm7013, %v7005, %v6872
    %v7070 = vsel %vm7013, %v7006, %v6874
    %v7071 = vsel %vm7013, %v7007, %v6876
    %v7072 = vsel %vm7013, %v7008, %v6878
    %v7073 = vsel %vm7013, %v7009, %v6880
    %v7074 = vsel %vm7013, %v7010, %v6882
    %v7075 = vsel %vm7013, %v7011, %v6884
    %v7076 = vsel %vm7013, %v7012, %v6886
    %vm7077 = vcmask 326656
    %v7078 = vsel %vm7077, %v7014, 0.0
    %v7079 = vsel %vm7077, %v7015, 0.0
    %v7080 = vsel %vm7077, %v7016, 0.0
    %v7081 = vsel %vm7077, %v7017, 0.0
    %v7082 = vsel %vm7077, %v7018, 0.0
    %v7083 = vsel %vm7077, %v7019, 0.0
    %v7084 = vsel %vm7077, %v7020, 0.0
    %v7085 = vsel %vm7077, %v7021, 0.0
    %v7086 = vsel %vm7077, %v7022, 0.0
    %v7087 = vsel %vm7077, %v7023, 0.0
    %v7088 = vsel %vm7077, %v7024, 0.0
    %v7089 = vsel %vm7077, %v7025, 0.0
    %v7090 = vsel %vm7077, %v7026, 0.0
    %v7091 = vsel %vm7077, %v7027, 0.0
    %v7092 = vsel %vm7077, %v7028, 0.0
    %v7093 = vsel %vm7077, %v7029, 0.0
    %v7094 = vsel %vm7077, %v7030, 0.0
    %v7095 = vsel %vm7077, %v7031, 0.0
    %v7096 = vsel %vm7077, %v7032, 0.0
    %v7097 = vsel %vm7077, %v7033, 0.0
    %v7098 = vsel %vm7077, %v7034, 0.0
    %v7099 = vsel %vm7077, %v7035, 0.0
    %v7100 = vsel %vm7077, %v7036, 0.0
    %v7101 = vsel %vm7077, %v7037, 0.0
    %v7102 = vsel %vm7077, %v7038, 0.0
    %v7103 = vsel %vm7077, %v7039, 0.0
    %v7104 = vsel %vm7077, %v7040, 0.0
    %v7105 = vsel %vm7077, %v7041, 0.0
    %v7106 = vsel %vm7077, %v7042, 0.0
    %v7107 = vsel %vm7077, %v7043, 0.0
    %v7108 = vsel %vm7077, %v7044, 0.0
    %v7109 = vsel %vm7077, %v7045, 0.0
    %v7110 = vsel %vm7077, %v7046, 0.0
    %v7111 = vsel %vm7077, %v7047, 0.0
    %v7112 = vsel %vm7077, %v7048, 0.0
    %v7113 = vsel %vm7077, %v7049, 0.0
    %v7114 = vsel %vm7077, %v7050, 0.0
    %v7115 = vsel %vm7077, %v7051, 0.0
    %v7116 = vsel %vm7077, %v7052, 0.0
    %v7117 = vsel %vm7077, %v7053, 0.0
    %v7118 = vsel %vm7077, %v7054, 0.0
    %v7119 = vsel %vm7077, %v7055, 0.0
    %v7120 = vsel %vm7077, %v7056, 0.0
    %v7121 = vsel %vm7077, %v7057, 0.0
    %v7122 = vsel %vm7077, %v7058, 0.0
    %v7123 = vsel %vm7077, %v7059, 0.0
    %v7124 = vsel %vm7077, %v7060, 0.0
    %v7125 = vsel %vm7077, %v7061, 0.0
    %v7126 = vsel %vm7077, %v7062, 0.0
    %v7127 = vsel %vm7077, %v7063, 0.0
    %v7128 = vsel %vm7077, %v7064, 0.0
    %v7129 = vsel %vm7077, %v7065, 0.0
    %v7130 = vsel %vm7077, %v7066, 0.0
    %v7131 = vsel %vm7077, %v7067, 0.0
    %v7132 = vsel %vm7077, %v7068, 0.0
    %v7133 = vsel %vm7077, %v7069, 0.0
    %v7134 = vsel %vm7077, %v7070, 0.0
    %v7135 = vsel %vm7077, %v7071, 0.0
    %v7136 = vsel %vm7077, %v7072, 0.0
    %v7137 = vsel %vm7077, %v7073, 0.0
    %v7138 = vsel %vm7077, %v7074, 0.0
    %v7139 = vsel %vm7077, %v7075, 0.0
    %v7140 = vsel %vm7077, %v7076, 0.0
    %7141 = vst [vmem:[#allocation2] sm:$0xff] %v7078
    %7142 = vst [vmem:[#allocation2 + $0x8] sm:$0xff] %v7079
    %7143 = vst [vmem:[#allocation2 + $0x10] sm:$0xff] %v7080
    %7144 = vst [vmem:[#allocation2 + $0x18] sm:$0xff] %v7081
    %7145 = vst [vmem:[#allocation2 + $0x20] sm:$0xff] %v7082
    %7146 = vst [vmem:[#allocation2 + $0x28] sm:$0xff] %v7083
    %7147 = vst [vmem:[#allocation2 + $0x30] sm:$0xff] %v7084
    %7148 = vst [vmem:[#allocation2 + $0x38] sm:$0xff] %v7085
    %7149 = vst [vmem:[#allocation2 + $0x40] sm:$0xff] %v7086
    %7150 = vst [vmem:[#allocation2 + $0x48] sm:$0xff] %v7087
    %7151 = vst [vmem:[#allocation2 + $0x50] sm:$0xff] %v7088
    %7152 = vst [vmem:[#allocation2 + $0x58] sm:$0xff] %v7089
    %7153 = vst [vmem:[#allocation2 + $0x60] sm:$0xff] %v7090
    %7154 = vst [vmem:[#allocation2 + $0x68] sm:$0xff] %v7091
    %7155 = vst [vmem:[#allocation2 + $0x70] sm:$0xff] %v7092
    %7156 = vst [vmem:[#allocation2 + $0x78] sm:$0xff] %v7093
    %7157 = vst [vmem:[#allocation2 + $0x80] sm:$0xff] %v7094
    %7158 = vst [vmem:[#allocation2 + $0x88] sm:$0xff] %v7095
    %7159 = vst [vmem:[#allocation2 + $0x90] sm:$0xff] %v7096
    %7160 = vst [vmem:[#allocation2 + $0x98] sm:$0xff] %v7097
    %7161 = vst [vmem:[#allocation2 + $0xa0] sm:$0xff] %v7098
    %7162 = vst [vmem:[#allocation2 + $0xa8] sm:$0xff] %v7099
    %7163 = vst [vmem:[#allocation2 + $0xb0] sm:$0xff] %v7100
    %7164 = vst [vmem:[#allocation2 + $0xb8] sm:$0xff] %v7101
    %7165 = vst [vmem:[#allocation2 + $0xc0] sm:$0xff] %v7102
    %7166 = vst [vmem:[#allocation2 + $0xc8] sm:$0xff] %v7103
    %7167 = vst [vmem:[#allocation2 + $0xd0] sm:$0xff] %v7104
    %7168 = vst [vmem:[#allocation2 + $0xd8] sm:$0xff] %v7105
    %7169 = vst [vmem:[#allocation2 + $0xe0] sm:$0xff] %v7106
    %7170 = vst [vmem:[#allocation2 + $0xe8] sm:$0xff] %v7107
    %7171 = vst [vmem:[#allocation2 + $0xf0] sm:$0xff] %v7108
    %7172 = vst [vmem:[#allocation2 + $0xf8] sm:$0xff] %v7109
    %7173 = vst [vmem:[#allocation2 + $0x100] sm:$0xff] %v7110
    %7174 = vst [vmem:[#allocation2 + $0x108] sm:$0xff] %v7111
    %7175 = vst [vmem:[#allocation2 + $0x110] sm:$0xff] %v7112
    %7176 = vst [vmem:[#allocation2 + $0x118] sm:$0xff] %v7113
    %7177 = vst [vmem:[#allocation2 + $0x120] sm:$0xff] %v7114
    %7178 = vst [vmem:[#allocation2 + $0x128] sm:$0xff] %v7115
    %7179 = vst [vmem:[#allocation2 + $0x130] sm:$0xff] %v7116
    %7180 = vst [vmem:[#allocation2 + $0x138] sm:$0xff] %v7117
    %7181 = vst [vmem:[#allocation2 + $0x140] sm:$0xff] %v7118
    %7182 = vst [vmem:[#allocation2 + $0x148] sm:$0xff] %v7119
    %7183 = vst [vmem:[#allocation2 + $0x150] sm:$0xff] %v7120
    %7184 = vst [vmem:[#allocation2 + $0x158] sm:$0xff] %v7121
    %7185 = vst [vmem:[#allocation2 + $0x160] sm:$0xff] %v7122
    %7186 = vst [vmem:[#allocation2 + $0x168] sm:$0xff] %v7123
    %7187 = vst [vmem:[#allocation2 + $0x170] sm:$0xff] %v7124
    %7188 = vst [vmem:[#allocation2 + $0x178] sm:$0xff] %v7125
    %7189 = vst [vmem:[#allocation2 + $0x180] sm:$0xff] %v7126
    %7190 = vst [vmem:[#allocation2 + $0x188] sm:$0xff] %v7127
    %7191 = vst [vmem:[#allocation2 + $0x190] sm:$0xff] %v7128
    %7192 = vst [vmem:[#allocation2 + $0x198] sm:$0xff] %v7129
    %7193 = vst [vmem:[#allocation2 + $0x1a0] sm:$0xff] %v7130
    %7194 = vst [vmem:[#allocation2 + $0x1a8] sm:$0xff] %v7131
    %7195 = vst [vmem:[#allocation2 + $0x1b0] sm:$0xff] %v7132
    %7196 = vst [vmem:[#allocation2 + $0x1b8] sm:$0xff] %v7133
    %7197 = vst [vmem:[#allocation2 + $0x1c0] sm:$0xff] %v7134
    %7198 = vst [vmem:[#allocation2 + $0x1c8] sm:$0xff] %v7135
    %7199 = vst [vmem:[#allocation2 + $0x1d0] sm:$0xff] %v7136
    %7200 = vst [vmem:[#allocation2 + $0x1d8] sm:$0xff] %v7137
    %7201 = vst [vmem:[#allocation2 + $0x1e0] sm:$0xff] %v7138
    %7202 = vst [vmem:[#allocation2 + $0x1e8] sm:$0xff] %v7139
    %7203 = vst [vmem:[#allocation2 + $0x1f0] sm:$0xff] %v7140
    // Predicated region
    $region18: #{tpu_custom_call.1} parent=1 // pred_check
      _
    $region19: #{tpu_custom_call.1} parent=1 // pred_check_branch
      %7205 = sbr.rel (0) target = $region21
    $region20: #{tpu_custom_call.1} parent=1 // pred_region
      %s7207 = ssub.s32 8064, 8064
      %7208 = vsyncadd [#allocation3], %s7207
      %s7209 = sshll.u32 [#allocation2], 4
      %s7210 = int_to_ptr.vmem [resolvable:$true] %s7209
      %7215 = dma.vmem_to_hbm [thread:$0]  %s7210, 8064, %s4, [#allocation3], 128, 128, 8
    $region21: #{tpu_custom_call.1} parent=1 // pred_fallthru
      _
    // Predicated region
    $region22: #{tpu_custom_call.1} parent=1 // pred_check
      _
    $region23: #{tpu_custom_call.1} parent=1 // pred_check_branch
      %7217 = sbr.rel (0) target = $region25
    $region24: #{tpu_custom_call.1} parent=1 // pred_region
      %7218 = dma.done [#allocation3], 8064
    $region25: #{tpu_custom_call.1} parent=1 // pred_fallthru
      _
    %7219 = vsyncpa [#allocation3], 1

</llo_original>
